<compile_context>
chip_gen: v5e
topology: v5e:2x2
jax: 0.10.0
libtpu: 0.0.40
codegen_flags: <defaults>
</compile_context>

<pallas_src>
import functools
import math

import jax
import jax.numpy as jnp
from jax import lax
from jax.experimental import pallas as pl
from jax.experimental.pallas import tpu as pltpu

_MiB = 1024 * 1024


def _tpu_vmem_bytes():
    try:
        info = pltpu.get_tpu_info()
        return int(getattr(info, "vmem_capacity_bytes", 64 * _MiB))
    except Exception:
        return 64 * _MiB


_VMEM_BYTES = _tpu_vmem_bytes()
# ~96 MiB on v5e/v6e (128 MiB physical), ~48 MiB on v7x (64 MiB physical).
_VMEM_LIMIT = max(32 * _MiB, (_VMEM_BYTES * 3) // 4)
_BIG_VMEM = _VMEM_BYTES >= 100 * _MiB
_ROW_TILE_PREF = 512 if _BIG_VMEM else 256      # bigger tiles amortize per-step overhead
_COL_TILE_PREF = 1024 if _BIG_VMEM else 512     # vocab (lane) tile for the logits matmul
_HID_TILE_PREF = 4096 if _BIG_VMEM else 2048    # MLP hidden-dim streaming tile


# ----------------------------- tiling helpers -----------------------------

def _round_up(n, m):
    return ((n + m - 1) // m) * m


def _pick_row_tile(m, preferred):
    """Largest multiple-of-8 divisor of m that is <= preferred; prefer >=2 tiles."""
    if m % 8 != 0:
        return m
    t = min(preferred, m)
    t -= t % 8
    while t >= 8 and m % t != 0:
        t -= 8
    if t < 8:
        return m
    if m // t < 2 and t >= 16 and (t // 2) % 8 == 0 and m % (t // 2) == 0:
        t //= 2  # give megacore at least 2 parallel tiles when cheap to do so
    return t


def _pick_col_tile(n, preferred, align=128):
    """Lane-axis tile: multiple of `align` dividing n, <= preferred (or full dim)."""
    if n <= preferred or n % align != 0:
        return n
    t = preferred - (preferred % align)
    while t >= align and n % t != 0:
        t -= align
    return t if t >= align else n


def _bcast_spec(shape):
    """Grid-invariant operand: constant index_map; single-buffered when supported
    (default double-buffering would allocate a useless second VMEM copy)."""
    nd = len(shape)
    index_map = lambda *_: (0,) * nd
    buffered = getattr(pl, "Buffered", None)
    if buffered is not None:
        try:
            return pl.BlockSpec(shape, index_map, pipeline_mode=buffered(1))
        except TypeError:
            pass
    return pl.BlockSpec(shape, index_map)


# ----------------------------- math helpers -----------------------------

def _layernorm_f32(x, g, b, eps=1e-5):
    mean = jnp.mean(x, axis=-1, keepdims=True)
    var = jnp.mean((x - mean) ** 2, axis=-1, keepdims=True)
    return (x - mean) * lax.rsqrt(var + eps) * g + b


def _gelu_tanh(x):
    c = 0.7978845608028654  # sqrt(2/pi)
    return 0.5 * x * (1.0 + jnp.tanh(c * (x + 0.044715 * x * x * x)))


# ----------------------------- kernels -----------------------------

def _attn_block_kernel(x_ref, g_ref, b_ref, wqkv_ref, bqkv_ref,
                       wproj_ref, bproj_ref, o_ref, y_scratch, *, n_head):
    # Block: (1, T, C) -- one batch element, all heads, lane-dense in C.
    x = x_ref[0].astype(jnp.float32)                       # (T, C)
    T, C = x.shape
    hd = C // n_head
    scale = 1.0 / math.sqrt(hd)

    # LN1 (f32 statistics).
    h = _layernorm_f32(x, g_ref[...].astype(jnp.float32),
                       b_ref[...].astype(jnp.float32))

    # QKV projection: bf16 MXU inputs (weights already bf16), f32 accumulate.
    # qkv is kept bf16 afterwards (largest live activation); stats stay f32.
    qkv = jnp.dot(h.astype(jnp.bfloat16), wqkv_ref[...],
                  preferred_element_type=jnp.float32)
    qkv = (qkv + bqkv_ref[...].astype(jnp.float32)).astype(jnp.bfloat16)  # (T, 3C)

    # Additive causal bias, built once per grid step (hoisted out of the head loop).
    row = lax.broadcasted_iota(jnp.int32, (T, T), 0)
    col = lax.broadcasted_iota(jnp.int32, (T, T), 1)
    neg_bias = jnp.where(col <= row, jnp.float32(0.0), jnp.float32(-1e30))

    # Per head: scores + softmax + P@V.  Head outputs land in a (T, C) bf16 VMEM
    # scratch at static lane offsets so the output projection is ONE full-K
    # (T,C)@(C,C) matmul (full MXU contraction width) instead of n_head K=hd dots.
    for hi in range(n_head):
        q = qkv[:, hi * hd:(hi + 1) * hd]
        k = qkv[:, C + hi * hd:C + (hi + 1) * hd]
        v = qkv[:, 2 * C + hi * hd:2 * C + (hi + 1) * hd]
        # q @ k^T via dot_general (contract last dims) -> no XLU transpose of k.
        s = lax.dot_general(q, k, (((1,), (1,)), ((), ())),
                            preferred_element_type=jnp.float32)
        s = s * scale + neg_bias
        m = jnp.max(s, axis=-1, keepdims=True)
        p = jnp.exp(s - m)
        l = jnp.sum(p, axis=-1, keepdims=True)
        o_h = jnp.dot(p.astype(jnp.bfloat16), v, preferred_element_type=jnp.float32)
        # Softmax denominator on the EUP.  approx=True is a documented, tiny
        # relative error (fine for inference); set approx=False to bit-match.
        o_h = o_h * pl.reciprocal(l, approx=True)
        y_scratch[:, hi * hd:(hi + 1) * hd] = o_h.astype(jnp.bfloat16)

    # Output projection + bias + residual add, fused epilogue.
    y = jnp.dot(y_scratch[...], wproj_ref[...], preferred_element_type=jnp.float32)
    y = y + bproj_ref[...].astype(jnp.float32)
    o_ref[0] = (x + y).astype(o_ref.dtype)
    # TODO(synk): query-tiled flash KV loop for very long T (v7x 64 MiB VMEM).


def _mlp_block_kernel(x_ref, g_ref, b_ref, wfc_ref, bfc_ref,
                      wproj_ref, bproj_ref, o_ref, h_scratch, acc_ref):
    # grid = (row tiles [parallel], hidden-F tiles [arbitrary, innermost]).
    # LN(x) is computed once per row tile and cached (bf16) in VMEM; the hidden
    # dim is streamed so wfc/wproj residency is bounded to (C,tf)/(tf,C) slabs.
    j = pl.program_id(1)

    @pl.when(j == 0)
    def _():
        x = x_ref[...].astype(jnp.float32)
        h = _layernorm_f32(x, g_ref[...].astype(jnp.float32),
                           b_ref[...].astype(jnp.float32))
        h_scratch[...] = h.astype(jnp.bfloat16)
        acc_ref[...] = jnp.zeros_like(acc_ref)

    hfc = jnp.dot(h_scratch[...], wfc_ref[...], preferred_element_type=jnp.float32)
    hfc = _gelu_tanh(hfc + bfc_ref[...].astype(jnp.float32)).astype(jnp.bfloat16)
    acc_ref[...] += jnp.dot(hfc, wproj_ref[...], preferred_element_type=jnp.float32)

    @pl.when(j == pl.num_programs(1) - 1)
    def _():
        x = x_ref[...].astype(jnp.float32)
        y = acc_ref[...] + bproj_ref[...].astype(jnp.float32)
        o_ref[...] = (x + y).astype(o_ref.dtype)           # fused residual add


def _lnf_logits_kernel(x_ref, g_ref, b_ref, w_ref, o_ref, h_scratch):
    # grid = (row tiles [parallel], vocab tiles [arbitrary, INNERMOST]).
    # ln_f is computed once per row tile and cached in VMEM across vocab tiles.
    # NOTE: relies on the vocab axis being the last (sequential) grid axis; do
    # not reorder the grid.
    @pl.when(pl.program_id(1) == 0)
    def _():
        x = x_ref[...].astype(jnp.float32)
        h = _layernorm_f32(x, g_ref[...].astype(jnp.float32),
                           b_ref[...].astype(jnp.float32))
        h_scratch[...] = h.astype(jnp.bfloat16)

    o_ref[...] = jnp.dot(h_scratch[...], w_ref[...],
                         preferred_element_type=jnp.float32).astype(o_ref.dtype)
    # TODO(synk): fuse cross-entropy over vocab tiles here when targets exist.


# ----------------------------- wrappers -----------------------------

def attn_block(x, g, b, wqkv, bqkv, wproj, bproj, n_head):
    B, T, C = x.shape
    kern = functools.partial(_attn_block_kernel, n_head=n_head)
    xspec = pl.BlockSpec((1, T, C), lambda i: (i, 0, 0))
    return pl.pallas_call(
        kern,
        out_shape=jax.ShapeDtypeStruct((B, T, C), x.dtype),
        grid=(B,),
        in_specs=[xspec,
                  _bcast_spec((1, C)), _bcast_spec((1, C)),
                  _bcast_spec((C, 3 * C)), _bcast_spec((1, 3 * C)),
                  _bcast_spec((C, C)), _bcast_spec((1, C))],
        out_specs=xspec,
        scratch_shapes=[pltpu.VMEM((T, C), jnp.bfloat16)],   # concatenated head outputs
        compiler_params=pltpu.CompilerParams(
            dimension_semantics=("parallel",),
            vmem_limit_bytes=_VMEM_LIMIT),
    )(x, g.reshape(1, C), b.reshape(1, C),
      wqkv, bqkv.reshape(1, 3 * C), wproj, bproj.reshape(1, C))


def mlp_block(x2d, g, b, wfc, bfc, wproj, bproj):
    M, C = x2d.shape
    F = wfc.shape[1]
    tm = _pick_row_tile(M, _ROW_TILE_PREF)
    tf = _pick_col_tile(F, _HID_TILE_PREF)
    return pl.pallas_call(
        _mlp_block_kernel,
        out_shape=jax.ShapeDtypeStruct((M, C), x2d.dtype),
        grid=(M // tm, F // tf),
        in_specs=[pl.BlockSpec((tm, C), lambda i, j: (i, 0)),
                  _bcast_spec((1, C)), _bcast_spec((1, C)),
                  pl.BlockSpec((C, tf), lambda i, j: (0, j)),
                  pl.BlockSpec((1, tf), lambda i, j: (0, j)),
                  pl.BlockSpec((tf, C), lambda i, j: (j, 0)),
                  _bcast_spec((1, C))],
        out_specs=pl.BlockSpec((tm, C), lambda i, j: (i, 0)),
        scratch_shapes=[pltpu.VMEM((tm, C), jnp.bfloat16),   # cached LN(x)
                        pltpu.VMEM((tm, C), jnp.float32)],   # F-axis accumulator
        compiler_params=pltpu.CompilerParams(
            dimension_semantics=("parallel", "arbitrary"),
            vmem_limit_bytes=_VMEM_LIMIT),
    )(x2d, g.reshape(1, C), b.reshape(1, C),
      wfc, bfc.reshape(1, F), wproj, bproj.reshape(1, C))


def lnf_logits(x2d, g, b, w_t):
    M, C = x2d.shape
    Vp = w_t.shape[1]                      # vocab already padded to a multiple of 128
    tm = _pick_row_tile(M, _ROW_TILE_PREF)
    tn = _pick_col_tile(Vp, _COL_TILE_PREF)
    return pl.pallas_call(
        _lnf_logits_kernel,
        out_shape=jax.ShapeDtypeStruct((M, Vp), x2d.dtype),
        grid=(M // tm, Vp // tn),
        in_specs=[pl.BlockSpec((tm, C), lambda i, j: (i, 0)),
                  _bcast_spec((1, C)), _bcast_spec((1, C)),
                  pl.BlockSpec((C, tn), lambda i, j: (0, j))],
        out_specs=pl.BlockSpec((tm, tn), lambda i, j: (i, j)),
        scratch_shapes=[pltpu.VMEM((tm, C), jnp.bfloat16)],
        compiler_params=pltpu.CompilerParams(
            dimension_semantics=("parallel", "arbitrary"),
            vmem_limit_bytes=_VMEM_LIMIT),
    )(x2d, g.reshape(1, C), b.reshape(1, C), w_t)


# ----------------------------- GPT model -----------------------------

class GPTConfig:
    def __init__(self, block_size=1024, vocab_size=50304, n_layer=12, n_head=12, n_embd=768):
        self.block_size = block_size
        self.vocab_size = vocab_size
        self.n_layer = n_layer
        self.n_head = n_head
        self.n_embd = n_embd


def init_params(key, cfg):
    C, V = cfg.n_embd, cfg.vocab_size
    Vp = _round_up(V, 128)                 # lane-aligned vocab for logits tiles
    ks = jax.random.split(key, 2 + 4 * cfg.n_layer)
    wte = 0.2 * jax.random.normal(ks[0], (V, C), jnp.float32)   # Embedding std=0.2 per spec
    p = {
        "wte": wte,                        # f32 master copy (embedding gather)
        # weight-tied lm_head: pre-transposed + vocab-padded + bf16, built once.
        # (forward-only duplicate of the embedding in HBM)
        "wte_T": jnp.pad(wte.T.astype(jnp.bfloat16), ((0, 0), (0, Vp - V))),
        "wpe": 0.2 * jax.random.normal(ks[1], (cfg.block_size, C), jnp.float32),
        "ln_f_g": jnp.ones((C,), jnp.float32),
        "ln_f_b": jnp.zeros((C,), jnp.float32),
        "blocks": [],
    }
    std = 0.02
    # canonical GPT-2 residual-projection scaling (reference's "**(-5)" is a typo)
    scaled_std = 0.02 * (2 * cfg.n_layer) ** (-0.5)
    for l in range(cfg.n_layer):
        kk = ks[2 + 4 * l: 2 + 4 * (l + 1)]
        blk = {
            "ln1_g": jnp.ones((C,), jnp.float32),
            "ln1_b": jnp.zeros((C,), jnp.float32),
            # matmul weights stored bf16 in HBM: halves DMA bytes + VMEM residency
            "attn_w": (std * jax.random.normal(kk[0], (C, 3 * C), jnp.float32)).astype(jnp.bfloat16),
            "attn_b": jnp.zeros((3 * C,), jnp.float32),
            "attnproj_w": (scaled_std * jax.random.normal(kk[1], (C, C), jnp.float32)).astype(jnp.bfloat16),
            "attnproj_b": jnp.zeros((C,), jnp.float32),
            "ln2_g": jnp.ones((C,), jnp.float32),
            "ln2_b": jnp.zeros((C,), jnp.float32),
            "fc_w": (std * jax.random.normal(kk[2], (C, 4 * C), jnp.float32)).astype(jnp.bfloat16),
            "fc_b": jnp.zeros((4 * C,), jnp.float32),
            "proj_w": (std * jax.random.normal(kk[3], (4 * C, C), jnp.float32)).astype(jnp.bfloat16),
            "proj_b": jnp.zeros((C,), jnp.float32),
        }
        p["blocks"].append(blk)
    return p


def gpt_forward(params, cfg, idx, targets=None):
    B, T = idx.shape
    assert T <= cfg.block_size
    C, H, V = cfg.n_embd, cfg.n_head, cfg.vocab_size

    # embeddings (gather = glue, stays in JAX)
    tok_emb = params["wte"][idx]                  # (B, T, C)
    pos_emb = params["wpe"][:T]                   # (T, C)
    x = (tok_emb + pos_emb[None, :, :]).astype(jnp.float32)

    for blk in params["blocks"]:
        # attention branch (LN1 + QKV + causal attention + proj + residual), fused
        x = attn_block(x, blk["ln1_g"], blk["ln1_b"],
                       blk["attn_w"], blk["attn_b"],
                       blk["attnproj_w"], blk["attnproj_b"], n_head=H)
        # MLP branch (LN2 + fc + GELU + proj + residual), fused + F-streamed
        x2d = mlp_block(x.reshape(B * T, C), blk["ln2_g"], blk["ln2_b"],
                        blk["fc_w"], blk["fc_b"], blk["proj_w"], blk["proj_b"])
        x = x2d.reshape(B, T, C)

    # final LN fused into the (tiled) logits matmul against the tied embedding
    logits = lnf_logits(x.reshape(B * T, C), params["ln_f_g"], params["ln_f_b"],
                        params["wte_T"])
    Vp = logits.shape[-1]
    logits = logits.reshape(B, T, Vp)
    if Vp != V:
        logits = logits[:, :, :V]                 # drop lane-alignment padding columns

    loss = None
    if targets is not None:
        flat = logits.reshape(-1, V)
        lse = jax.nn.logsumexp(flat, axis=-1)
        picked = jnp.take_along_axis(flat, targets.reshape(-1, 1), axis=-1)[:, 0]
        loss = jnp.mean(lse - picked)
    return logits, loss


# ----------------------------- main -----------------------------

if __name__ == "__main__":
    cfg = GPTConfig(block_size=16, vocab_size=256, n_layer=2, n_head=4, n_embd=128)
    key = jax.random.PRNGKey(0)
    pkey, ikey = jax.random.split(key)
    params = init_params(pkey, cfg)

    B, T = 2, 16
    idx = jax.random.randint(ikey, (B, T), 0, cfg.vocab_size, dtype=jnp.int32)

    logits, loss = jax.jit(
        lambda p, i: gpt_forward(p, cfg, i, targets=None)
    )(params, idx)
    logits = jax.block_until_ready(logits)

    assert logits.shape == (B, T, cfg.vocab_size)
    assert bool(jnp.all(jnp.isfinite(logits)))
    print("KERNEL_OK")
</pallas_src>

<mosaic_0001>
module attributes {stable_mosaic.version = 11 : i64} {
  func.func @_mlp_block_kernel(%arg0: i32, %arg1: i32, %arg2: memref<16x128xf32, #tpu.memory_space<vmem>>, %arg3: memref<1x128xf32, #tpu.memory_space<vmem>>, %arg4: memref<1x128xf32, #tpu.memory_space<vmem>>, %arg5: memref<128x512xbf16, #tpu.memory_space<vmem>>, %arg6: memref<1x512xf32, #tpu.memory_space<vmem>>, %arg7: memref<512x128xbf16, #tpu.memory_space<vmem>>, %arg8: memref<1x128xf32, #tpu.memory_space<vmem>>, %arg9: memref<16x128xf32, #tpu.memory_space<vmem>>, %arg10: memref<16x128xbf16, #tpu.memory_space<vmem>>, %arg11: memref<16x128xf32, #tpu.memory_space<vmem>>) attributes {dimension_semantics = [#tpu.dimension_semantics<parallel>, #tpu.dimension_semantics<arbitrary>], iteration_bounds = array<i64: 2, 1>, scalar_prefetch = 0 : i64, scratch_operands = 2 : i64, tpu.core_type = #tpu.core_type<tc>, window_params = [{transform_indices = @transform_0, window_bounds = array<i64: 16, 128>}, {pipeline_mode = #tpu.pipeline_mode<synchronous>, transform_indices = @transform_1, window_bounds = array<i64: 1, 128>}, {pipeline_mode = #tpu.pipeline_mode<synchronous>, transform_indices = @transform_2, window_bounds = array<i64: 1, 128>}, {transform_indices = @transform_3, window_bounds = array<i64: 128, 512>}, {transform_indices = @transform_4, window_bounds = array<i64: 1, 512>}, {transform_indices = @transform_5, window_bounds = array<i64: 512, 128>}, {pipeline_mode = #tpu.pipeline_mode<synchronous>, transform_indices = @transform_6, window_bounds = array<i64: 1, 128>}, {transform_indices = @transform_7, window_bounds = array<i64: 16, 128>}]} {
    %c0_i32 = arith.constant 0 : i32
    %0 = arith.cmpi eq, %arg1, %c0_i32 : i32
    %1 = arith.extui %0 : i1 to i32
    %c0_i32_0 = arith.constant 0 : i32
    %2 = arith.cmpi ne, %1, %c0_i32_0 : i32
    scf.if %2 {
      %c0_19 = arith.constant 0 : index
      %c0_20 = arith.constant 0 : index
      %31 = vector.load %arg2[%c0_19, %c0_20] : memref<16x128xf32, #tpu.memory_space<vmem>>, vector<16x128xf32>
      %c0_21 = arith.constant 0 : index
      %c0_22 = arith.constant 0 : index
      %32 = vector.load %arg3[%c0_21, %c0_22] : memref<1x128xf32, #tpu.memory_space<vmem>>, vector<1x128xf32>
      %c0_23 = arith.constant 0 : index
      %c0_24 = arith.constant 0 : index
      %33 = vector.load %arg4[%c0_23, %c0_24] : memref<1x128xf32, #tpu.memory_space<vmem>>, vector<1x128xf32>
      %cst_25 = arith.constant dense<0.000000e+00> : vector<16xf32>
      %34 = vector.multi_reduction <add>, %31, %cst_25 [1] : vector<16x128xf32> to vector<16xf32>
      %35 = vector.shape_cast %34 : vector<16xf32> to vector<16x1xf32>
      %cst_26 = arith.constant 1.280000e+02 : f32
      %36 = vector.broadcast %cst_26 : f32 to vector<16x1xf32>
      %37 = arith.divf %35, %36 : vector<16x1xf32>
      %38 = vector.broadcast %37 : vector<16x1xf32> to vector<16x128xf32>
      %39 = arith.subf %31, %38 : vector<16x128xf32>
      %40 = arith.mulf %39, %39 : vector<16x128xf32>
      %cst_27 = arith.constant dense<0.000000e+00> : vector<16xf32>
      %41 = vector.multi_reduction <add>, %40, %cst_27 [1] : vector<16x128xf32> to vector<16xf32>
      %42 = vector.shape_cast %41 : vector<16xf32> to vector<16x1xf32>
      %cst_28 = arith.constant 1.280000e+02 : f32
      %43 = vector.broadcast %cst_28 : f32 to vector<16x1xf32>
      %44 = arith.divf %42, %43 : vector<16x1xf32>
      %45 = vector.broadcast %37 : vector<16x1xf32> to vector<16x128xf32>
      %46 = arith.subf %31, %45 : vector<16x128xf32>
      %cst_29 = arith.constant 9.99999974E-6 : f32
      %47 = vector.broadcast %cst_29 : f32 to vector<16x1xf32>
      %48 = arith.addf %44, %47 : vector<16x1xf32>
      %49 = math.rsqrt %48 : vector<16x1xf32>
      %50 = vector.broadcast %49 : vector<16x1xf32> to vector<16x128xf32>
      %51 = arith.mulf %46, %50 : vector<16x128xf32>
      %52 = vector.broadcast %32 : vector<1x128xf32> to vector<16x128xf32>
      %53 = arith.mulf %51, %52 : vector<16x128xf32>
      %54 = vector.broadcast %33 : vector<1x128xf32> to vector<16x128xf32>
      %55 = arith.addf %53, %54 : vector<16x128xf32>
      %56 = arith.truncf %55 : vector<16x128xf32> to vector<16x128xbf16>
      %c0_30 = arith.constant 0 : index
      %c0_31 = arith.constant 0 : index
      %57 = vector.load %arg10[%c0_30, %c0_31] : memref<16x128xbf16, #tpu.memory_space<vmem>>, vector<16x128xbf16>
      tpu.vector_store %arg10[%c0_30, %c0_31], %56 {strides = array<i32>} : memref<16x128xbf16, #tpu.memory_space<vmem>>, vector<16x128xbf16>,
      %cst_32 = arith.constant 0.000000e+00 : f32
      %58 = vector.broadcast %cst_32 : f32 to vector<16x128xf32>
      %c0_33 = arith.constant 0 : index
      %c0_34 = arith.constant 0 : index
      %59 = vector.load %arg11[%c0_33, %c0_34] : memref<16x128xf32, #tpu.memory_space<vmem>>, vector<16x128xf32>
      tpu.vector_store %arg11[%c0_33, %c0_34], %58 {strides = array<i32>} : memref<16x128xf32, #tpu.memory_space<vmem>>, vector<16x128xf32>,
    } else {
    }
    %c0 = arith.constant 0 : index
    %c0_1 = arith.constant 0 : index
    %3 = vector.load %arg10[%c0, %c0_1] : memref<16x128xbf16, #tpu.memory_space<vmem>>, vector<16x128xbf16>
    %c0_2 = arith.constant 0 : index
    %c0_3 = arith.constant 0 : index
    %4 = vector.load %arg5[%c0_2, %c0_3] : memref<128x512xbf16, #tpu.memory_space<vmem>>, vector<128x512xbf16>
    %cst = arith.constant dense<0.000000e+00> : vector<16x512xf32>
    %5 = tpu.matmul %3, %4, %cst {dimension_numbers = #tpu.dot_dimension_numbers<[1], [0], [0], [1], [0, 0, 1, 1], [], []>} : vector<16x128xbf16>, vector<128x512xbf16>, vector<16x512xf32> -> vector<16x512xf32>
    %c0_4 = arith.constant 0 : index
    %c0_5 = arith.constant 0 : index
    %6 = vector.load %arg6[%c0_4, %c0_5] : memref<1x512xf32, #tpu.memory_space<vmem>>, vector<1x512xf32>
    %7 = vector.broadcast %6 : vector<1x512xf32> to vector<16x512xf32>
    %8 = arith.addf %5, %7 : vector<16x512xf32>
    %cst_6 = arith.constant 5.000000e-01 : f32
    %9 = vector.broadcast %cst_6 : f32 to vector<16x512xf32>
    %10 = arith.mulf %9, %8 : vector<16x512xf32>
    %cst_7 = arith.constant 4.471500e-02 : f32
    %11 = vector.broadcast %cst_7 : f32 to vector<16x512xf32>
    %12 = arith.mulf %11, %8 : vector<16x512xf32>
    %13 = arith.mulf %12, %8 : vector<16x512xf32>
    %14 = arith.mulf %13, %8 : vector<16x512xf32>
    %15 = arith.addf %8, %14 : vector<16x512xf32>
    %cst_8 = arith.constant 0.797884583 : f32
    %16 = vector.broadcast %cst_8 : f32 to vector<16x512xf32>
    %17 = arith.mulf %16, %15 : vector<16x512xf32>
    %18 = math.tanh %17 : vector<16x512xf32>
    %cst_9 = arith.constant 1.000000e+00 : f32
    %19 = vector.broadcast %cst_9 : f32 to vector<16x512xf32>
    %20 = arith.addf %19, %18 : vector<16x512xf32>
    %21 = arith.mulf %10, %20 : vector<16x512xf32>
    %22 = arith.truncf %21 : vector<16x512xf32> to vector<16x512xbf16>
    %c0_10 = arith.constant 0 : index
    %c0_11 = arith.constant 0 : index
    %23 = vector.load %arg11[%c0_10, %c0_11] : memref<16x128xf32, #tpu.memory_space<vmem>>, vector<16x128xf32>
    %c0_12 = arith.constant 0 : index
    %c0_13 = arith.constant 0 : index
    %24 = vector.load %arg7[%c0_12, %c0_13] : memref<512x128xbf16, #tpu.memory_space<vmem>>, vector<512x128xbf16>
    %cst_14 = arith.constant dense<0.000000e+00> : vector<16x128xf32>
    %25 = tpu.matmul %22, %24, %cst_14 {dimension_numbers = #tpu.dot_dimension_numbers<[1], [0], [0], [1], [0, 0, 1, 1], [], []>} : vector<16x512xbf16>, vector<512x128xbf16>, vector<16x128xf32> -> vector<16x128xf32>
    %26 = arith.addf %23, %25 : vector<16x128xf32>
    %c0_15 = arith.constant 0 : index
    %c0_16 = arith.constant 0 : index
    %27 = vector.load %arg11[%c0_15, %c0_16] : memref<16x128xf32, #tpu.memory_space<vmem>>, vector<16x128xf32>
    tpu.vector_store %arg11[%c0_15, %c0_16], %26 {strides = array<i32>} : memref<16x128xf32, #tpu.memory_space<vmem>>, vector<16x128xf32>,
    %c0_i32_17 = arith.constant 0 : i32
    %28 = arith.cmpi eq, %arg1, %c0_i32_17 : i32
    %29 = arith.extui %28 : i1 to i32
    %c0_i32_18 = arith.constant 0 : i32
    %30 = arith.cmpi ne, %29, %c0_i32_18 : i32
    scf.if %30 {
      %c0_19 = arith.constant 0 : index
      %c0_20 = arith.constant 0 : index
      %31 = vector.load %arg2[%c0_19, %c0_20] : memref<16x128xf32, #tpu.memory_space<vmem>>, vector<16x128xf32>
      %c0_21 = arith.constant 0 : index
      %c0_22 = arith.constant 0 : index
      %32 = vector.load %arg11[%c0_21, %c0_22] : memref<16x128xf32, #tpu.memory_space<vmem>>, vector<16x128xf32>
      %c0_23 = arith.constant 0 : index
      %c0_24 = arith.constant 0 : index
      %33 = vector.load %arg8[%c0_23, %c0_24] : memref<1x128xf32, #tpu.memory_space<vmem>>, vector<1x128xf32>
      %34 = vector.broadcast %33 : vector<1x128xf32> to vector<16x128xf32>
      %35 = arith.addf %32, %34 : vector<16x128xf32>
      %36 = arith.addf %31, %35 : vector<16x128xf32>
      %c0_25 = arith.constant 0 : index
      %c0_26 = arith.constant 0 : index
      %37 = vector.load %arg9[%c0_25, %c0_26] : memref<16x128xf32, #tpu.memory_space<vmem>>, vector<16x128xf32>
      tpu.vector_store %arg9[%c0_25, %c0_26], %36 {strides = array<i32>} : memref<16x128xf32, #tpu.memory_space<vmem>>, vector<16x128xf32>,
    } else {
    }
    return
  }
  func.func @transform_0(%arg0: i32, %arg1: i32) -> (i32, i32) {
    %c0_i32 = arith.constant 0 : i32
    %c0_i32_0 = arith.constant 0 : i32
    return %arg0, %c0_i32 : i32, i32
  }
  func.func @transform_1(%arg0: i32, %arg1: i32) -> (i32, i32) {
    %c0_i32 = arith.constant 0 : i32
    %c0_i32_0 = arith.constant 0 : i32
    %c0_i32_1 = arith.constant 0 : i32
    return %c0_i32, %c0_i32_0 : i32, i32
  }
  func.func @transform_2(%arg0: i32, %arg1: i32) -> (i32, i32) {
    %c0_i32 = arith.constant 0 : i32
    %c0_i32_0 = arith.constant 0 : i32
    %c0_i32_1 = arith.constant 0 : i32
    return %c0_i32, %c0_i32_0 : i32, i32
  }
  func.func @transform_3(%arg0: i32, %arg1: i32) -> (i32, i32) {
    %c0_i32 = arith.constant 0 : i32
    %c0_i32_0 = arith.constant 0 : i32
    return %c0_i32, %arg1 : i32, i32
  }
  func.func @transform_4(%arg0: i32, %arg1: i32) -> (i32, i32) {
    %c0_i32 = arith.constant 0 : i32
    %c0_i32_0 = arith.constant 0 : i32
    return %c0_i32, %arg1 : i32, i32
  }
  func.func @transform_5(%arg0: i32, %arg1: i32) -> (i32, i32) {
    %c0_i32 = arith.constant 0 : i32
    %c0_i32_0 = arith.constant 0 : i32
    return %arg1, %c0_i32 : i32, i32
  }
  func.func @transform_6(%arg0: i32, %arg1: i32) -> (i32, i32) {
    %c0_i32 = arith.constant 0 : i32
    %c0_i32_0 = arith.constant 0 : i32
    %c0_i32_1 = arith.constant 0 : i32
    return %c0_i32, %c0_i32_0 : i32, i32
  }
  func.func @transform_7(%arg0: i32, %arg1: i32) -> (i32, i32) {
    %c0_i32 = arith.constant 0 : i32
    %c0_i32_0 = arith.constant 0 : i32
    return %arg0, %c0_i32 : i32, i32
  }
}

module attributes {stable_mosaic.version = 11 : i64} {
  func.func @_attn_block_kernel(%arg0: i32, %arg1: memref<1x16x128xf32, #tpu.memory_space<vmem>>, %arg2: memref<1x128xf32, #tpu.memory_space<vmem>>, %arg3: memref<1x128xf32, #tpu.memory_space<vmem>>, %arg4: memref<128x384xbf16, #tpu.memory_space<vmem>>, %arg5: memref<1x384xf32, #tpu.memory_space<vmem>>, %arg6: memref<128x128xbf16, #tpu.memory_space<vmem>>, %arg7: memref<1x128xf32, #tpu.memory_space<vmem>>, %arg8: memref<1x16x128xf32, #tpu.memory_space<vmem>>, %arg9: memref<16x128xbf16, #tpu.memory_space<vmem>>) attributes {dimension_semantics = [#tpu.dimension_semantics<parallel>], iteration_bounds = array<i64: 2>, scalar_prefetch = 0 : i64, scratch_operands = 1 : i64, tpu.core_type = #tpu.core_type<tc>, window_params = [{transform_indices = @transform_0, window_bounds = array<i64: 1, 16, 128>}, {pipeline_mode = #tpu.pipeline_mode<synchronous>, transform_indices = @transform_1, window_bounds = array<i64: 1, 128>}, {pipeline_mode = #tpu.pipeline_mode<synchronous>, transform_indices = @transform_2, window_bounds = array<i64: 1, 128>}, {pipeline_mode = #tpu.pipeline_mode<synchronous>, transform_indices = @transform_3, window_bounds = array<i64: 128, 384>}, {pipeline_mode = #tpu.pipeline_mode<synchronous>, transform_indices = @transform_4, window_bounds = array<i64: 1, 384>}, {pipeline_mode = #tpu.pipeline_mode<synchronous>, transform_indices = @transform_5, window_bounds = array<i64: 128, 128>}, {pipeline_mode = #tpu.pipeline_mode<synchronous>, transform_indices = @transform_6, window_bounds = array<i64: 1, 128>}, {transform_indices = @transform_7, window_bounds = array<i64: 1, 16, 128>}]} {
    %c0 = arith.constant 0 : index
    %c0_0 = arith.constant 0 : index
    %c0_1 = arith.constant 0 : index
    %0 = vector.load %arg1[%c0, %c0_0, %c0_1] : memref<1x16x128xf32, #tpu.memory_space<vmem>>, vector<1x16x128xf32>
    %1 = vector.shape_cast %0 : vector<1x16x128xf32> to vector<16x128xf32>
    %c0_2 = arith.constant 0 : index
    %c0_3 = arith.constant 0 : index
    %2 = vector.load %arg2[%c0_2, %c0_3] : memref<1x128xf32, #tpu.memory_space<vmem>>, vector<1x128xf32>
    %c0_4 = arith.constant 0 : index
    %c0_5 = arith.constant 0 : index
    %3 = vector.load %arg3[%c0_4, %c0_5] : memref<1x128xf32, #tpu.memory_space<vmem>>, vector<1x128xf32>
    %cst = arith.constant dense<0.000000e+00> : vector<16xf32>
    %4 = vector.multi_reduction <add>, %1, %cst [1] : vector<16x128xf32> to vector<16xf32>
    %5 = vector.shape_cast %4 : vector<16xf32> to vector<16x1xf32>
    %cst_6 = arith.constant 1.280000e+02 : f32
    %6 = vector.broadcast %cst_6 : f32 to vector<16x1xf32>
    %7 = arith.divf %5, %6 : vector<16x1xf32>
    %8 = vector.broadcast %7 : vector<16x1xf32> to vector<16x128xf32>
    %9 = arith.subf %1, %8 : vector<16x128xf32>
    %10 = arith.mulf %9, %9 : vector<16x128xf32>
    %cst_7 = arith.constant dense<0.000000e+00> : vector<16xf32>
    %11 = vector.multi_reduction <add>, %10, %cst_7 [1] : vector<16x128xf32> to vector<16xf32>
    %12 = vector.shape_cast %11 : vector<16xf32> to vector<16x1xf32>
    %cst_8 = arith.constant 1.280000e+02 : f32
    %13 = vector.broadcast %cst_8 : f32 to vector<16x1xf32>
    %14 = arith.divf %12, %13 : vector<16x1xf32>
    %15 = vector.broadcast %7 : vector<16x1xf32> to vector<16x128xf32>
    %16 = arith.subf %1, %15 : vector<16x128xf32>
    %cst_9 = arith.constant 9.99999974E-6 : f32
    %17 = vector.broadcast %cst_9 : f32 to vector<16x1xf32>
    %18 = arith.addf %14, %17 : vector<16x1xf32>
    %19 = math.rsqrt %18 : vector<16x1xf32>
    %20 = vector.broadcast %19 : vector<16x1xf32> to vector<16x128xf32>
    %21 = arith.mulf %16, %20 : vector<16x128xf32>
    %22 = vector.broadcast %2 : vector<1x128xf32> to vector<16x128xf32>
    %23 = arith.mulf %21, %22 : vector<16x128xf32>
    %24 = vector.broadcast %3 : vector<1x128xf32> to vector<16x128xf32>
    %25 = arith.addf %23, %24 : vector<16x128xf32>
    %26 = arith.truncf %25 : vector<16x128xf32> to vector<16x128xbf16>
    %c0_10 = arith.constant 0 : index
    %c0_11 = arith.constant 0 : index
    %27 = vector.load %arg4[%c0_10, %c0_11] : memref<128x384xbf16, #tpu.memory_space<vmem>>, vector<128x384xbf16>
    %cst_12 = arith.constant dense<0.000000e+00> : vector<16x384xf32>
    %28 = tpu.matmul %26, %27, %cst_12 {dimension_numbers = #tpu.dot_dimension_numbers<[1], [0], [0], [1], [0, 0, 1, 1], [], []>} : vector<16x128xbf16>, vector<128x384xbf16>, vector<16x384xf32> -> vector<16x384xf32>
    %c0_13 = arith.constant 0 : index
    %c0_14 = arith.constant 0 : index
    %29 = vector.load %arg5[%c0_13, %c0_14] : memref<1x384xf32, #tpu.memory_space<vmem>>, vector<1x384xf32>
    %30 = vector.broadcast %29 : vector<1x384xf32> to vector<16x384xf32>
    %31 = arith.addf %28, %30 : vector<16x384xf32>
    %32 = arith.truncf %31 : vector<16x384xf32> to vector<16x384xbf16>
    %33 = tpu.iota {dimensions = array<i32: 0>} : vector<16x16xi32>
    %34 = tpu.iota {dimensions = array<i32: 1>} : vector<16x16xi32>
    %35 = arith.cmpi sle, %34, %33 : vector<16x16xi32>
    %cst_15 = arith.constant 0.000000e+00 : f32
    %cst_16 = arith.constant -1.000000e+30 : f32
    %36 = vector.broadcast %cst_15 : f32 to vector<16x16xf32>
    %37 = vector.broadcast %cst_16 : f32 to vector<16x16xf32>
    %38 = arith.select %35, %36, %37 : vector<16x16xi1>, vector<16x16xf32>
    %39 = vector.extract_strided_slice %32 {offsets = [0, 0], sizes = [16, 32], strides = [1, 1]} : vector<16x384xbf16> to vector<16x32xbf16>
    %40 = vector.extract_strided_slice %32 {offsets = [0, 128], sizes = [16, 32], strides = [1, 1]} : vector<16x384xbf16> to vector<16x32xbf16>
    %41 = vector.extract_strided_slice %32 {offsets = [0, 256], sizes = [16, 32], strides = [1, 1]} : vector<16x384xbf16> to vector<16x32xbf16>
    %cst_17 = arith.constant dense<0.000000e+00> : vector<16x16xf32>
    %42 = tpu.matmul %39, %40, %cst_17 {dimension_numbers = #tpu.dot_dimension_numbers<[1], [1], [0], [0], [0, 0, 1, 0], [], []>} : vector<16x32xbf16>, vector<16x32xbf16>, vector<16x16xf32> -> vector<16x16xf32>
    %cst_18 = arith.constant 0.176776692 : f32
    %43 = vector.broadcast %cst_18 : f32 to vector<16x16xf32>
    %44 = arith.mulf %42, %43 : vector<16x16xf32>
    %45 = arith.addf %44, %38 : vector<16x16xf32>
    %cst_19 = arith.constant dense<0xFF800000> : vector<16xf32>
    %46 = vector.multi_reduction <maximumf>, %45, %cst_19 [1] : vector<16x16xf32> to vector<16xf32>
    %47 = vector.shape_cast %46 : vector<16xf32> to vector<16x1xf32>
    %48 = vector.broadcast %47 : vector<16x1xf32> to vector<16x16xf32>
    %49 = arith.subf %45, %48 : vector<16x16xf32>
    %50 = math.exp %49 : vector<16x16xf32>
    %cst_20 = arith.constant dense<0.000000e+00> : vector<16xf32>
    %51 = vector.multi_reduction <add>, %50, %cst_20 [1] : vector<16x16xf32> to vector<16xf32>
    %52 = vector.shape_cast %51 : vector<16xf32> to vector<16x1xf32>
    %53 = arith.truncf %50 : vector<16x16xf32> to vector<16x16xbf16>
    %cst_21 = arith.constant dense<0.000000e+00> : vector<16x32xf32>
    %54 = tpu.matmul %53, %41, %cst_21 {dimension_numbers = #tpu.dot_dimension_numbers<[1], [0], [0], [1], [0, 0, 1, 1], [], []>} : vector<16x16xbf16>, vector<16x32xbf16>, vector<16x32xf32> -> vector<16x32xf32>
    %55 = tpu.reciprocal %52 {approx = true} : vector<16x1xf32> -> vector<16x1xf32>
    %56 = vector.broadcast %55 : vector<16x1xf32> to vector<16x32xf32>
    %57 = arith.mulf %54, %56 : vector<16x32xf32>
    %58 = arith.truncf %57 : vector<16x32xf32> to vector<16x32xbf16>
    %c0_22 = arith.constant 0 : index
    %c0_23 = arith.constant 0 : index
    %59 = vector.load %arg9[%c0_22, %c0_23] : memref<16x128xbf16, #tpu.memory_space<vmem>>, vector<16x32xbf16>
    tpu.vector_store %arg9[%c0_22, %c0_23], %58 {strides = array<i32>} : memref<16x128xbf16, #tpu.memory_space<vmem>>, vector<16x32xbf16>,
    %60 = vector.extract_strided_slice %32 {offsets = [0, 32], sizes = [16, 32], strides = [1, 1]} : vector<16x384xbf16> to vector<16x32xbf16>
    %61 = vector.extract_strided_slice %32 {offsets = [0, 160], sizes = [16, 32], strides = [1, 1]} : vector<16x384xbf16> to vector<16x32xbf16>
    %62 = vector.extract_strided_slice %32 {offsets = [0, 288], sizes = [16, 32], strides = [1, 1]} : vector<16x384xbf16> to vector<16x32xbf16>
    %cst_24 = arith.constant dense<0.000000e+00> : vector<16x16xf32>
    %63 = tpu.matmul %60, %61, %cst_24 {dimension_numbers = #tpu.dot_dimension_numbers<[1], [1], [0], [0], [0, 0, 1, 0], [], []>} : vector<16x32xbf16>, vector<16x32xbf16>, vector<16x16xf32> -> vector<16x16xf32>
    %cst_25 = arith.constant 0.176776692 : f32
    %64 = vector.broadcast %cst_25 : f32 to vector<16x16xf32>
    %65 = arith.mulf %63, %64 : vector<16x16xf32>
    %66 = arith.addf %65, %38 : vector<16x16xf32>
    %cst_26 = arith.constant dense<0xFF800000> : vector<16xf32>
    %67 = vector.multi_reduction <maximumf>, %66, %cst_26 [1] : vector<16x16xf32> to vector<16xf32>
    %68 = vector.shape_cast %67 : vector<16xf32> to vector<16x1xf32>
    %69 = vector.broadcast %68 : vector<16x1xf32> to vector<16x16xf32>
    %70 = arith.subf %66, %69 : vector<16x16xf32>
    %71 = math.exp %70 : vector<16x16xf32>
    %cst_27 = arith.constant dense<0.000000e+00> : vector<16xf32>
    %72 = vector.multi_reduction <add>, %71, %cst_27 [1] : vector<16x16xf32> to vector<16xf32>
    %73 = vector.shape_cast %72 : vector<16xf32> to vector<16x1xf32>
    %74 = arith.truncf %71 : vector<16x16xf32> to vector<16x16xbf16>
    %cst_28 = arith.constant dense<0.000000e+00> : vector<16x32xf32>
    %75 = tpu.matmul %74, %62, %cst_28 {dimension_numbers = #tpu.dot_dimension_numbers<[1], [0], [0], [1], [0, 0, 1, 1], [], []>} : vector<16x16xbf16>, vector<16x32xbf16>, vector<16x32xf32> -> vector<16x32xf32>
    %76 = tpu.reciprocal %73 {approx = true} : vector<16x1xf32> -> vector<16x1xf32>
    %77 = vector.broadcast %76 : vector<16x1xf32> to vector<16x32xf32>
    %78 = arith.mulf %75, %77 : vector<16x32xf32>
    %79 = arith.truncf %78 : vector<16x32xf32> to vector<16x32xbf16>
    %c0_29 = arith.constant 0 : index
    %c32 = arith.constant 32 : index
    %80 = vector.load %arg9[%c0_29, %c32] : memref<16x128xbf16, #tpu.memory_space<vmem>>, vector<16x32xbf16>
    tpu.vector_store %arg9[%c0_29, %c32], %79 {strides = array<i32>} : memref<16x128xbf16, #tpu.memory_space<vmem>>, vector<16x32xbf16>,
    %81 = vector.extract_strided_slice %32 {offsets = [0, 64], sizes = [16, 32], strides = [1, 1]} : vector<16x384xbf16> to vector<16x32xbf16>
    %82 = vector.extract_strided_slice %32 {offsets = [0, 192], sizes = [16, 32], strides = [1, 1]} : vector<16x384xbf16> to vector<16x32xbf16>
    %83 = vector.extract_strided_slice %32 {offsets = [0, 320], sizes = [16, 32], strides = [1, 1]} : vector<16x384xbf16> to vector<16x32xbf16>
    %cst_30 = arith.constant dense<0.000000e+00> : vector<16x16xf32>
    %84 = tpu.matmul %81, %82, %cst_30 {dimension_numbers = #tpu.dot_dimension_numbers<[1], [1], [0], [0], [0, 0, 1, 0], [], []>} : vector<16x32xbf16>, vector<16x32xbf16>, vector<16x16xf32> -> vector<16x16xf32>
    %cst_31 = arith.constant 0.176776692 : f32
    %85 = vector.broadcast %cst_31 : f32 to vector<16x16xf32>
    %86 = arith.mulf %84, %85 : vector<16x16xf32>
    %87 = arith.addf %86, %38 : vector<16x16xf32>
    %cst_32 = arith.constant dense<0xFF800000> : vector<16xf32>
    %88 = vector.multi_reduction <maximumf>, %87, %cst_32 [1] : vector<16x16xf32> to vector<16xf32>
    %89 = vector.shape_cast %88 : vector<16xf32> to vector<16x1xf32>
    %90 = vector.broadcast %89 : vector<16x1xf32> to vector<16x16xf32>
    %91 = arith.subf %87, %90 : vector<16x16xf32>
    %92 = math.exp %91 : vector<16x16xf32>
    %cst_33 = arith.constant dense<0.000000e+00> : vector<16xf32>
    %93 = vector.multi_reduction <add>, %92, %cst_33 [1] : vector<16x16xf32> to vector<16xf32>
    %94 = vector.shape_cast %93 : vector<16xf32> to vector<16x1xf32>
    %95 = arith.truncf %92 : vector<16x16xf32> to vector<16x16xbf16>
    %cst_34 = arith.constant dense<0.000000e+00> : vector<16x32xf32>
    %96 = tpu.matmul %95, %83, %cst_34 {dimension_numbers = #tpu.dot_dimension_numbers<[1], [0], [0], [1], [0, 0, 1, 1], [], []>} : vector<16x16xbf16>, vector<16x32xbf16>, vector<16x32xf32> -> vector<16x32xf32>
    %97 = tpu.reciprocal %94 {approx = true} : vector<16x1xf32> -> vector<16x1xf32>
    %98 = vector.broadcast %97 : vector<16x1xf32> to vector<16x32xf32>
    %99 = arith.mulf %96, %98 : vector<16x32xf32>
    %100 = arith.truncf %99 : vector<16x32xf32> to vector<16x32xbf16>
    %c0_35 = arith.constant 0 : index
    %c64 = arith.constant 64 : index
    %101 = vector.load %arg9[%c0_35, %c64] : memref<16x128xbf16, #tpu.memory_space<vmem>>, vector<16x32xbf16>
    tpu.vector_store %arg9[%c0_35, %c64], %100 {strides = array<i32>} : memref<16x128xbf16, #tpu.memory_space<vmem>>, vector<16x32xbf16>,
    %102 = vector.extract_strided_slice %32 {offsets = [0, 96], sizes = [16, 32], strides = [1, 1]} : vector<16x384xbf16> to vector<16x32xbf16>
    %103 = vector.extract_strided_slice %32 {offsets = [0, 224], sizes = [16, 32], strides = [1, 1]} : vector<16x384xbf16> to vector<16x32xbf16>
    %104 = vector.extract_strided_slice %32 {offsets = [0, 352], sizes = [16, 32], strides = [1, 1]} : vector<16x384xbf16> to vector<16x32xbf16>
    %cst_36 = arith.constant dense<0.000000e+00> : vector<16x16xf32>
    %105 = tpu.matmul %102, %103, %cst_36 {dimension_numbers = #tpu.dot_dimension_numbers<[1], [1], [0], [0], [0, 0, 1, 0], [], []>} : vector<16x32xbf16>, vector<16x32xbf16>, vector<16x16xf32> -> vector<16x16xf32>
    %cst_37 = arith.constant 0.176776692 : f32
    %106 = vector.broadcast %cst_37 : f32 to vector<16x16xf32>
    %107 = arith.mulf %105, %106 : vector<16x16xf32>
    %108 = arith.addf %107, %38 : vector<16x16xf32>
    %cst_38 = arith.constant dense<0xFF800000> : vector<16xf32>
    %109 = vector.multi_reduction <maximumf>, %108, %cst_38 [1] : vector<16x16xf32> to vector<16xf32>
    %110 = vector.shape_cast %109 : vector<16xf32> to vector<16x1xf32>
    %111 = vector.broadcast %110 : vector<16x1xf32> to vector<16x16xf32>
    %112 = arith.subf %108, %111 : vector<16x16xf32>
    %113 = math.exp %112 : vector<16x16xf32>
    %cst_39 = arith.constant dense<0.000000e+00> : vector<16xf32>
    %114 = vector.multi_reduction <add>, %113, %cst_39 [1] : vector<16x16xf32> to vector<16xf32>
    %115 = vector.shape_cast %114 : vector<16xf32> to vector<16x1xf32>
    %116 = arith.truncf %113 : vector<16x16xf32> to vector<16x16xbf16>
    %cst_40 = arith.constant dense<0.000000e+00> : vector<16x32xf32>
    %117 = tpu.matmul %116, %104, %cst_40 {dimension_numbers = #tpu.dot_dimension_numbers<[1], [0], [0], [1], [0, 0, 1, 1], [], []>} : vector<16x16xbf16>, vector<16x32xbf16>, vector<16x32xf32> -> vector<16x32xf32>
    %118 = tpu.reciprocal %115 {approx = true} : vector<16x1xf32> -> vector<16x1xf32>
    %119 = vector.broadcast %118 : vector<16x1xf32> to vector<16x32xf32>
    %120 = arith.mulf %117, %119 : vector<16x32xf32>
    %121 = arith.truncf %120 : vector<16x32xf32> to vector<16x32xbf16>
    %c0_41 = arith.constant 0 : index
    %c96 = arith.constant 96 : index
    %122 = vector.load %arg9[%c0_41, %c96] : memref<16x128xbf16, #tpu.memory_space<vmem>>, vector<16x32xbf16>
    tpu.vector_store %arg9[%c0_41, %c96], %121 {strides = array<i32>} : memref<16x128xbf16, #tpu.memory_space<vmem>>, vector<16x32xbf16>,
    %c0_42 = arith.constant 0 : index
    %c0_43 = arith.constant 0 : index
    %123 = vector.load %arg9[%c0_42, %c0_43] : memref<16x128xbf16, #tpu.memory_space<vmem>>, vector<16x128xbf16>
    %c0_44 = arith.constant 0 : index
    %c0_45 = arith.constant 0 : index
    %124 = vector.load %arg6[%c0_44, %c0_45] : memref<128x128xbf16, #tpu.memory_space<vmem>>, vector<128x128xbf16>
    %cst_46 = arith.constant dense<0.000000e+00> : vector<16x128xf32>
    %125 = tpu.matmul %123, %124, %cst_46 {dimension_numbers = #tpu.dot_dimension_numbers<[1], [0], [0], [1], [0, 0, 1, 1], [], []>} : vector<16x128xbf16>, vector<128x128xbf16>, vector<16x128xf32> -> vector<16x128xf32>
    %c0_47 = arith.constant 0 : index
    %c0_48 = arith.constant 0 : index
    %126 = vector.load %arg7[%c0_47, %c0_48] : memref<1x128xf32, #tpu.memory_space<vmem>>, vector<1x128xf32>
    %127 = vector.broadcast %126 : vector<1x128xf32> to vector<16x128xf32>
    %128 = arith.addf %125, %127 : vector<16x128xf32>
    %129 = arith.addf %1, %128 : vector<16x128xf32>
    %c0_49 = arith.constant 0 : index
    %c0_50 = arith.constant 0 : index
    %c0_51 = arith.constant 0 : index
    %130 = vector.load %arg8[%c0_49, %c0_50, %c0_51] : memref<1x16x128xf32, #tpu.memory_space<vmem>>, vector<1x16x128xf32>
    %131 = vector.shape_cast %130 : vector<1x16x128xf32> to vector<16x128xf32>
    %132 = vector.shape_cast %129 : vector<16x128xf32> to vector<1x16x128xf32>
    tpu.vector_store %arg8[%c0_49, %c0_50, %c0_51], %132 {strides = array<i32>} : memref<1x16x128xf32, #tpu.memory_space<vmem>>, vector<1x16x128xf32>,
    return
  }
  func.func @transform_0(%arg0: i32) -> (i32, i32, i32) {
    %c0_i32 = arith.constant 0 : i32
    %c0_i32_0 = arith.constant 0 : i32
    %c0_i32_1 = arith.constant 0 : i32
    return %arg0, %c0_i32, %c0_i32_0 : i32, i32, i32
  }
  func.func @transform_1(%arg0: i32) -> (i32, i32) {
    %c0_i32 = arith.constant 0 : i32
    %c0_i32_0 = arith.constant 0 : i32
    %c0_i32_1 = arith.constant 0 : i32
    return %c0_i32, %c0_i32_0 : i32, i32
  }
  func.func @transform_2(%arg0: i32) -> (i32, i32) {
    %c0_i32 = arith.constant 0 : i32
    %c0_i32_0 = arith.constant 0 : i32
    %c0_i32_1 = arith.constant 0 : i32
    return %c0_i32, %c0_i32_0 : i32, i32
  }
  func.func @transform_3(%arg0: i32) -> (i32, i32) {
    %c0_i32 = arith.constant 0 : i32
    %c0_i32_0 = arith.constant 0 : i32
    %c0_i32_1 = arith.constant 0 : i32
    return %c0_i32, %c0_i32_0 : i32, i32
  }
  func.func @transform_4(%arg0: i32) -> (i32, i32) {
    %c0_i32 = arith.constant 0 : i32
    %c0_i32_0 = arith.constant 0 : i32
    %c0_i32_1 = arith.constant 0 : i32
    return %c0_i32, %c0_i32_0 : i32, i32
  }
  func.func @transform_5(%arg0: i32) -> (i32, i32) {
    %c0_i32 = arith.constant 0 : i32
    %c0_i32_0 = arith.constant 0 : i32
    %c0_i32_1 = arith.constant 0 : i32
    return %c0_i32, %c0_i32_0 : i32, i32
  }
  func.func @transform_6(%arg0: i32) -> (i32, i32) {
    %c0_i32 = arith.constant 0 : i32
    %c0_i32_0 = arith.constant 0 : i32
    %c0_i32_1 = arith.constant 0 : i32
    return %c0_i32, %c0_i32_0 : i32, i32
  }
  func.func @transform_7(%arg0: i32) -> (i32, i32, i32) {
    %c0_i32 = arith.constant 0 : i32
    %c0_i32_0 = arith.constant 0 : i32
    %c0_i32_1 = arith.constant 0 : i32
    return %arg0, %c0_i32, %c0_i32_0 : i32, i32, i32
  }
}

module attributes {stable_mosaic.version = 11 : i64} {
  func.func @_attn_block_kernel(%arg0: i32, %arg1: memref<1x16x128xf32, #tpu.memory_space<vmem>>, %arg2: memref<1x128xf32, #tpu.memory_space<vmem>>, %arg3: memref<1x128xf32, #tpu.memory_space<vmem>>, %arg4: memref<128x384xbf16, #tpu.memory_space<vmem>>, %arg5: memref<1x384xf32, #tpu.memory_space<vmem>>, %arg6: memref<128x128xbf16, #tpu.memory_space<vmem>>, %arg7: memref<1x128xf32, #tpu.memory_space<vmem>>, %arg8: memref<1x16x128xf32, #tpu.memory_space<vmem>>, %arg9: memref<16x128xbf16, #tpu.memory_space<vmem>>) attributes {dimension_semantics = [#tpu.dimension_semantics<parallel>], iteration_bounds = array<i64: 2>, scalar_prefetch = 0 : i64, scratch_operands = 1 : i64, tpu.core_type = #tpu.core_type<tc>, window_params = [{transform_indices = @transform_0, window_bounds = array<i64: 1, 16, 128>}, {pipeline_mode = #tpu.pipeline_mode<synchronous>, transform_indices = @transform_1, window_bounds = array<i64: 1, 128>}, {pipeline_mode = #tpu.pipeline_mode<synchronous>, transform_indices = @transform_2, window_bounds = array<i64: 1, 128>}, {pipeline_mode = #tpu.pipeline_mode<synchronous>, transform_indices = @transform_3, window_bounds = array<i64: 128, 384>}, {pipeline_mode = #tpu.pipeline_mode<synchronous>, transform_indices = @transform_4, window_bounds = array<i64: 1, 384>}, {pipeline_mode = #tpu.pipeline_mode<synchronous>, transform_indices = @transform_5, window_bounds = array<i64: 128, 128>}, {pipeline_mode = #tpu.pipeline_mode<synchronous>, transform_indices = @transform_6, window_bounds = array<i64: 1, 128>}, {transform_indices = @transform_7, window_bounds = array<i64: 1, 16, 128>}]} {
    %c0 = arith.constant 0 : index
    %c0_0 = arith.constant 0 : index
    %c0_1 = arith.constant 0 : index
    %0 = vector.load %arg1[%c0, %c0_0, %c0_1] : memref<1x16x128xf32, #tpu.memory_space<vmem>>, vector<1x16x128xf32>
    %1 = vector.shape_cast %0 : vector<1x16x128xf32> to vector<16x128xf32>
    %c0_2 = arith.constant 0 : index
    %c0_3 = arith.constant 0 : index
    %2 = vector.load %arg2[%c0_2, %c0_3] : memref<1x128xf32, #tpu.memory_space<vmem>>, vector<1x128xf32>
    %c0_4 = arith.constant 0 : index
    %c0_5 = arith.constant 0 : index
    %3 = vector.load %arg3[%c0_4, %c0_5] : memref<1x128xf32, #tpu.memory_space<vmem>>, vector<1x128xf32>
    %cst = arith.constant dense<0.000000e+00> : vector<16xf32>
    %4 = vector.multi_reduction <add>, %1, %cst [1] : vector<16x128xf32> to vector<16xf32>
    %5 = vector.shape_cast %4 : vector<16xf32> to vector<16x1xf32>
    %cst_6 = arith.constant 1.280000e+02 : f32
    %6 = vector.broadcast %cst_6 : f32 to vector<16x1xf32>
    %7 = arith.divf %5, %6 : vector<16x1xf32>
    %8 = vector.broadcast %7 : vector<16x1xf32> to vector<16x128xf32>
    %9 = arith.subf %1, %8 : vector<16x128xf32>
    %10 = arith.mulf %9, %9 : vector<16x128xf32>
    %cst_7 = arith.constant dense<0.000000e+00> : vector<16xf32>
    %11 = vector.multi_reduction <add>, %10, %cst_7 [1] : vector<16x128xf32> to vector<16xf32>
    %12 = vector.shape_cast %11 : vector<16xf32> to vector<16x1xf32>
    %cst_8 = arith.constant 1.280000e+02 : f32
    %13 = vector.broadcast %cst_8 : f32 to vector<16x1xf32>
    %14 = arith.divf %12, %13 : vector<16x1xf32>
    %15 = vector.broadcast %7 : vector<16x1xf32> to vector<16x128xf32>
    %16 = arith.subf %1, %15 : vector<16x128xf32>
    %cst_9 = arith.constant 9.99999974E-6 : f32
    %17 = vector.broadcast %cst_9 : f32 to vector<16x1xf32>
    %18 = arith.addf %14, %17 : vector<16x1xf32>
    %19 = math.rsqrt %18 : vector<16x1xf32>
    %20 = vector.broadcast %19 : vector<16x1xf32> to vector<16x128xf32>
    %21 = arith.mulf %16, %20 : vector<16x128xf32>
    %22 = vector.broadcast %2 : vector<1x128xf32> to vector<16x128xf32>
    %23 = arith.mulf %21, %22 : vector<16x128xf32>
    %24 = vector.broadcast %3 : vector<1x128xf32> to vector<16x128xf32>
    %25 = arith.addf %23, %24 : vector<16x128xf32>
    %26 = arith.truncf %25 : vector<16x128xf32> to vector<16x128xbf16>
    %c0_10 = arith.constant 0 : index
    %c0_11 = arith.constant 0 : index
    %27 = vector.load %arg4[%c0_10, %c0_11] : memref<128x384xbf16, #tpu.memory_space<vmem>>, vector<128x384xbf16>
    %cst_12 = arith.constant dense<0.000000e+00> : vector<16x384xf32>
    %28 = tpu.matmul %26, %27, %cst_12 {dimension_numbers = #tpu.dot_dimension_numbers<[1], [0], [0], [1], [0, 0, 1, 1], [], []>} : vector<16x128xbf16>, vector<128x384xbf16>, vector<16x384xf32> -> vector<16x384xf32>
    %c0_13 = arith.constant 0 : index
    %c0_14 = arith.constant 0 : index
    %29 = vector.load %arg5[%c0_13, %c0_14] : memref<1x384xf32, #tpu.memory_space<vmem>>, vector<1x384xf32>
    %30 = vector.broadcast %29 : vector<1x384xf32> to vector<16x384xf32>
    %31 = arith.addf %28, %30 : vector<16x384xf32>
    %32 = arith.truncf %31 : vector<16x384xf32> to vector<16x384xbf16>
    %33 = tpu.iota {dimensions = array<i32: 0>} : vector<16x16xi32>
    %34 = tpu.iota {dimensions = array<i32: 1>} : vector<16x16xi32>
    %35 = arith.cmpi sle, %34, %33 : vector<16x16xi32>
    %cst_15 = arith.constant 0.000000e+00 : f32
    %cst_16 = arith.constant -1.000000e+30 : f32
    %36 = vector.broadcast %cst_15 : f32 to vector<16x16xf32>
    %37 = vector.broadcast %cst_16 : f32 to vector<16x16xf32>
    %38 = arith.select %35, %36, %37 : vector<16x16xi1>, vector<16x16xf32>
    %39 = vector.extract_strided_slice %32 {offsets = [0, 0], sizes = [16, 32], strides = [1, 1]} : vector<16x384xbf16> to vector<16x32xbf16>
    %40 = vector.extract_strided_slice %32 {offsets = [0, 128], sizes = [16, 32], strides = [1, 1]} : vector<16x384xbf16> to vector<16x32xbf16>
    %41 = vector.extract_strided_slice %32 {offsets = [0, 256], sizes = [16, 32], strides = [1, 1]} : vector<16x384xbf16> to vector<16x32xbf16>
    %cst_17 = arith.constant dense<0.000000e+00> : vector<16x16xf32>
    %42 = tpu.matmul %39, %40, %cst_17 {dimension_numbers = #tpu.dot_dimension_numbers<[1], [1], [0], [0], [0, 0, 1, 0], [], []>} : vector<16x32xbf16>, vector<16x32xbf16>, vector<16x16xf32> -> vector<16x16xf32>
    %cst_18 = arith.constant 0.176776692 : f32
    %43 = vector.broadcast %cst_18 : f32 to vector<16x16xf32>
    %44 = arith.mulf %42, %43 : vector<16x16xf32>
    %45 = arith.addf %44, %38 : vector<16x16xf32>
    %cst_19 = arith.constant dense<0xFF800000> : vector<16xf32>
    %46 = vector.multi_reduction <maximumf>, %45, %cst_19 [1] : vector<16x16xf32> to vector<16xf32>
    %47 = vector.shape_cast %46 : vector<16xf32> to vector<16x1xf32>
    %48 = vector.broadcast %47 : vector<16x1xf32> to vector<16x16xf32>
    %49 = arith.subf %45, %48 : vector<16x16xf32>
    %50 = math.exp %49 : vector<16x16xf32>
    %cst_20 = arith.constant dense<0.000000e+00> : vector<16xf32>
    %51 = vector.multi_reduction <add>, %50, %cst_20 [1] : vector<16x16xf32> to vector<16xf32>
    %52 = vector.shape_cast %51 : vector<16xf32> to vector<16x1xf32>
    %53 = arith.truncf %50 : vector<16x16xf32> to vector<16x16xbf16>
    %cst_21 = arith.constant dense<0.000000e+00> : vector<16x32xf32>
    %54 = tpu.matmul %53, %41, %cst_21 {dimension_numbers = #tpu.dot_dimension_numbers<[1], [0], [0], [1], [0, 0, 1, 1], [], []>} : vector<16x16xbf16>, vector<16x32xbf16>, vector<16x32xf32> -> vector<16x32xf32>
    %55 = tpu.reciprocal %52 {approx = true} : vector<16x1xf32> -> vector<16x1xf32>
    %56 = vector.broadcast %55 : vector<16x1xf32> to vector<16x32xf32>
    %57 = arith.mulf %54, %56 : vector<16x32xf32>
    %58 = arith.truncf %57 : vector<16x32xf32> to vector<16x32xbf16>
    %c0_22 = arith.constant 0 : index
    %c0_23 = arith.constant 0 : index
    %59 = vector.load %arg9[%c0_22, %c0_23] : memref<16x128xbf16, #tpu.memory_space<vmem>>, vector<16x32xbf16>
    tpu.vector_store %arg9[%c0_22, %c0_23], %58 {strides = array<i32>} : memref<16x128xbf16, #tpu.memory_space<vmem>>, vector<16x32xbf16>,
    %60 = vector.extract_strided_slice %32 {offsets = [0, 32], sizes = [16, 32], strides = [1, 1]} : vector<16x384xbf16> to vector<16x32xbf16>
    %61 = vector.extract_strided_slice %32 {offsets = [0, 160], sizes = [16, 32], strides = [1, 1]} : vector<16x384xbf16> to vector<16x32xbf16>
    %62 = vector.extract_strided_slice %32 {offsets = [0, 288], sizes = [16, 32], strides = [1, 1]} : vector<16x384xbf16> to vector<16x32xbf16>
    %cst_24 = arith.constant dense<0.000000e+00> : vector<16x16xf32>
    %63 = tpu.matmul %60, %61, %cst_24 {dimension_numbers = #tpu.dot_dimension_numbers<[1], [1], [0], [0], [0, 0, 1, 0], [], []>} : vector<16x32xbf16>, vector<16x32xbf16>, vector<16x16xf32> -> vector<16x16xf32>
    %cst_25 = arith.constant 0.176776692 : f32
    %64 = vector.broadcast %cst_25 : f32 to vector<16x16xf32>
    %65 = arith.mulf %63, %64 : vector<16x16xf32>
    %66 = arith.addf %65, %38 : vector<16x16xf32>
    %cst_26 = arith.constant dense<0xFF800000> : vector<16xf32>
    %67 = vector.multi_reduction <maximumf>, %66, %cst_26 [1] : vector<16x16xf32> to vector<16xf32>
    %68 = vector.shape_cast %67 : vector<16xf32> to vector<16x1xf32>
    %69 = vector.broadcast %68 : vector<16x1xf32> to vector<16x16xf32>
    %70 = arith.subf %66, %69 : vector<16x16xf32>
    %71 = math.exp %70 : vector<16x16xf32>
    %cst_27 = arith.constant dense<0.000000e+00> : vector<16xf32>
    %72 = vector.multi_reduction <add>, %71, %cst_27 [1] : vector<16x16xf32> to vector<16xf32>
    %73 = vector.shape_cast %72 : vector<16xf32> to vector<16x1xf32>
    %74 = arith.truncf %71 : vector<16x16xf32> to vector<16x16xbf16>
    %cst_28 = arith.constant dense<0.000000e+00> : vector<16x32xf32>
    %75 = tpu.matmul %74, %62, %cst_28 {dimension_numbers = #tpu.dot_dimension_numbers<[1], [0], [0], [1], [0, 0, 1, 1], [], []>} : vector<16x16xbf16>, vector<16x32xbf16>, vector<16x32xf32> -> vector<16x32xf32>
    %76 = tpu.reciprocal %73 {approx = true} : vector<16x1xf32> -> vector<16x1xf32>
    %77 = vector.broadcast %76 : vector<16x1xf32> to vector<16x32xf32>
    %78 = arith.mulf %75, %77 : vector<16x32xf32>
    %79 = arith.truncf %78 : vector<16x32xf32> to vector<16x32xbf16>
    %c0_29 = arith.constant 0 : index
    %c32 = arith.constant 32 : index
    %80 = vector.load %arg9[%c0_29, %c32] : memref<16x128xbf16, #tpu.memory_space<vmem>>, vector<16x32xbf16>
    tpu.vector_store %arg9[%c0_29, %c32], %79 {strides = array<i32>} : memref<16x128xbf16, #tpu.memory_space<vmem>>, vector<16x32xbf16>,
    %81 = vector.extract_strided_slice %32 {offsets = [0, 64], sizes = [16, 32], strides = [1, 1]} : vector<16x384xbf16> to vector<16x32xbf16>
    %82 = vector.extract_strided_slice %32 {offsets = [0, 192], sizes = [16, 32], strides = [1, 1]} : vector<16x384xbf16> to vector<16x32xbf16>
    %83 = vector.extract_strided_slice %32 {offsets = [0, 320], sizes = [16, 32], strides = [1, 1]} : vector<16x384xbf16> to vector<16x32xbf16>
    %cst_30 = arith.constant dense<0.000000e+00> : vector<16x16xf32>
    %84 = tpu.matmul %81, %82, %cst_30 {dimension_numbers = #tpu.dot_dimension_numbers<[1], [1], [0], [0], [0, 0, 1, 0], [], []>} : vector<16x32xbf16>, vector<16x32xbf16>, vector<16x16xf32> -> vector<16x16xf32>
    %cst_31 = arith.constant 0.176776692 : f32
    %85 = vector.broadcast %cst_31 : f32 to vector<16x16xf32>
    %86 = arith.mulf %84, %85 : vector<16x16xf32>
    %87 = arith.addf %86, %38 : vector<16x16xf32>
    %cst_32 = arith.constant dense<0xFF800000> : vector<16xf32>
    %88 = vector.multi_reduction <maximumf>, %87, %cst_32 [1] : vector<16x16xf32> to vector<16xf32>
    %89 = vector.shape_cast %88 : vector<16xf32> to vector<16x1xf32>
    %90 = vector.broadcast %89 : vector<16x1xf32> to vector<16x16xf32>
    %91 = arith.subf %87, %90 : vector<16x16xf32>
    %92 = math.exp %91 : vector<16x16xf32>
    %cst_33 = arith.constant dense<0.000000e+00> : vector<16xf32>
    %93 = vector.multi_reduction <add>, %92, %cst_33 [1] : vector<16x16xf32> to vector<16xf32>
    %94 = vector.shape_cast %93 : vector<16xf32> to vector<16x1xf32>
    %95 = arith.truncf %92 : vector<16x16xf32> to vector<16x16xbf16>
    %cst_34 = arith.constant dense<0.000000e+00> : vector<16x32xf32>
    %96 = tpu.matmul %95, %83, %cst_34 {dimension_numbers = #tpu.dot_dimension_numbers<[1], [0], [0], [1], [0, 0, 1, 1], [], []>} : vector<16x16xbf16>, vector<16x32xbf16>, vector<16x32xf32> -> vector<16x32xf32>
    %97 = tpu.reciprocal %94 {approx = true} : vector<16x1xf32> -> vector<16x1xf32>
    %98 = vector.broadcast %97 : vector<16x1xf32> to vector<16x32xf32>
    %99 = arith.mulf %96, %98 : vector<16x32xf32>
    %100 = arith.truncf %99 : vector<16x32xf32> to vector<16x32xbf16>
    %c0_35 = arith.constant 0 : index
    %c64 = arith.constant 64 : index
    %101 = vector.load %arg9[%c0_35, %c64] : memref<16x128xbf16, #tpu.memory_space<vmem>>, vector<16x32xbf16>
    tpu.vector_store %arg9[%c0_35, %c64], %100 {strides = array<i32>} : memref<16x128xbf16, #tpu.memory_space<vmem>>, vector<16x32xbf16>,
    %102 = vector.extract_strided_slice %32 {offsets = [0, 96], sizes = [16, 32], strides = [1, 1]} : vector<16x384xbf16> to vector<16x32xbf16>
    %103 = vector.extract_strided_slice %32 {offsets = [0, 224], sizes = [16, 32], strides = [1, 1]} : vector<16x384xbf16> to vector<16x32xbf16>
    %104 = vector.extract_strided_slice %32 {offsets = [0, 352], sizes = [16, 32], strides = [1, 1]} : vector<16x384xbf16> to vector<16x32xbf16>
    %cst_36 = arith.constant dense<0.000000e+00> : vector<16x16xf32>
    %105 = tpu.matmul %102, %103, %cst_36 {dimension_numbers = #tpu.dot_dimension_numbers<[1], [1], [0], [0], [0, 0, 1, 0], [], []>} : vector<16x32xbf16>, vector<16x32xbf16>, vector<16x16xf32> -> vector<16x16xf32>
    %cst_37 = arith.constant 0.176776692 : f32
    %106 = vector.broadcast %cst_37 : f32 to vector<16x16xf32>
    %107 = arith.mulf %105, %106 : vector<16x16xf32>
    %108 = arith.addf %107, %38 : vector<16x16xf32>
    %cst_38 = arith.constant dense<0xFF800000> : vector<16xf32>
    %109 = vector.multi_reduction <maximumf>, %108, %cst_38 [1] : vector<16x16xf32> to vector<16xf32>
    %110 = vector.shape_cast %109 : vector<16xf32> to vector<16x1xf32>
    %111 = vector.broadcast %110 : vector<16x1xf32> to vector<16x16xf32>
    %112 = arith.subf %108, %111 : vector<16x16xf32>
    %113 = math.exp %112 : vector<16x16xf32>
    %cst_39 = arith.constant dense<0.000000e+00> : vector<16xf32>
    %114 = vector.multi_reduction <add>, %113, %cst_39 [1] : vector<16x16xf32> to vector<16xf32>
    %115 = vector.shape_cast %114 : vector<16xf32> to vector<16x1xf32>
    %116 = arith.truncf %113 : vector<16x16xf32> to vector<16x16xbf16>
    %cst_40 = arith.constant dense<0.000000e+00> : vector<16x32xf32>
    %117 = tpu.matmul %116, %104, %cst_40 {dimension_numbers = #tpu.dot_dimension_numbers<[1], [0], [0], [1], [0, 0, 1, 1], [], []>} : vector<16x16xbf16>, vector<16x32xbf16>, vector<16x32xf32> -> vector<16x32xf32>
    %118 = tpu.reciprocal %115 {approx = true} : vector<16x1xf32> -> vector<16x1xf32>
    %119 = vector.broadcast %118 : vector<16x1xf32> to vector<16x32xf32>
    %120 = arith.mulf %117, %119 : vector<16x32xf32>
    %121 = arith.truncf %120 : vector<16x32xf32> to vector<16x32xbf16>
    %c0_41 = arith.constant 0 : index
    %c96 = arith.constant 96 : index
    %122 = vector.load %arg9[%c0_41, %c96] : memref<16x128xbf16, #tpu.memory_space<vmem>>, vector<16x32xbf16>
    tpu.vector_store %arg9[%c0_41, %c96], %121 {strides = array<i32>} : memref<16x128xbf16, #tpu.memory_space<vmem>>, vector<16x32xbf16>,
    %c0_42 = arith.constant 0 : index
    %c0_43 = arith.constant 0 : index
    %123 = vector.load %arg9[%c0_42, %c0_43] : memref<16x128xbf16, #tpu.memory_space<vmem>>, vector<16x128xbf16>
    %c0_44 = arith.constant 0 : index
    %c0_45 = arith.constant 0 : index
    %124 = vector.load %arg6[%c0_44, %c0_45] : memref<128x128xbf16, #tpu.memory_space<vmem>>, vector<128x128xbf16>
    %cst_46 = arith.constant dense<0.000000e+00> : vector<16x128xf32>
    %125 = tpu.matmul %123, %124, %cst_46 {dimension_numbers = #tpu.dot_dimension_numbers<[1], [0], [0], [1], [0, 0, 1, 1], [], []>} : vector<16x128xbf16>, vector<128x128xbf16>, vector<16x128xf32> -> vector<16x128xf32>
    %c0_47 = arith.constant 0 : index
    %c0_48 = arith.constant 0 : index
    %126 = vector.load %arg7[%c0_47, %c0_48] : memref<1x128xf32, #tpu.memory_space<vmem>>, vector<1x128xf32>
    %127 = vector.broadcast %126 : vector<1x128xf32> to vector<16x128xf32>
    %128 = arith.addf %125, %127 : vector<16x128xf32>
    %129 = arith.addf %1, %128 : vector<16x128xf32>
    %c0_49 = arith.constant 0 : index
    %c0_50 = arith.constant 0 : index
    %c0_51 = arith.constant 0 : index
    %130 = vector.load %arg8[%c0_49, %c0_50, %c0_51] : memref<1x16x128xf32, #tpu.memory_space<vmem>>, vector<1x16x128xf32>
    %131 = vector.shape_cast %130 : vector<1x16x128xf32> to vector<16x128xf32>
    %132 = vector.shape_cast %129 : vector<16x128xf32> to vector<1x16x128xf32>
    tpu.vector_store %arg8[%c0_49, %c0_50, %c0_51], %132 {strides = array<i32>} : memref<1x16x128xf32, #tpu.memory_space<vmem>>, vector<1x16x128xf32>,
    return
  }
  func.func @transform_0(%arg0: i32) -> (i32, i32, i32) {
    %c0_i32 = arith.constant 0 : i32
    %c0_i32_0 = arith.constant 0 : i32
    %c0_i32_1 = arith.constant 0 : i32
    return %arg0, %c0_i32, %c0_i32_0 : i32, i32, i32
  }
  func.func @transform_1(%arg0: i32) -> (i32, i32) {
    %c0_i32 = arith.constant 0 : i32
    %c0_i32_0 = arith.constant 0 : i32
    %c0_i32_1 = arith.constant 0 : i32
    return %c0_i32, %c0_i32_0 : i32, i32
  }
  func.func @transform_2(%arg0: i32) -> (i32, i32) {
    %c0_i32 = arith.constant 0 : i32
    %c0_i32_0 = arith.constant 0 : i32
    %c0_i32_1 = arith.constant 0 : i32
    return %c0_i32, %c0_i32_0 : i32, i32
  }
  func.func @transform_3(%arg0: i32) -> (i32, i32) {
    %c0_i32 = arith.constant 0 : i32
    %c0_i32_0 = arith.constant 0 : i32
    %c0_i32_1 = arith.constant 0 : i32
    return %c0_i32, %c0_i32_0 : i32, i32
  }
  func.func @transform_4(%arg0: i32) -> (i32, i32) {
    %c0_i32 = arith.constant 0 : i32
    %c0_i32_0 = arith.constant 0 : i32
    %c0_i32_1 = arith.constant 0 : i32
    return %c0_i32, %c0_i32_0 : i32, i32
  }
  func.func @transform_5(%arg0: i32) -> (i32, i32) {
    %c0_i32 = arith.constant 0 : i32
    %c0_i32_0 = arith.constant 0 : i32
    %c0_i32_1 = arith.constant 0 : i32
    return %c0_i32, %c0_i32_0 : i32, i32
  }
  func.func @transform_6(%arg0: i32) -> (i32, i32) {
    %c0_i32 = arith.constant 0 : i32
    %c0_i32_0 = arith.constant 0 : i32
    %c0_i32_1 = arith.constant 0 : i32
    return %c0_i32, %c0_i32_0 : i32, i32
  }
  func.func @transform_7(%arg0: i32) -> (i32, i32, i32) {
    %c0_i32 = arith.constant 0 : i32
    %c0_i32_0 = arith.constant 0 : i32
    %c0_i32_1 = arith.constant 0 : i32
    return %arg0, %c0_i32, %c0_i32_0 : i32, i32, i32
  }
}

module attributes {stable_mosaic.version = 11 : i64} {
  func.func @_mlp_block_kernel(%arg0: i32, %arg1: i32, %arg2: memref<16x128xf32, #tpu.memory_space<vmem>>, %arg3: memref<1x128xf32, #tpu.memory_space<vmem>>, %arg4: memref<1x128xf32, #tpu.memory_space<vmem>>, %arg5: memref<128x512xbf16, #tpu.memory_space<vmem>>, %arg6: memref<1x512xf32, #tpu.memory_space<vmem>>, %arg7: memref<512x128xbf16, #tpu.memory_space<vmem>>, %arg8: memref<1x128xf32, #tpu.memory_space<vmem>>, %arg9: memref<16x128xf32, #tpu.memory_space<vmem>>, %arg10: memref<16x128xbf16, #tpu.memory_space<vmem>>, %arg11: memref<16x128xf32, #tpu.memory_space<vmem>>) attributes {dimension_semantics = [#tpu.dimension_semantics<parallel>, #tpu.dimension_semantics<arbitrary>], iteration_bounds = array<i64: 2, 1>, scalar_prefetch = 0 : i64, scratch_operands = 2 : i64, tpu.core_type = #tpu.core_type<tc>, window_params = [{transform_indices = @transform_0, window_bounds = array<i64: 16, 128>}, {pipeline_mode = #tpu.pipeline_mode<synchronous>, transform_indices = @transform_1, window_bounds = array<i64: 1, 128>}, {pipeline_mode = #tpu.pipeline_mode<synchronous>, transform_indices = @transform_2, window_bounds = array<i64: 1, 128>}, {transform_indices = @transform_3, window_bounds = array<i64: 128, 512>}, {transform_indices = @transform_4, window_bounds = array<i64: 1, 512>}, {transform_indices = @transform_5, window_bounds = array<i64: 512, 128>}, {pipeline_mode = #tpu.pipeline_mode<synchronous>, transform_indices = @transform_6, window_bounds = array<i64: 1, 128>}, {transform_indices = @transform_7, window_bounds = array<i64: 16, 128>}]} {
    %c0_i32 = arith.constant 0 : i32
    %0 = arith.cmpi eq, %arg1, %c0_i32 : i32
    %1 = arith.extui %0 : i1 to i32
    %c0_i32_0 = arith.constant 0 : i32
    %2 = arith.cmpi ne, %1, %c0_i32_0 : i32
    scf.if %2 {
      %c0_19 = arith.constant 0 : index
      %c0_20 = arith.constant 0 : index
      %31 = vector.load %arg2[%c0_19, %c0_20] : memref<16x128xf32, #tpu.memory_space<vmem>>, vector<16x128xf32>
      %c0_21 = arith.constant 0 : index
      %c0_22 = arith.constant 0 : index
      %32 = vector.load %arg3[%c0_21, %c0_22] : memref<1x128xf32, #tpu.memory_space<vmem>>, vector<1x128xf32>
      %c0_23 = arith.constant 0 : index
      %c0_24 = arith.constant 0 : index
      %33 = vector.load %arg4[%c0_23, %c0_24] : memref<1x128xf32, #tpu.memory_space<vmem>>, vector<1x128xf32>
      %cst_25 = arith.constant dense<0.000000e+00> : vector<16xf32>
      %34 = vector.multi_reduction <add>, %31, %cst_25 [1] : vector<16x128xf32> to vector<16xf32>
      %35 = vector.shape_cast %34 : vector<16xf32> to vector<16x1xf32>
      %cst_26 = arith.constant 1.280000e+02 : f32
      %36 = vector.broadcast %cst_26 : f32 to vector<16x1xf32>
      %37 = arith.divf %35, %36 : vector<16x1xf32>
      %38 = vector.broadcast %37 : vector<16x1xf32> to vector<16x128xf32>
      %39 = arith.subf %31, %38 : vector<16x128xf32>
      %40 = arith.mulf %39, %39 : vector<16x128xf32>
      %cst_27 = arith.constant dense<0.000000e+00> : vector<16xf32>
      %41 = vector.multi_reduction <add>, %40, %cst_27 [1] : vector<16x128xf32> to vector<16xf32>
      %42 = vector.shape_cast %41 : vector<16xf32> to vector<16x1xf32>
      %cst_28 = arith.constant 1.280000e+02 : f32
      %43 = vector.broadcast %cst_28 : f32 to vector<16x1xf32>
      %44 = arith.divf %42, %43 : vector<16x1xf32>
      %45 = vector.broadcast %37 : vector<16x1xf32> to vector<16x128xf32>
      %46 = arith.subf %31, %45 : vector<16x128xf32>
      %cst_29 = arith.constant 9.99999974E-6 : f32
      %47 = vector.broadcast %cst_29 : f32 to vector<16x1xf32>
      %48 = arith.addf %44, %47 : vector<16x1xf32>
      %49 = math.rsqrt %48 : vector<16x1xf32>
      %50 = vector.broadcast %49 : vector<16x1xf32> to vector<16x128xf32>
      %51 = arith.mulf %46, %50 : vector<16x128xf32>
      %52 = vector.broadcast %32 : vector<1x128xf32> to vector<16x128xf32>
      %53 = arith.mulf %51, %52 : vector<16x128xf32>
      %54 = vector.broadcast %33 : vector<1x128xf32> to vector<16x128xf32>
      %55 = arith.addf %53, %54 : vector<16x128xf32>
      %56 = arith.truncf %55 : vector<16x128xf32> to vector<16x128xbf16>
      %c0_30 = arith.constant 0 : index
      %c0_31 = arith.constant 0 : index
      %57 = vector.load %arg10[%c0_30, %c0_31] : memref<16x128xbf16, #tpu.memory_space<vmem>>, vector<16x128xbf16>
      tpu.vector_store %arg10[%c0_30, %c0_31], %56 {strides = array<i32>} : memref<16x128xbf16, #tpu.memory_space<vmem>>, vector<16x128xbf16>,
      %cst_32 = arith.constant 0.000000e+00 : f32
      %58 = vector.broadcast %cst_32 : f32 to vector<16x128xf32>
      %c0_33 = arith.constant 0 : index
      %c0_34 = arith.constant 0 : index
      %59 = vector.load %arg11[%c0_33, %c0_34] : memref<16x128xf32, #tpu.memory_space<vmem>>, vector<16x128xf32>
      tpu.vector_store %arg11[%c0_33, %c0_34], %58 {strides = array<i32>} : memref<16x128xf32, #tpu.memory_space<vmem>>, vector<16x128xf32>,
    } else {
    }
    %c0 = arith.constant 0 : index
    %c0_1 = arith.constant 0 : index
    %3 = vector.load %arg10[%c0, %c0_1] : memref<16x128xbf16, #tpu.memory_space<vmem>>, vector<16x128xbf16>
    %c0_2 = arith.constant 0 : index
    %c0_3 = arith.constant 0 : index
    %4 = vector.load %arg5[%c0_2, %c0_3] : memref<128x512xbf16, #tpu.memory_space<vmem>>, vector<128x512xbf16>
    %cst = arith.constant dense<0.000000e+00> : vector<16x512xf32>
    %5 = tpu.matmul %3, %4, %cst {dimension_numbers = #tpu.dot_dimension_numbers<[1], [0], [0], [1], [0, 0, 1, 1], [], []>} : vector<16x128xbf16>, vector<128x512xbf16>, vector<16x512xf32> -> vector<16x512xf32>
    %c0_4 = arith.constant 0 : index
    %c0_5 = arith.constant 0 : index
    %6 = vector.load %arg6[%c0_4, %c0_5] : memref<1x512xf32, #tpu.memory_space<vmem>>, vector<1x512xf32>
    %7 = vector.broadcast %6 : vector<1x512xf32> to vector<16x512xf32>
    %8 = arith.addf %5, %7 : vector<16x512xf32>
    %cst_6 = arith.constant 5.000000e-01 : f32
    %9 = vector.broadcast %cst_6 : f32 to vector<16x512xf32>
    %10 = arith.mulf %9, %8 : vector<16x512xf32>
    %cst_7 = arith.constant 4.471500e-02 : f32
    %11 = vector.broadcast %cst_7 : f32 to vector<16x512xf32>
    %12 = arith.mulf %11, %8 : vector<16x512xf32>
    %13 = arith.mulf %12, %8 : vector<16x512xf32>
    %14 = arith.mulf %13, %8 : vector<16x512xf32>
    %15 = arith.addf %8, %14 : vector<16x512xf32>
    %cst_8 = arith.constant 0.797884583 : f32
    %16 = vector.broadcast %cst_8 : f32 to vector<16x512xf32>
    %17 = arith.mulf %16, %15 : vector<16x512xf32>
    %18 = math.tanh %17 : vector<16x512xf32>
    %cst_9 = arith.constant 1.000000e+00 : f32
    %19 = vector.broadcast %cst_9 : f32 to vector<16x512xf32>
    %20 = arith.addf %19, %18 : vector<16x512xf32>
    %21 = arith.mulf %10, %20 : vector<16x512xf32>
    %22 = arith.truncf %21 : vector<16x512xf32> to vector<16x512xbf16>
    %c0_10 = arith.constant 0 : index
    %c0_11 = arith.constant 0 : index
    %23 = vector.load %arg11[%c0_10, %c0_11] : memref<16x128xf32, #tpu.memory_space<vmem>>, vector<16x128xf32>
    %c0_12 = arith.constant 0 : index
    %c0_13 = arith.constant 0 : index
    %24 = vector.load %arg7[%c0_12, %c0_13] : memref<512x128xbf16, #tpu.memory_space<vmem>>, vector<512x128xbf16>
    %cst_14 = arith.constant dense<0.000000e+00> : vector<16x128xf32>
    %25 = tpu.matmul %22, %24, %cst_14 {dimension_numbers = #tpu.dot_dimension_numbers<[1], [0], [0], [1], [0, 0, 1, 1], [], []>} : vector<16x512xbf16>, vector<512x128xbf16>, vector<16x128xf32> -> vector<16x128xf32>
    %26 = arith.addf %23, %25 : vector<16x128xf32>
    %c0_15 = arith.constant 0 : index
    %c0_16 = arith.constant 0 : index
    %27 = vector.load %arg11[%c0_15, %c0_16] : memref<16x128xf32, #tpu.memory_space<vmem>>, vector<16x128xf32>
    tpu.vector_store %arg11[%c0_15, %c0_16], %26 {strides = array<i32>} : memref<16x128xf32, #tpu.memory_space<vmem>>, vector<16x128xf32>,
    %c0_i32_17 = arith.constant 0 : i32
    %28 = arith.cmpi eq, %arg1, %c0_i32_17 : i32
    %29 = arith.extui %28 : i1 to i32
    %c0_i32_18 = arith.constant 0 : i32
    %30 = arith.cmpi ne, %29, %c0_i32_18 : i32
    scf.if %30 {
      %c0_19 = arith.constant 0 : index
      %c0_20 = arith.constant 0 : index
      %31 = vector.load %arg2[%c0_19, %c0_20] : memref<16x128xf32, #tpu.memory_space<vmem>>, vector<16x128xf32>
      %c0_21 = arith.constant 0 : index
      %c0_22 = arith.constant 0 : index
      %32 = vector.load %arg11[%c0_21, %c0_22] : memref<16x128xf32, #tpu.memory_space<vmem>>, vector<16x128xf32>
      %c0_23 = arith.constant 0 : index
      %c0_24 = arith.constant 0 : index
      %33 = vector.load %arg8[%c0_23, %c0_24] : memref<1x128xf32, #tpu.memory_space<vmem>>, vector<1x128xf32>
      %34 = vector.broadcast %33 : vector<1x128xf32> to vector<16x128xf32>
      %35 = arith.addf %32, %34 : vector<16x128xf32>
      %36 = arith.addf %31, %35 : vector<16x128xf32>
      %c0_25 = arith.constant 0 : index
      %c0_26 = arith.constant 0 : index
      %37 = vector.load %arg9[%c0_25, %c0_26] : memref<16x128xf32, #tpu.memory_space<vmem>>, vector<16x128xf32>
      tpu.vector_store %arg9[%c0_25, %c0_26], %36 {strides = array<i32>} : memref<16x128xf32, #tpu.memory_space<vmem>>, vector<16x128xf32>,
    } else {
    }
    return
  }
  func.func @transform_0(%arg0: i32, %arg1: i32) -> (i32, i32) {
    %c0_i32 = arith.constant 0 : i32
    %c0_i32_0 = arith.constant 0 : i32
    return %arg0, %c0_i32 : i32, i32
  }
  func.func @transform_1(%arg0: i32, %arg1: i32) -> (i32, i32) {
    %c0_i32 = arith.constant 0 : i32
    %c0_i32_0 = arith.constant 0 : i32
    %c0_i32_1 = arith.constant 0 : i32
    return %c0_i32, %c0_i32_0 : i32, i32
  }
  func.func @transform_2(%arg0: i32, %arg1: i32) -> (i32, i32) {
    %c0_i32 = arith.constant 0 : i32
    %c0_i32_0 = arith.constant 0 : i32
    %c0_i32_1 = arith.constant 0 : i32
    return %c0_i32, %c0_i32_0 : i32, i32
  }
  func.func @transform_3(%arg0: i32, %arg1: i32) -> (i32, i32) {
    %c0_i32 = arith.constant 0 : i32
    %c0_i32_0 = arith.constant 0 : i32
    return %c0_i32, %arg1 : i32, i32
  }
  func.func @transform_4(%arg0: i32, %arg1: i32) -> (i32, i32) {
    %c0_i32 = arith.constant 0 : i32
    %c0_i32_0 = arith.constant 0 : i32
    return %c0_i32, %arg1 : i32, i32
  }
  func.func @transform_5(%arg0: i32, %arg1: i32) -> (i32, i32) {
    %c0_i32 = arith.constant 0 : i32
    %c0_i32_0 = arith.constant 0 : i32
    return %arg1, %c0_i32 : i32, i32
  }
  func.func @transform_6(%arg0: i32, %arg1: i32) -> (i32, i32) {
    %c0_i32 = arith.constant 0 : i32
    %c0_i32_0 = arith.constant 0 : i32
    %c0_i32_1 = arith.constant 0 : i32
    return %c0_i32, %c0_i32_0 : i32, i32
  }
  func.func @transform_7(%arg0: i32, %arg1: i32) -> (i32, i32) {
    %c0_i32 = arith.constant 0 : i32
    %c0_i32_0 = arith.constant 0 : i32
    return %arg0, %c0_i32 : i32, i32
  }
}

module attributes {stable_mosaic.version = 11 : i64} {
  func.func @_lnf_logits_kernel(%arg0: i32, %arg1: i32, %arg2: memref<16x128xf32, #tpu.memory_space<vmem>>, %arg3: memref<1x128xf32, #tpu.memory_space<vmem>>, %arg4: memref<1x128xf32, #tpu.memory_space<vmem>>, %arg5: memref<128x256xbf16, #tpu.memory_space<vmem>>, %arg6: memref<16x256xf32, #tpu.memory_space<vmem>>, %arg7: memref<16x128xbf16, #tpu.memory_space<vmem>>) attributes {dimension_semantics = [#tpu.dimension_semantics<parallel>, #tpu.dimension_semantics<arbitrary>], iteration_bounds = array<i64: 2, 1>, scalar_prefetch = 0 : i64, scratch_operands = 1 : i64, tpu.core_type = #tpu.core_type<tc>, window_params = [{transform_indices = @transform_0, window_bounds = array<i64: 16, 128>}, {pipeline_mode = #tpu.pipeline_mode<synchronous>, transform_indices = @transform_1, window_bounds = array<i64: 1, 128>}, {pipeline_mode = #tpu.pipeline_mode<synchronous>, transform_indices = @transform_2, window_bounds = array<i64: 1, 128>}, {transform_indices = @transform_3, window_bounds = array<i64: 128, 256>}, {transform_indices = @transform_4, window_bounds = array<i64: 16, 256>}]} {
    %c0_i32 = arith.constant 0 : i32
    %0 = arith.cmpi eq, %arg1, %c0_i32 : i32
    %1 = arith.extui %0 : i1 to i32
    %c0_i32_0 = arith.constant 0 : i32
    %2 = arith.cmpi ne, %1, %c0_i32_0 : i32
    scf.if %2 {
      %c0_6 = arith.constant 0 : index
      %c0_7 = arith.constant 0 : index
      %7 = vector.load %arg2[%c0_6, %c0_7] : memref<16x128xf32, #tpu.memory_space<vmem>>, vector<16x128xf32>
      %c0_8 = arith.constant 0 : index
      %c0_9 = arith.constant 0 : index
      %8 = vector.load %arg3[%c0_8, %c0_9] : memref<1x128xf32, #tpu.memory_space<vmem>>, vector<1x128xf32>
      %c0_10 = arith.constant 0 : index
      %c0_11 = arith.constant 0 : index
      %9 = vector.load %arg4[%c0_10, %c0_11] : memref<1x128xf32, #tpu.memory_space<vmem>>, vector<1x128xf32>
      %cst_12 = arith.constant dense<0.000000e+00> : vector<16xf32>
      %10 = vector.multi_reduction <add>, %7, %cst_12 [1] : vector<16x128xf32> to vector<16xf32>
      %11 = vector.shape_cast %10 : vector<16xf32> to vector<16x1xf32>
      %cst_13 = arith.constant 1.280000e+02 : f32
      %12 = vector.broadcast %cst_13 : f32 to vector<16x1xf32>
      %13 = arith.divf %11, %12 : vector<16x1xf32>
      %14 = vector.broadcast %13 : vector<16x1xf32> to vector<16x128xf32>
      %15 = arith.subf %7, %14 : vector<16x128xf32>
      %16 = arith.mulf %15, %15 : vector<16x128xf32>
      %cst_14 = arith.constant dense<0.000000e+00> : vector<16xf32>
      %17 = vector.multi_reduction <add>, %16, %cst_14 [1] : vector<16x128xf32> to vector<16xf32>
      %18 = vector.shape_cast %17 : vector<16xf32> to vector<16x1xf32>
      %cst_15 = arith.constant 1.280000e+02 : f32
      %19 = vector.broadcast %cst_15 : f32 to vector<16x1xf32>
      %20 = arith.divf %18, %19 : vector<16x1xf32>
      %21 = vector.broadcast %13 : vector<16x1xf32> to vector<16x128xf32>
      %22 = arith.subf %7, %21 : vector<16x128xf32>
      %cst_16 = arith.constant 9.99999974E-6 : f32
      %23 = vector.broadcast %cst_16 : f32 to vector<16x1xf32>
      %24 = arith.addf %20, %23 : vector<16x1xf32>
      %25 = math.rsqrt %24 : vector<16x1xf32>
      %26 = vector.broadcast %25 : vector<16x1xf32> to vector<16x128xf32>
      %27 = arith.mulf %22, %26 : vector<16x128xf32>
      %28 = vector.broadcast %8 : vector<1x128xf32> to vector<16x128xf32>
      %29 = arith.mulf %27, %28 : vector<16x128xf32>
      %30 = vector.broadcast %9 : vector<1x128xf32> to vector<16x128xf32>
      %31 = arith.addf %29, %30 : vector<16x128xf32>
      %32 = arith.truncf %31 : vector<16x128xf32> to vector<16x128xbf16>
      %c0_17 = arith.constant 0 : index
      %c0_18 = arith.constant 0 : index
      %33 = vector.load %arg7[%c0_17, %c0_18] : memref<16x128xbf16, #tpu.memory_space<vmem>>, vector<16x128xbf16>
      tpu.vector_store %arg7[%c0_17, %c0_18], %32 {strides = array<i32>} : memref<16x128xbf16, #tpu.memory_space<vmem>>, vector<16x128xbf16>,
    } else {
    }
    %c0 = arith.constant 0 : index
    %c0_1 = arith.constant 0 : index
    %3 = vector.load %arg7[%c0, %c0_1] : memref<16x128xbf16, #tpu.memory_space<vmem>>, vector<16x128xbf16>
    %c0_2 = arith.constant 0 : index
    %c0_3 = arith.constant 0 : index
    %4 = vector.load %arg5[%c0_2, %c0_3] : memref<128x256xbf16, #tpu.memory_space<vmem>>, vector<128x256xbf16>
    %cst = arith.constant dense<0.000000e+00> : vector<16x256xf32>
    %5 = tpu.matmul %3, %4, %cst {dimension_numbers = #tpu.dot_dimension_numbers<[1], [0], [0], [1], [0, 0, 1, 1], [], []>} : vector<16x128xbf16>, vector<128x256xbf16>, vector<16x256xf32> -> vector<16x256xf32>
    %c0_4 = arith.constant 0 : index
    %c0_5 = arith.constant 0 : index
    %6 = vector.load %arg6[%c0_4, %c0_5] : memref<16x256xf32, #tpu.memory_space<vmem>>, vector<16x256xf32>
    tpu.vector_store %arg6[%c0_4, %c0_5], %5 {strides = array<i32>} : memref<16x256xf32, #tpu.memory_space<vmem>>, vector<16x256xf32>,
    return
  }
  func.func @transform_0(%arg0: i32, %arg1: i32) -> (i32, i32) {
    %c0_i32 = arith.constant 0 : i32
    %c0_i32_0 = arith.constant 0 : i32
    return %arg0, %c0_i32 : i32, i32
  }
  func.func @transform_1(%arg0: i32, %arg1: i32) -> (i32, i32) {
    %c0_i32 = arith.constant 0 : i32
    %c0_i32_0 = arith.constant 0 : i32
    %c0_i32_1 = arith.constant 0 : i32
    return %c0_i32, %c0_i32_0 : i32, i32
  }
  func.func @transform_2(%arg0: i32, %arg1: i32) -> (i32, i32) {
    %c0_i32 = arith.constant 0 : i32
    %c0_i32_0 = arith.constant 0 : i32
    %c0_i32_1 = arith.constant 0 : i32
    return %c0_i32, %c0_i32_0 : i32, i32
  }
  func.func @transform_3(%arg0: i32, %arg1: i32) -> (i32, i32) {
    %c0_i32 = arith.constant 0 : i32
    %c0_i32_0 = arith.constant 0 : i32
    return %c0_i32, %arg1 : i32, i32
  }
  func.func @transform_4(%arg0: i32, %arg1: i32) -> (i32, i32) {
    %c0_i32 = arith.constant 0 : i32
    return %arg0, %arg1 : i32, i32
  }
}

</mosaic_0001>

<llo_original>
// kernel: _lambda_.6
$region0: #{_lambda_.6}
  #allocation0 [shape = 'u32[]', space=smem, size = 0x4, offset = 0x4, fixed_abs, tag = 'smem constant byte address 0x4 - core index']
  #allocation1 [shape = 'u32[72,128]{1,0:T(1,128)}', space=vmem, size = 0x9000, scoped, tag = 'internal scratch']
  #allocation2 [shape = 'bf16[16,128]{1,0:T(8,128)(2,1)}', space=vmem, size = 0x1000, scoped, tag = 'scratch operand']
  #allocation3 [shape = 'f32[16,128]{1,0:T(8,128)}', space=vmem, size = 0x2000, scoped, tag = 'scratch operand']
  %s0 = inlined_call_operand.vmem [shape: f32[32,128], index: 0, kind: input, shape index: {}]
  %s1 = inlined_call_operand.vmem [shape: f32[1,128], index: 1, kind: input, shape index: {}]
  %s2 = inlined_call_operand.vmem [shape: f32[1,128], index: 2, kind: input, shape index: {}]
  %s3 = inlined_call_operand.vmem [shape: bf16[128,512], index: 3, kind: input, shape index: {}]
  %s4 = inlined_call_operand.vmem [shape: f32[1,512], index: 4, kind: input, shape index: {}]
  %s5 = inlined_call_operand.hbm [shape: bf16[512,128], index: 5, kind: input, shape index: {}]
  %s6 = inlined_call_operand.vmem [shape: f32[1,128], index: 6, kind: input, shape index: {}]
  %s7 = inlined_call_operand.vmem [shape: f32[32,128], index: 7, kind: output, shape index: {}]
  %s8 = sld [smem:[#allocation0]]
  $region73: #{_lambda_.6} parent=0
    _
  %s10 = ssub.s32 1, %s8
  %s11 = scalar_select 0, %s10, %s8
  $region1: #{_lambda_.6} parent=0
    #allocation4 [shape = 'u8[131072]{0}', space=vmem, size = 0x20000, scoped, tag = 'input window, operand 5, single buffered']
    #allocation5 [shape = 's32[2]{0}', space=sflag, size = 0x8, scoped, tag = 'scoped memory for _lambda_.6']
    %12 = vsyncpa [#allocation5], 0
    loop: start=0, step=1, limit=4
    $region2: #{_lambda_.6} parent=1 // loop_pre_header
      _
    $region3: #{_lambda_.6} parent=1 // loop_header
      %s14 = sphi 0, %s18
      %p15 = scmp.ge.s32.totalorder %s14, 4
      %s21 = sphi 0, %s33
      %s22 = sphi 0, %s29
      %s23 = sphi 0, %s21
      %s24 = sphi 0, %s22
      %s25 = sphi 0, %s23
      %s26 = sphi 0, %s24
      %s36 = sphi 0, %s38
      %s39 = sphi 0, %s36
      %s40 = sphi 0, %s39
      %s56 = sphi 0, %s40
      %s60 = sphi 0, %s60
      %s62 = sphi 0, %s60
      %s63 = sphi 0, %s62
      %s77 = sphi 0, %s63
      %s81 = sphi 0, %s81
      %s83 = sphi 0, %s81
      %s84 = sphi 0, %s83
      %s98 = sphi 0, %s84
      %s104 = sphi 0, %s106
      %s107 = sphi 0, %s104
      %s108 = sphi 0, %s107
      %s124 = sphi 0, %s108
      %s130 = sphi 0, %s132
      %s133 = sphi 0, %s130
      %s134 = sphi 0, %s133
      %s150 = sphi 0, %s134
      %s156 = sphi 0, %s158
      %s159 = sphi 0, %s156
      %s160 = sphi 0, %s159
      %s176 = sphi 0, %s160
      %s180 = sphi 0, %s180
      %s182 = sphi 0, %s180
      %s183 = sphi 0, %s182
      %s197 = sphi 0, %s183
      %s203 = sphi 0, %s205
      %s206 = sphi 0, %s203
      %s207 = sphi 0, %s206
      %s223 = sphi 0, %s207
    $region4: #{_lambda_.6} parent=1 // loop_header_branch
      %17 = sbr.rel (%p15) target = $region8
    $region5: #{_lambda_.6} parent=1 // loop_body
      %s19 = ssub.s32 %s14, 1
      %s20 = ssub.s32 %s14, 2
      %s27 = sadd.s32 1, %s22
      %p28 = scmp.ge.s32.totalorder %s27, 1
      %s29 = scalar_select %p28, 0, %s27
      %s30 = sadd.s32 1, %s21
      %s31 = scalar_select %p28, %s30, %s21
      %p32 = scmp.ge.s32.totalorder %s31, 2
      %s33 = scalar_select %p32, 0, %s31
      %s34 = ssub.s32 %s21, %s33
      %p35 = scmp.eq.s32.totalorder %s34, 0
      %s37 = sadd.s32 %s36, 1
      %s38 = scalar_select %p35, %s36, %s37
      %p41 = pneg %p35
      %p42 = scmp.eq.s32.totalorder %s14, 1
      %p43 = por %p41, %p42
      %p44 = scmp.ne.s32.totalorder %s36, %s39
      %p45 = scmp.eq.s32.totalorder %s14, 0
      %p46 = por %p44, %p45
      %p47 = scmp.ne.s32.totalorder %s36, %s39
      %p48 = scmp.eq.s32.totalorder %s19, 1
      %p49 = por %p47, %p48
      %p50 = scmp.ne.s32.totalorder %s39, %s40
      %p51 = scmp.eq.s32.totalorder %s19, 0
      %p52 = por %p50, %p51
      %p53 = scmp.ne.s32.totalorder %s39, %s40
      %p54 = scmp.eq.s32.totalorder %s20, 1
      %p55 = por %p53, %p54
      %p57 = scmp.ne.s32.totalorder %s40, %s56
      %p58 = scmp.eq.s32.totalorder %s20, 0
      %p59 = por %p57, %p58
      %s61 = sadd.s32 %s60, 1
      %p64 = scmp.eq.s32.totalorder %s14, 1
      %p65 = scmp.ne.s32.totalorder %s60, %s62
      %p66 = scmp.eq.s32.totalorder %s14, 0
      %p67 = por %p65, %p66
      %p68 = scmp.ne.s32.totalorder %s60, %s62
      %p69 = scmp.eq.s32.totalorder %s19, 1
      %p70 = por %p68, %p69
      %p71 = scmp.ne.s32.totalorder %s62, %s63
      %p72 = scmp.eq.s32.totalorder %s19, 0
      %p73 = por %p71, %p72
      %p74 = scmp.ne.s32.totalorder %s62, %s63
      %p75 = scmp.eq.s32.totalorder %s20, 1
      %p76 = por %p74, %p75
      %p78 = scmp.ne.s32.totalorder %s63, %s77
      %p79 = scmp.eq.s32.totalorder %s20, 0
      %p80 = por %p78, %p79
      %s82 = sadd.s32 %s81, 1
      %p85 = scmp.eq.s32.totalorder %s14, 1
      %p86 = scmp.ne.s32.totalorder %s81, %s83
      %p87 = scmp.eq.s32.totalorder %s14, 0
      %p88 = por %p86, %p87
      %p89 = scmp.ne.s32.totalorder %s81, %s83
      %p90 = scmp.eq.s32.totalorder %s19, 1
      %p91 = por %p89, %p90
      %p92 = scmp.ne.s32.totalorder %s83, %s84
      %p93 = scmp.eq.s32.totalorder %s19, 0
      %p94 = por %p92, %p93
      %p95 = scmp.ne.s32.totalorder %s83, %s84
      %p96 = scmp.eq.s32.totalorder %s20, 1
      %p97 = por %p95, %p96
      %p99 = scmp.ne.s32.totalorder %s84, %s98
      %p100 = scmp.eq.s32.totalorder %s20, 0
      %p101 = por %p99, %p100
      %s102 = ssub.s32 %s22, %s29
      %p103 = scmp.eq.s32.totalorder %s102, 0
      %s105 = sadd.s32 %s104, 1
      %s106 = scalar_select %p103, %s104, %s105
      %p109 = pneg %p103
      %p110 = scmp.eq.s32.totalorder %s14, 1
      %p111 = por %p109, %p110
      %p112 = scmp.ne.s32.totalorder %s104, %s107
      %p113 = scmp.eq.s32.totalorder %s14, 0
      %p114 = por %p112, %p113
      %p115 = scmp.ne.s32.totalorder %s104, %s107
      %p116 = scmp.eq.s32.totalorder %s19, 1
      %p117 = por %p115, %p116
      %p118 = scmp.ne.s32.totalorder %s107, %s108
      %p119 = scmp.eq.s32.totalorder %s19, 0
      %p120 = por %p118, %p119
      %p121 = scmp.ne.s32.totalorder %s107, %s108
      %p122 = scmp.eq.s32.totalorder %s20, 1
      %p123 = por %p121, %p122
      %p125 = scmp.ne.s32.totalorder %s108, %s124
      %p126 = scmp.eq.s32.totalorder %s20, 0
      %p127 = por %p125, %p126
      %s128 = ssub.s32 %s22, %s29
      %p129 = scmp.eq.s32.totalorder %s128, 0
      %s131 = sadd.s32 %s130, 1
      %s132 = scalar_select %p129, %s130, %s131
      %p135 = pneg %p129
      %p136 = scmp.eq.s32.totalorder %s14, 1
      %p137 = por %p135, %p136
      %p138 = scmp.ne.s32.totalorder %s130, %s133
      %p139 = scmp.eq.s32.totalorder %s14, 0
      %p140 = por %p138, %p139
      %p141 = scmp.ne.s32.totalorder %s130, %s133
      %p142 = scmp.eq.s32.totalorder %s19, 1
      %p143 = por %p141, %p142
      %p144 = scmp.ne.s32.totalorder %s133, %s134
      %p145 = scmp.eq.s32.totalorder %s19, 0
      %p146 = por %p144, %p145
      %p147 = scmp.ne.s32.totalorder %s133, %s134
      %p148 = scmp.eq.s32.totalorder %s20, 1
      %p149 = por %p147, %p148
      %p151 = scmp.ne.s32.totalorder %s134, %s150
      %p152 = scmp.eq.s32.totalorder %s20, 0
      %p153 = por %p151, %p152
      %s154 = ssub.s32 %s22, %s29
      %p155 = scmp.eq.s32.totalorder %s154, 0
      %s157 = sadd.s32 %s156, 1
      %s158 = scalar_select %p155, %s156, %s157
      %p161 = pneg %p155
      %p162 = scmp.eq.s32.totalorder %s14, 1
      %p163 = por %p161, %p162
      %p164 = scmp.ne.s32.totalorder %s156, %s159
      %p165 = scmp.eq.s32.totalorder %s14, 0
      %p166 = por %p164, %p165
      %p167 = scmp.ne.s32.totalorder %s156, %s159
      %p168 = scmp.eq.s32.totalorder %s19, 1
      %p169 = por %p167, %p168
      %p170 = scmp.ne.s32.totalorder %s159, %s160
      %p171 = scmp.eq.s32.totalorder %s19, 0
      %p172 = por %p170, %p171
      %p173 = scmp.ne.s32.totalorder %s159, %s160
      %p174 = scmp.eq.s32.totalorder %s20, 1
      %p175 = por %p173, %p174
      %p177 = scmp.ne.s32.totalorder %s160, %s176
      %p178 = scmp.eq.s32.totalorder %s20, 0
      %p179 = por %p177, %p178
      %s181 = sadd.s32 %s180, 1
      %p184 = scmp.eq.s32.totalorder %s14, 1
      %p185 = scmp.ne.s32.totalorder %s180, %s182
      %p186 = scmp.eq.s32.totalorder %s14, 0
      %p187 = por %p185, %p186
      %p188 = scmp.ne.s32.totalorder %s180, %s182
      %p189 = scmp.eq.s32.totalorder %s19, 1
      %p190 = por %p188, %p189
      %p191 = scmp.ne.s32.totalorder %s182, %s183
      %p192 = scmp.eq.s32.totalorder %s19, 0
      %p193 = por %p191, %p192
      %p194 = scmp.ne.s32.totalorder %s182, %s183
      %p195 = scmp.eq.s32.totalorder %s20, 1
      %p196 = por %p194, %p195
      %p198 = scmp.ne.s32.totalorder %s183, %s197
      %p199 = scmp.eq.s32.totalorder %s20, 0
      %p200 = por %p198, %p199
      %s201 = ssub.s32 %s21, %s33
      %p202 = scmp.eq.s32.totalorder %s201, 0
      %s204 = sadd.s32 %s203, 1
      %s205 = scalar_select %p202, %s203, %s204
      %p208 = pneg %p202
      %p209 = scmp.eq.s32.totalorder %s14, 1
      %p210 = por %p208, %p209
      %p211 = scmp.ne.s32.totalorder %s203, %s206
      %p212 = scmp.eq.s32.totalorder %s14, 0
      %p213 = por %p211, %p212
      %p214 = scmp.ne.s32.totalorder %s203, %s206
      %p215 = scmp.eq.s32.totalorder %s19, 1
      %p216 = por %p214, %p215
      %p217 = scmp.ne.s32.totalorder %s206, %s207
      %p218 = scmp.eq.s32.totalorder %s19, 0
      %p219 = por %p217, %p218
      %p220 = scmp.ne.s32.totalorder %s206, %s207
      %p221 = scmp.eq.s32.totalorder %s20, 1
      %p222 = por %p220, %p221
      %p224 = scmp.ne.s32.totalorder %s207, %s223
      %p225 = scmp.eq.s32.totalorder %s20, 0
      %p226 = por %p224, %p225
      %p227 = scmp.le.s32.totalorder 1, %s14
      %p228 = scmp.lt.s32.totalorder %s14, 3
      %p229 = pnand %p227, %p228
      %p230 = pneg %p229
      // Predicated region
      $region9: #{_lambda_.6} parent=5 // pred_check
        _
      $region10: #{_lambda_.6} parent=5 // pred_check_branch
        %232 = sbr.rel (%p229) target = $region12
      $region11: #{_lambda_.6} parent=5 // pred_region
        %s233 = ssub.s32 %s14, 1
        // Predicated region
        $region13: #{_lambda_.6} parent=11 // pred_check
          %p234 = pneg %p73
        $region14: #{_lambda_.6} parent=11 // pred_check_branch
          %236 = sbr.rel (%p234) target = $region16
        $region15: #{_lambda_.6} parent=11 // pred_region
          _
        $region16: #{_lambda_.6} parent=11 // pred_fallthru
          _
        // Predicated region
        $region17: #{_lambda_.6} parent=11 // pred_check
          %p237 = pneg %p94
        $region18: #{_lambda_.6} parent=11 // pred_check_branch
          %239 = sbr.rel (%p237) target = $region20
        $region19: #{_lambda_.6} parent=11 // pred_region
          _
        $region20: #{_lambda_.6} parent=11 // pred_fallthru
          _
        // Predicated region
        $region21: #{_lambda_.6} parent=11 // pred_check
          %p240 = pneg %p120
        $region22: #{_lambda_.6} parent=11 // pred_check_branch
          %242 = sbr.rel (%p240) target = $region24
        $region23: #{_lambda_.6} parent=11 // pred_region
          %s243 = smul.u32 4, %s24
          %p244 = scmp.lt.s32.totalorder %s243, 3
          %s245 = scalar_select %p244, %s243, 3
          %s246 = smul.addr %s245, 4
          %s247 = scalar_lea.vmem %s3, %s246
          %s248 = smul.u32 4, %s24
        $region24: #{_lambda_.6} parent=11 // pred_fallthru
          _
        // Predicated region
        $region25: #{_lambda_.6} parent=11 // pred_check
          %p249 = pneg %p146
        $region26: #{_lambda_.6} parent=11 // pred_check_branch
          %251 = sbr.rel (%p249) target = $region28
        $region27: #{_lambda_.6} parent=11 // pred_region
          %s252 = smul.u32 4, %s24
          %p253 = scmp.lt.s32.totalorder %s252, 3
          %s254 = scalar_select %p253, %s252, 3
          %s255 = scalar_lea.vmem %s4, %s254
          %s256 = smul.u32 4, %s24
        $region28: #{_lambda_.6} parent=11 // pred_fallthru
          _
        // Predicated region
        $region29: #{_lambda_.6} parent=11 // pred_check
          %p257 = pneg %p172
        $region30: #{_lambda_.6} parent=11 // pred_check_branch
          %259 = sbr.rel (%p257) target = $region32
        $region31: #{_lambda_.6} parent=11 // pred_region
          %s260 = smul.u32 64, %s24
          %262 = vsyncadd [#allocation5], 0
          %s263 = smul.addr %s260, 4
          %s264 = scalar_lea.hbm %s5, %s263
          %s265 = sshll.u32 %s264, 4
          %s266 = int_to_ptr.hbm [resolvable:$true] %s265
          %s267 = sshll.u32 [#allocation4], 4
          %s268 = int_to_ptr.vmem [resolvable:$true] %s267
          %273 = dma.hbm_to_vmem [thread:$0]  %s266, 4096, %s268, [#allocation5], 64, 64, 4
        $region32: #{_lambda_.6} parent=11 // pred_fallthru
          _
        // Predicated region
        $region33: #{_lambda_.6} parent=11 // pred_check
          %p274 = pneg %p193
        $region34: #{_lambda_.6} parent=11 // pred_check_branch
          %276 = sbr.rel (%p274) target = $region36
        $region35: #{_lambda_.6} parent=11 // pred_region
          _
        $region36: #{_lambda_.6} parent=11 // pred_fallthru
          _
      $region12: #{_lambda_.6} parent=5 // pred_fallthru
        _
      %p277 = scmp.lt.s32.totalorder %s14, 2
      // Predicated region
      $region37: #{_lambda_.6} parent=5 // pred_check
        %p278 = pneg %p277
      $region38: #{_lambda_.6} parent=5 // pred_check_branch
        %280 = sbr.rel (%p278) target = $region40
      $region39: #{_lambda_.6} parent=5 // pred_region
        // Predicated region
        $region41: #{_lambda_.6} parent=39 // pred_check
          %p281 = pneg %p46
        $region42: #{_lambda_.6} parent=39 // pred_check_branch
          %283 = sbr.rel (%p281) target = $region44
        $region43: #{_lambda_.6} parent=39 // pred_region
          %s284 = smul.u32 2, %s21
          %p285 = scmp.lt.s32.totalorder %s284, 3
          %s286 = scalar_select %p285, %s284, 3
          %s287 = smul.addr %s286, 8
          %s288 = scalar_lea.vmem %s0, %s287
          %s289 = smul.u32 2, %s21
        $region44: #{_lambda_.6} parent=39 // pred_fallthru
          _
      $region40: #{_lambda_.6} parent=5 // pred_fallthru
        _
      %p290 = scmp.le.s32.totalorder 1, %s14
      %p291 = scmp.lt.s32.totalorder %s14, 3
      %p292 = pnand %p290, %p291
      %p293 = pneg %p292
      // Predicated region
      $region45: #{_lambda_.6} parent=5 // pred_check
        _
      $region46: #{_lambda_.6} parent=5 // pred_check_branch
        %295 = sbr.rel (%p292) target = $region48
      $region47: #{_lambda_.6} parent=5 // pred_region
        %s296 = ssub.s32 %s14, 1
        // Predicated region
        $region49: #{_lambda_.6} parent=47 // pred_check
          %p297 = pneg %p172
        $region50: #{_lambda_.6} parent=47 // pred_check_branch
          %299 = sbr.rel (%p297) target = $region52
        $region51: #{_lambda_.6} parent=47 // pred_region
          %301 = dma.done [#allocation5], 4096
        $region52: #{_lambda_.6} parent=47 // pred_fallthru
          _
        %s302 = smul.u32 2, %s23
        %p303 = scmp.lt.s32.totalorder %s302, 3
        %s304 = scalar_select %p303, %s302, 3
        %s305 = smul.addr %s304, 8
        %s306 = scalar_lea.vmem %s0, %s305
        %p307 = pneg %p52
        %p308 = pneg %p49
        %p309 = pneg %p73
        %p310 = pneg %p70
        %p311 = pneg %p94
        %p312 = pneg %p91
        %s313 = smul.u32 4, %s24
        %p314 = scmp.lt.s32.totalorder %s313, 3
        %s315 = scalar_select %p314, %s313, 3
        %s316 = smul.addr %s315, 4
        %s317 = scalar_lea.vmem %s3, %s316
        %p318 = pneg %p120
        %p319 = pneg %p117
        %s320 = smul.u32 4, %s24
        %p321 = scmp.lt.s32.totalorder %s320, 3
        %s322 = scalar_select %p321, %s320, 3
        %s323 = scalar_lea.vmem %s4, %s322
        %p324 = pneg %p146
        %p325 = pneg %p143
        %p326 = pneg %p172
        %p327 = pneg %p169
        %p328 = pneg %p193
        %p329 = pneg %p190
        %p330 = pneg %p219
        %p331 = pneg %p216
        %s332 = smul.u32 2, %s23
        %p333 = scmp.lt.s32.totalorder %s332, 3
        %s334 = scalar_select %p333, %s332, 3
        %s335 = smul.addr %s334, 8
        %s336 = scalar_lea.vmem %s7, %s335
        %s337 = smul.u32 2, %s23
        %p338 = scmp.lt.s32.totalorder %s337, 3
        %s339 = scalar_select %p338, %s337, 3
        %s340 = smul.addr %s339, 8
        %s341 = scalar_lea.vmem %s0, %s340
        %s342 = smul.u32 2, %s23
        %s343 = smul.u32 4, %s24
        %p344 = scmp.lt.s32.totalorder %s343, 3
        %s345 = scalar_select %p344, %s343, 3
        %s346 = smul.addr %s345, 4
        %s347 = scalar_lea.vmem %s3, %s346
        %s348 = smul.u32 4, %s24
        %s349 = smul.u32 4, %s24
        %p350 = scmp.lt.s32.totalorder %s349, 3
        %s351 = scalar_select %p350, %s349, 3
        %s352 = scalar_lea.vmem %s4, %s351
        %s353 = smul.u32 4, %s24
        %s354 = smul.u32 64, %s24
        %s355 = smul.u32 2, %s23
        %p356 = scmp.lt.s32.totalorder %s355, 3
        %s357 = scalar_select %p356, %s355, 3
        %s358 = smul.addr %s357, 8
        %s359 = scalar_lea.vmem %s7, %s358
        %s360 = smul.u32 2, %s23
        %p361 = scmp.eq.s32.totalorder %s24, 0
        // Predicated region
        $region53: #{_lambda_.6} parent=47 // pred_check
          %p362 = pneg %p361
        $region54: #{_lambda_.6} parent=47 // pred_check_branch
          %364 = sbr.rel (%p362) target = $region56
        $region55: #{_lambda_.6} parent=47 // pred_region
          %v365 = vld [vmem:[%s341] sm:$0xff]
          %v366 = vld [vmem:[%s341 + $0x8] sm:$0xff]
          %v367 = vld [vmem:[%s1] sm:$0x1]
          %v368 = vld [vmem:[%s2] sm:$0x1]
          %369 = vadd.xlane.f32.xlu0 %v365
          %v370 = vpop.xlane.xlu0 %369
          %371 = vadd.xlane.f32.xlu0 %v366
          %v372 = vpop.xlane.xlu0 %371
          %v373 = vrcp.pop 128.0
          %v374 = vmul.f32 128.0, %v373
          %v375 = vsub.f32 1.0, %v374
          %v376 = vmul.f32 %v373, %v375
          %v377 = vadd.f32 %v373, %v376
          %vm378 = vweird.f32 %v373
          %v379 = vsel %vm378, %v373, %v377
          %v380 = vmul.f32 %v370, %v379
          %v381 = vmul.f32 %v372, %v379
          %v382 = vsub.f32 %v365, %v380
          %v383 = vsub.f32 %v366, %v381
          %v384 = vmul.f32 %v382, %v382
          %v385 = vmul.f32 %v383, %v383
          %386 = vadd.xlane.f32.xlu0 %v384
          %v387 = vpop.xlane.xlu0 %386
          %388 = vadd.xlane.f32.xlu0 %v385
          %v389 = vpop.xlane.xlu0 %388
          %v390 = vmul.f32 %v387, %v379
          %v391 = vmul.f32 %v389, %v379
          %v392 = vadd.f32 %v390, 1e-05
          %v393 = vadd.f32 %v391, 1e-05
          %v394 = vrsqrt.pop %v392
          %v395 = vmul.f32 %v394, %v392
          %v396 = vmul.f32 %v395, %v394
          %v397 = vmul.f32 0.5, %v396
          %v398 = vsub.f32 1.5, %v397
          %v399 = vmul.f32 %v394, %v398
          %vm400 = vweird.f32 %v392
          %vm401 = vweird.f32 %v394
          %vm402 = vmor %vm400, %vm401
          %v403 = vsel %vm402, %v394, %v399
          %v404 = vrsqrt.pop %v393
          %v405 = vmul.f32 %v404, %v393
          %v406 = vmul.f32 %v405, %v404
          %v407 = vmul.f32 0.5, %v406
          %v408 = vsub.f32 1.5, %v407
          %v409 = vmul.f32 %v404, %v408
          %vm410 = vweird.f32 %v393
          %vm411 = vweird.f32 %v404
          %vm412 = vmor %vm410, %vm411
          %v413 = vsel %vm412, %v404, %v409
          %v414 = vmul.f32 %v382, %v403
          %v415 = vmul.f32 %v383, %v413
          %v417 = vperm.slane %v367, 0
          %v419 = vmul.f32 %v414, %v417
          %v420 = vmul.f32 %v415, %v417
          %v422 = vperm.slane %v368, 0
          %v424 = vadd.f32 %v419, %v422
          %v425 = vadd.f32 %v420, %v422
          %v426 = vpack.c.bf16 %v424, %v424
          %v427 = vpack.c.bf16 %v425, %v425
          %428 = vst [vmem:[#allocation2] sm:$0xf] %v426
          %429 = vst [vmem:[#allocation2 + $0x4] sm:$0xf] %v427
          %430 = vst [vmem:[#allocation3] sm:$0xff] 0.0
          %431 = vst [vmem:[#allocation3 + $0x8] sm:$0xff] 0.0
        $region56: #{_lambda_.6} parent=47 // pred_fallthru
          _
        %v432 = vld [vmem:[#allocation2] sm:$0xf]
        %v433 = vld [vmem:[#allocation2 + $0x4] sm:$0xf]
        %v434 = vld [vmem:[%s347] sm:$0xff]
        %v435 = vld [vmem:[%s347 + $0x8] sm:$0xff]
        %v436 = vld [vmem:[%s347 + $0x10] sm:$0xff]
        %v437 = vld [vmem:[%s347 + $0x18] sm:$0xff]
        %v438 = vld [vmem:[%s347 + $0x20] sm:$0xff]
        %v439 = vld [vmem:[%s347 + $0x28] sm:$0xff]
        %v440 = vld [vmem:[%s347 + $0x30] sm:$0xff]
        %v441 = vld [vmem:[%s347 + $0x38] sm:$0xff]
        %v442 = vld [vmem:[%s347 + $0x40] sm:$0xff]
        %v443 = vld [vmem:[%s347 + $0x48] sm:$0xff]
        %v444 = vld [vmem:[%s347 + $0x50] sm:$0xff]
        %v445 = vld [vmem:[%s347 + $0x58] sm:$0xff]
        %v446 = vld [vmem:[%s347 + $0x60] sm:$0xff]
        %v447 = vld [vmem:[%s347 + $0x68] sm:$0xff]
        %v448 = vld [vmem:[%s347 + $0x70] sm:$0xff]
        %v449 = vld [vmem:[%s347 + $0x78] sm:$0xff]
        %v450 = vld [vmem:[%s347 + $0x80] sm:$0xff]
        %v451 = vld [vmem:[%s347 + $0x88] sm:$0xff]
        %v452 = vld [vmem:[%s347 + $0x90] sm:$0xff]
        %v453 = vld [vmem:[%s347 + $0x98] sm:$0xff]
        %v454 = vld [vmem:[%s347 + $0xa0] sm:$0xff]
        %v455 = vld [vmem:[%s347 + $0xa8] sm:$0xff]
        %v456 = vld [vmem:[%s347 + $0xb0] sm:$0xff]
        %v457 = vld [vmem:[%s347 + $0xb8] sm:$0xff]
        %v458 = vld [vmem:[%s347 + $0xc0] sm:$0xff]
        %v459 = vld [vmem:[%s347 + $0xc8] sm:$0xff]
        %v460 = vld [vmem:[%s347 + $0xd0] sm:$0xff]
        %v461 = vld [vmem:[%s347 + $0xd8] sm:$0xff]
        %v462 = vld [vmem:[%s347 + $0xe0] sm:$0xff]
        %v463 = vld [vmem:[%s347 + $0xe8] sm:$0xff]
        %v464 = vld [vmem:[%s347 + $0xf0] sm:$0xff]
        %v465 = vld [vmem:[%s347 + $0xf8] sm:$0xff]
        %v466 = vld [vmem:[%s352] sm:$0xf]
        %v468 = vperm.slane %v466, 0
        %v469 = vperm.slane %v466, 1
        %v470 = vperm.slane %v466, 2
        %v471 = vperm.slane %v466, 3
        %v478 = vunpack.c.l.b16 %v432
        %v479 = vunpack.c.l.b16 %v433
        %v480 = vpack.c.b16 %v479, %v478
        %v514 = vunpack.c.l.b16 %v434
        %v515 = vunpack.c.h.b16 %v434
        %v516 = vunpack.c.l.b16 %v435
        %v517 = vunpack.c.h.b16 %v435
        %v518 = vunpack.c.l.b16 %v436
        %v519 = vunpack.c.h.b16 %v436
        %v520 = vunpack.c.l.b16 %v437
        %v521 = vunpack.c.h.b16 %v437
        %v522 = vunpack.c.l.b16 %v438
        %v523 = vunpack.c.h.b16 %v438
        %v524 = vunpack.c.l.b16 %v439
        %v525 = vunpack.c.h.b16 %v439
        %v526 = vunpack.c.l.b16 %v440
        %v527 = vunpack.c.h.b16 %v440
        %v528 = vunpack.c.l.b16 %v441
        %v529 = vunpack.c.h.b16 %v441
        %v530 = vunpack.c.l.b16 %v442
        %v531 = vunpack.c.h.b16 %v442
        %v532 = vunpack.c.l.b16 %v443
        %v533 = vunpack.c.h.b16 %v443
        %v534 = vunpack.c.l.b16 %v444
        %v535 = vunpack.c.h.b16 %v444
        %v536 = vunpack.c.l.b16 %v445
        %v537 = vunpack.c.h.b16 %v445
        %v538 = vunpack.c.l.b16 %v446
        %v539 = vunpack.c.h.b16 %v446
        %v540 = vunpack.c.l.b16 %v447
        %v541 = vunpack.c.h.b16 %v447
        %v542 = vunpack.c.l.b16 %v448
        %v543 = vunpack.c.h.b16 %v448
        %v544 = vunpack.c.l.b16 %v449
        %v545 = vunpack.c.h.b16 %v449
        %v546 = vunpack.c.l.b16 %v450
        %v547 = vunpack.c.h.b16 %v450
        %v548 = vunpack.c.l.b16 %v451
        %v549 = vunpack.c.h.b16 %v451
        %v550 = vunpack.c.l.b16 %v452
        %v551 = vunpack.c.h.b16 %v452
        %v552 = vunpack.c.l.b16 %v453
        %v553 = vunpack.c.h.b16 %v453
        %v554 = vunpack.c.l.b16 %v454
        %v555 = vunpack.c.h.b16 %v454
        %v556 = vunpack.c.l.b16 %v455
        %v557 = vunpack.c.h.b16 %v455
        %v558 = vunpack.c.l.b16 %v456
        %v559 = vunpack.c.h.b16 %v456
        %v560 = vunpack.c.l.b16 %v457
        %v561 = vunpack.c.h.b16 %v457
        %v562 = vunpack.c.l.b16 %v458
        %v563 = vunpack.c.h.b16 %v458
        %v564 = vunpack.c.l.b16 %v459
        %v565 = vunpack.c.h.b16 %v459
        %v566 = vunpack.c.l.b16 %v460
        %v567 = vunpack.c.h.b16 %v460
        %v568 = vunpack.c.l.b16 %v461
        %v569 = vunpack.c.h.b16 %v461
        %v570 = vunpack.c.l.b16 %v462
        %v571 = vunpack.c.h.b16 %v462
        %v572 = vunpack.c.l.b16 %v463
        %v573 = vunpack.c.h.b16 %v463
        %v574 = vunpack.c.l.b16 %v464
        %v575 = vunpack.c.h.b16 %v464
        %v576 = vunpack.c.l.b16 %v465
        %v577 = vunpack.c.h.b16 %v465
        %v578 = vpack.c.b16 %v518, %v514
        %v579 = vpack.c.b16 %v519, %v515
        %v580 = vpack.c.b16 %v520, %v516
        %v581 = vpack.c.b16 %v521, %v517
        %v582 = vpack.c.b16 %v526, %v522
        %v583 = vpack.c.b16 %v527, %v523
        %v584 = vpack.c.b16 %v528, %v524
        %v585 = vpack.c.b16 %v529, %v525
        %v586 = vpack.c.b16 %v534, %v530
        %v587 = vpack.c.b16 %v535, %v531
        %v588 = vpack.c.b16 %v536, %v532
        %v589 = vpack.c.b16 %v537, %v533
        %v590 = vpack.c.b16 %v542, %v538
        %v591 = vpack.c.b16 %v543, %v539
        %v592 = vpack.c.b16 %v544, %v540
        %v593 = vpack.c.b16 %v545, %v541
        %v594 = vpack.c.b16 %v550, %v546
        %v595 = vpack.c.b16 %v551, %v547
        %v596 = vpack.c.b16 %v552, %v548
        %v597 = vpack.c.b16 %v553, %v549
        %v598 = vpack.c.b16 %v558, %v554
        %v599 = vpack.c.b16 %v559, %v555
        %v600 = vpack.c.b16 %v560, %v556
        %v601 = vpack.c.b16 %v561, %v557
        %v602 = vpack.c.b16 %v566, %v562
        %v603 = vpack.c.b16 %v567, %v563
        %v604 = vpack.c.b16 %v568, %v564
        %v605 = vpack.c.b16 %v569, %v565
        %v606 = vpack.c.b16 %v574, %v570
        %v607 = vpack.c.b16 %v575, %v571
        %v608 = vpack.c.b16 %v576, %v572
        %v609 = vpack.c.b16 %v577, %v573
        %642 = vmatpush.bf16.msra.mxu0 %v606
        %643 = vmatpush.bf16.msra.mxu0 %v602
        %644 = vmatpush.bf16.msra.mxu0 %v598
        %645 = vmatpush.bf16.msra.mxu0 %v594
        %646 = vmatpush.bf16.msra.mxu0 %v590
        %647 = vmatpush.bf16.msra.mxu0 %v586
        %648 = vmatpush.bf16.msra.mxu0 %v582
        %649 = vmatpush.bf16.msra.mxu0 %v578
        %650 = vmatmul.bf16.gmra.mxu0 %v480
        %v651 = vpop.f32.mrf.mxu0
        %v652 = vadd.f32 %v468, %v651
        %v653 = vpop.f32.mrf.mxu0
        %v654 = vadd.f32 %v468, %v653
        %655 = vdwg.mxu0
        %656 = vmatpush.bf16.msra.mxu0 %v607
        %657 = vmatpush.bf16.msra.mxu0 %v603
        %658 = vmatpush.bf16.msra.mxu0 %v599
        %659 = vmatpush.bf16.msra.mxu0 %v595
        %660 = vmatpush.bf16.msra.mxu0 %v591
        %661 = vmatpush.bf16.msra.mxu0 %v587
        %662 = vmatpush.bf16.msra.mxu0 %v583
        %663 = vmatpush.bf16.msra.mxu0 %v579
        %664 = vmatmul.bf16.gmra.mxu0 %v480
        %v665 = vpop.f32.mrf.mxu0
        %v666 = vadd.f32 %v469, %v665
        %v667 = vpop.f32.mrf.mxu0
        %v668 = vadd.f32 %v469, %v667
        %669 = vdwg.mxu0
        %670 = vmatpush.bf16.msra.mxu0 %v608
        %671 = vmatpush.bf16.msra.mxu0 %v604
        %672 = vmatpush.bf16.msra.mxu0 %v600
        %673 = vmatpush.bf16.msra.mxu0 %v596
        %674 = vmatpush.bf16.msra.mxu0 %v592
        %675 = vmatpush.bf16.msra.mxu0 %v588
        %676 = vmatpush.bf16.msra.mxu0 %v584
        %677 = vmatpush.bf16.msra.mxu0 %v580
        %678 = vmatmul.bf16.gmra.mxu0 %v480
        %v679 = vpop.f32.mrf.mxu0
        %v680 = vadd.f32 %v470, %v679
        %v681 = vpop.f32.mrf.mxu0
        %v682 = vadd.f32 %v470, %v681
        %683 = vdwg.mxu0
        %684 = vmatpush.bf16.msra.mxu0 %v609
        %685 = vmatpush.bf16.msra.mxu0 %v605
        %686 = vmatpush.bf16.msra.mxu0 %v601
        %687 = vmatpush.bf16.msra.mxu0 %v597
        %688 = vmatpush.bf16.msra.mxu0 %v593
        %689 = vmatpush.bf16.msra.mxu0 %v589
        %690 = vmatpush.bf16.msra.mxu0 %v585
        %691 = vmatpush.bf16.msra.mxu0 %v581
        %692 = vmatmul.bf16.gmra.mxu0 %v480
        %v693 = vpop.f32.mrf.mxu0
        %v694 = vadd.f32 %v471, %v693
        %v695 = vpop.f32.mrf.mxu0
        %v696 = vadd.f32 %v471, %v695
        %697 = vdwg.mxu0
        %v698 = vmul.f32 %v652, 0.5
        %v699 = vmul.f32 %v666, 0.5
        %v700 = vmul.f32 %v680, 0.5
        %v701 = vmul.f32 %v694, 0.5
        %v702 = vmul.f32 %v654, 0.5
        %v703 = vmul.f32 %v668, 0.5
        %v704 = vmul.f32 %v682, 0.5
        %v705 = vmul.f32 %v696, 0.5
        %v706 = vmul.f32 %v652, 0.044715
        %v707 = vmul.f32 %v666, 0.044715
        %v708 = vmul.f32 %v680, 0.044715
        %v709 = vmul.f32 %v694, 0.044715
        %v710 = vmul.f32 %v654, 0.044715
        %v711 = vmul.f32 %v668, 0.044715
        %v712 = vmul.f32 %v682, 0.044715
        %v713 = vmul.f32 %v696, 0.044715
        %v714 = vmul.f32 %v706, %v652
        %v715 = vmul.f32 %v707, %v666
        %v716 = vmul.f32 %v708, %v680
        %v717 = vmul.f32 %v709, %v694
        %v718 = vmul.f32 %v710, %v654
        %v719 = vmul.f32 %v711, %v668
        %v720 = vmul.f32 %v712, %v682
        %v721 = vmul.f32 %v713, %v696
        %v722 = vmul.f32 %v714, %v652
        %v723 = vmul.f32 %v715, %v666
        %v724 = vmul.f32 %v716, %v680
        %v725 = vmul.f32 %v717, %v694
        %v726 = vmul.f32 %v718, %v654
        %v727 = vmul.f32 %v719, %v668
        %v728 = vmul.f32 %v720, %v682
        %v729 = vmul.f32 %v721, %v696
        %v730 = vadd.f32 %v652, %v722
        %v731 = vadd.f32 %v666, %v723
        %v732 = vadd.f32 %v680, %v724
        %v733 = vadd.f32 %v694, %v725
        %v734 = vadd.f32 %v654, %v726
        %v735 = vadd.f32 %v668, %v727
        %v736 = vadd.f32 %v682, %v728
        %v737 = vadd.f32 %v696, %v729
        %v738 = vmul.f32 %v730, 0.7978846
        %v739 = vmul.f32 %v731, 0.7978846
        %v740 = vmul.f32 %v732, 0.7978846
        %v741 = vmul.f32 %v733, 0.7978846
        %v742 = vmul.f32 %v734, 0.7978846
        %v743 = vmul.f32 %v735, 0.7978846
        %v744 = vmul.f32 %v736, 0.7978846
        %v745 = vmul.f32 %v737, 0.7978846
        %v746 = vtanh.pop %v738
        %v747 = vtanh.pop %v739
        %v748 = vtanh.pop %v740
        %v749 = vtanh.pop %v741
        %v750 = vtanh.pop %v742
        %v751 = vtanh.pop %v743
        %v752 = vtanh.pop %v744
        %v753 = vtanh.pop %v745
        %v754 = vadd.f32 %v746, 1.0
        %v755 = vadd.f32 %v747, 1.0
        %v756 = vadd.f32 %v748, 1.0
        %v757 = vadd.f32 %v749, 1.0
        %v758 = vadd.f32 %v750, 1.0
        %v759 = vadd.f32 %v751, 1.0
        %v760 = vadd.f32 %v752, 1.0
        %v761 = vadd.f32 %v753, 1.0
        %v762 = vmul.f32 %v698, %v754
        %v763 = vmul.f32 %v699, %v755
        %v764 = vmul.f32 %v700, %v756
        %v765 = vmul.f32 %v701, %v757
        %v766 = vmul.f32 %v702, %v758
        %v767 = vmul.f32 %v703, %v759
        %v768 = vmul.f32 %v704, %v760
        %v769 = vmul.f32 %v705, %v761
        %v770 = vpack.c.bf16 %v766, %v762
        %v771 = vpack.c.bf16 %v767, %v763
        %v772 = vpack.c.bf16 %v768, %v764
        %v773 = vpack.c.bf16 %v769, %v765
        %v774 = vld [vmem:[#allocation3] sm:$0xff]
        %v775 = vld [vmem:[#allocation3 + $0x8] sm:$0xff]
        %v776 = vld [vmem:[#allocation4] sm:$0xf]
        %v777 = vld [vmem:[#allocation4 + $0x4] sm:$0xf]
        %v778 = vld [vmem:[#allocation4 + $0x8] sm:$0xf]
        %v779 = vld [vmem:[#allocation4 + $0xc] sm:$0xf]
        %v780 = vld [vmem:[#allocation4 + $0x10] sm:$0xf]
        %v781 = vld [vmem:[#allocation4 + $0x14] sm:$0xf]
        %v782 = vld [vmem:[#allocation4 + $0x18] sm:$0xf]
        %v783 = vld [vmem:[#allocation4 + $0x1c] sm:$0xf]
        %v784 = vld [vmem:[#allocation4 + $0x20] sm:$0xf]
        %v785 = vld [vmem:[#allocation4 + $0x24] sm:$0xf]
        %v786 = vld [vmem:[#allocation4 + $0x28] sm:$0xf]
        %v787 = vld [vmem:[#allocation4 + $0x2c] sm:$0xf]
        %v788 = vld [vmem:[#allocation4 + $0x30] sm:$0xf]
        %v789 = vld [vmem:[#allocation4 + $0x34] sm:$0xf]
        %v790 = vld [vmem:[#allocation4 + $0x38] sm:$0xf]
        %v791 = vld [vmem:[#allocation4 + $0x3c] sm:$0xf]
        %v792 = vld [vmem:[#allocation4 + $0x40] sm:$0xf]
        %v793 = vld [vmem:[#allocation4 + $0x44] sm:$0xf]
        %v794 = vld [vmem:[#allocation4 + $0x48] sm:$0xf]
        %v795 = vld [vmem:[#allocation4 + $0x4c] sm:$0xf]
        %v796 = vld [vmem:[#allocation4 + $0x50] sm:$0xf]
        %v797 = vld [vmem:[#allocation4 + $0x54] sm:$0xf]
        %v798 = vld [vmem:[#allocation4 + $0x58] sm:$0xf]
        %v799 = vld [vmem:[#allocation4 + $0x5c] sm:$0xf]
        %v800 = vld [vmem:[#allocation4 + $0x60] sm:$0xf]
        %v801 = vld [vmem:[#allocation4 + $0x64] sm:$0xf]
        %v802 = vld [vmem:[#allocation4 + $0x68] sm:$0xf]
        %v803 = vld [vmem:[#allocation4 + $0x6c] sm:$0xf]
        %v804 = vld [vmem:[#allocation4 + $0x70] sm:$0xf]
        %v805 = vld [vmem:[#allocation4 + $0x74] sm:$0xf]
        %v806 = vld [vmem:[#allocation4 + $0x78] sm:$0xf]
        %v807 = vld [vmem:[#allocation4 + $0x7c] sm:$0xf]
        %v808 = vld [vmem:[#allocation4 + $0x80] sm:$0xf]
        %v809 = vld [vmem:[#allocation4 + $0x84] sm:$0xf]
        %v810 = vld [vmem:[#allocation4 + $0x88] sm:$0xf]
        %v811 = vld [vmem:[#allocation4 + $0x8c] sm:$0xf]
        %v812 = vld [vmem:[#allocation4 + $0x90] sm:$0xf]
        %v813 = vld [vmem:[#allocation4 + $0x94] sm:$0xf]
        %v814 = vld [vmem:[#allocation4 + $0x98] sm:$0xf]
        %v815 = vld [vmem:[#allocation4 + $0x9c] sm:$0xf]
        %v816 = vld [vmem:[#allocation4 + $0xa0] sm:$0xf]
        %v817 = vld [vmem:[#allocation4 + $0xa4] sm:$0xf]
        %v818 = vld [vmem:[#allocation4 + $0xa8] sm:$0xf]
        %v819 = vld [vmem:[#allocation4 + $0xac] sm:$0xf]
        %v820 = vld [vmem:[#allocation4 + $0xb0] sm:$0xf]
        %v821 = vld [vmem:[#allocation4 + $0xb4] sm:$0xf]
        %v822 = vld [vmem:[#allocation4 + $0xb8] sm:$0xf]
        %v823 = vld [vmem:[#allocation4 + $0xbc] sm:$0xf]
        %v824 = vld [vmem:[#allocation4 + $0xc0] sm:$0xf]
        %v825 = vld [vmem:[#allocation4 + $0xc4] sm:$0xf]
        %v826 = vld [vmem:[#allocation4 + $0xc8] sm:$0xf]
        %v827 = vld [vmem:[#allocation4 + $0xcc] sm:$0xf]
        %v828 = vld [vmem:[#allocation4 + $0xd0] sm:$0xf]
        %v829 = vld [vmem:[#allocation4 + $0xd4] sm:$0xf]
        %v830 = vld [vmem:[#allocation4 + $0xd8] sm:$0xf]
        %v831 = vld [vmem:[#allocation4 + $0xdc] sm:$0xf]
        %v832 = vld [vmem:[#allocation4 + $0xe0] sm:$0xf]
        %v833 = vld [vmem:[#allocation4 + $0xe4] sm:$0xf]
        %v834 = vld [vmem:[#allocation4 + $0xe8] sm:$0xf]
        %v835 = vld [vmem:[#allocation4 + $0xec] sm:$0xf]
        %v836 = vld [vmem:[#allocation4 + $0xf0] sm:$0xf]
        %v837 = vld [vmem:[#allocation4 + $0xf4] sm:$0xf]
        %v838 = vld [vmem:[#allocation4 + $0xf8] sm:$0xf]
        %v839 = vld [vmem:[#allocation4 + $0xfc] sm:$0xf]
        %v904 = vunpack.c.l.b16 %v776
        %v905 = vunpack.c.l.b16 %v777
        %v906 = vunpack.c.l.b16 %v778
        %v907 = vunpack.c.l.b16 %v779
        %v908 = vunpack.c.l.b16 %v780
        %v909 = vunpack.c.l.b16 %v781
        %v910 = vunpack.c.l.b16 %v782
        %v911 = vunpack.c.l.b16 %v783
        %v912 = vunpack.c.l.b16 %v784
        %v913 = vunpack.c.l.b16 %v785
        %v914 = vunpack.c.l.b16 %v786
        %v915 = vunpack.c.l.b16 %v787
        %v916 = vunpack.c.l.b16 %v788
        %v917 = vunpack.c.l.b16 %v789
        %v918 = vunpack.c.l.b16 %v790
        %v919 = vunpack.c.l.b16 %v791
        %v920 = vunpack.c.l.b16 %v792
        %v921 = vunpack.c.l.b16 %v793
        %v922 = vunpack.c.l.b16 %v794
        %v923 = vunpack.c.l.b16 %v795
        %v924 = vunpack.c.l.b16 %v796
        %v925 = vunpack.c.l.b16 %v797
        %v926 = vunpack.c.l.b16 %v798
        %v927 = vunpack.c.l.b16 %v799
        %v928 = vunpack.c.l.b16 %v800
        %v929 = vunpack.c.l.b16 %v801
        %v930 = vunpack.c.l.b16 %v802
        %v931 = vunpack.c.l.b16 %v803
        %v932 = vunpack.c.l.b16 %v804
        %v933 = vunpack.c.l.b16 %v805
        %v934 = vunpack.c.l.b16 %v806
        %v935 = vunpack.c.l.b16 %v807
        %v936 = vunpack.c.l.b16 %v808
        %v937 = vunpack.c.l.b16 %v809
        %v938 = vunpack.c.l.b16 %v810
        %v939 = vunpack.c.l.b16 %v811
        %v940 = vunpack.c.l.b16 %v812
        %v941 = vunpack.c.l.b16 %v813
        %v942 = vunpack.c.l.b16 %v814
        %v943 = vunpack.c.l.b16 %v815
        %v944 = vunpack.c.l.b16 %v816
        %v945 = vunpack.c.l.b16 %v817
        %v946 = vunpack.c.l.b16 %v818
        %v947 = vunpack.c.l.b16 %v819
        %v948 = vunpack.c.l.b16 %v820
        %v949 = vunpack.c.l.b16 %v821
        %v950 = vunpack.c.l.b16 %v822
        %v951 = vunpack.c.l.b16 %v823
        %v952 = vunpack.c.l.b16 %v824
        %v953 = vunpack.c.l.b16 %v825
        %v954 = vunpack.c.l.b16 %v826
        %v955 = vunpack.c.l.b16 %v827
        %v956 = vunpack.c.l.b16 %v828
        %v957 = vunpack.c.l.b16 %v829
        %v958 = vunpack.c.l.b16 %v830
        %v959 = vunpack.c.l.b16 %v831
        %v960 = vunpack.c.l.b16 %v832
        %v961 = vunpack.c.l.b16 %v833
        %v962 = vunpack.c.l.b16 %v834
        %v963 = vunpack.c.l.b16 %v835
        %v964 = vunpack.c.l.b16 %v836
        %v965 = vunpack.c.l.b16 %v837
        %v966 = vunpack.c.l.b16 %v838
        %v967 = vunpack.c.l.b16 %v839
        %v968 = vpack.c.b16 %v905, %v904
        %v969 = vpack.c.b16 %v907, %v906
        %v970 = vpack.c.b16 %v909, %v908
        %v971 = vpack.c.b16 %v911, %v910
        %v972 = vpack.c.b16 %v913, %v912
        %v973 = vpack.c.b16 %v915, %v914
        %v974 = vpack.c.b16 %v917, %v916
        %v975 = vpack.c.b16 %v919, %v918
        %v976 = vpack.c.b16 %v921, %v920
        %v977 = vpack.c.b16 %v923, %v922
        %v978 = vpack.c.b16 %v925, %v924
        %v979 = vpack.c.b16 %v927, %v926
        %v980 = vpack.c.b16 %v929, %v928
        %v981 = vpack.c.b16 %v931, %v930
        %v982 = vpack.c.b16 %v933, %v932
        %v983 = vpack.c.b16 %v935, %v934
        %v984 = vpack.c.b16 %v937, %v936
        %v985 = vpack.c.b16 %v939, %v938
        %v986 = vpack.c.b16 %v941, %v940
        %v987 = vpack.c.b16 %v943, %v942
        %v988 = vpack.c.b16 %v945, %v944
        %v989 = vpack.c.b16 %v947, %v946
        %v990 = vpack.c.b16 %v949, %v948
        %v991 = vpack.c.b16 %v951, %v950
        %v992 = vpack.c.b16 %v953, %v952
        %v993 = vpack.c.b16 %v955, %v954
        %v994 = vpack.c.b16 %v957, %v956
        %v995 = vpack.c.b16 %v959, %v958
        %v996 = vpack.c.b16 %v961, %v960
        %v997 = vpack.c.b16 %v963, %v962
        %v998 = vpack.c.b16 %v965, %v964
        %v999 = vpack.c.b16 %v967, %v966
        %1032 = vmatpush.bf16.msra.mxu0 %v975
        %1033 = vmatpush.bf16.msra.mxu0 %v974
        %1034 = vmatpush.bf16.msra.mxu0 %v973
        %1035 = vmatpush.bf16.msra.mxu0 %v972
        %1036 = vmatpush.bf16.msra.mxu0 %v971
        %1037 = vmatpush.bf16.msra.mxu0 %v970
        %1038 = vmatpush.bf16.msra.mxu0 %v969
        %1039 = vmatpush.bf16.msra.mxu0 %v968
        %1040 = vmatmul.bf16.gmra.mxu0 %v770
        %v1041 = vpop.f32.mrf.mxu0
        %v1042 = vadd.f32 0.0, %v1041
        %v1043 = vpop.f32.mrf.mxu0
        %v1044 = vadd.f32 0.0, %v1043
        %1045 = vdwg.mxu0
        %1046 = vmatpush.bf16.msra.mxu0 %v983
        %1047 = vmatpush.bf16.msra.mxu0 %v982
        %1048 = vmatpush.bf16.msra.mxu0 %v981
        %1049 = vmatpush.bf16.msra.mxu0 %v980
        %1050 = vmatpush.bf16.msra.mxu0 %v979
        %1051 = vmatpush.bf16.msra.mxu0 %v978
        %1052 = vmatpush.bf16.msra.mxu0 %v977
        %1053 = vmatpush.bf16.msra.mxu0 %v976
        %1054 = vmatmul.bf16.gmra.mxu0 %v771
        %v1055 = vpop.f32.mrf.mxu0
        %v1056 = vadd.f32 %v1042, %v1055
        %v1057 = vpop.f32.mrf.mxu0
        %v1058 = vadd.f32 %v1044, %v1057
        %1059 = vdwg.mxu0
        %1060 = vmatpush.bf16.msra.mxu0 %v991
        %1061 = vmatpush.bf16.msra.mxu0 %v990
        %1062 = vmatpush.bf16.msra.mxu0 %v989
        %1063 = vmatpush.bf16.msra.mxu0 %v988
        %1064 = vmatpush.bf16.msra.mxu0 %v987
        %1065 = vmatpush.bf16.msra.mxu0 %v986
        %1066 = vmatpush.bf16.msra.mxu0 %v985
        %1067 = vmatpush.bf16.msra.mxu0 %v984
        %1068 = vmatmul.bf16.gmra.mxu0 %v772
        %v1069 = vpop.f32.mrf.mxu0
        %v1070 = vadd.f32 %v1056, %v1069
        %v1071 = vpop.f32.mrf.mxu0
        %v1072 = vadd.f32 %v1058, %v1071
        %1073 = vdwg.mxu0
        %1074 = vmatpush.bf16.msra.mxu0 %v999
        %1075 = vmatpush.bf16.msra.mxu0 %v998
        %1076 = vmatpush.bf16.msra.mxu0 %v997
        %1077 = vmatpush.bf16.msra.mxu0 %v996
        %1078 = vmatpush.bf16.msra.mxu0 %v995
        %1079 = vmatpush.bf16.msra.mxu0 %v994
        %1080 = vmatpush.bf16.msra.mxu0 %v993
        %1081 = vmatpush.bf16.msra.mxu0 %v992
        %1082 = vmatmul.bf16.gmra.mxu0 %v773
        %v1083 = vpop.f32.mrf.mxu0
        %v1084 = vadd.f32 %v1070, %v1083
        %v1085 = vpop.f32.mrf.mxu0
        %v1086 = vadd.f32 %v1072, %v1085
        %1087 = vdwg.mxu0
        %v1088 = vadd.f32 %v774, %v1084
        %v1089 = vadd.f32 %v775, %v1086
        %1090 = vst [vmem:[#allocation3] sm:$0xff] %v1088
        %1091 = vst [vmem:[#allocation3 + $0x8] sm:$0xff] %v1089
        // Predicated region
        $region57: #{_lambda_.6} parent=47 // pred_check
          %p1092 = pneg %p361
        $region58: #{_lambda_.6} parent=47 // pred_check_branch
          %1094 = sbr.rel (%p1092) target = $region60
        $region59: #{_lambda_.6} parent=47 // pred_region
          %v1095 = vld [vmem:[%s341] sm:$0xff]
          %v1096 = vld [vmem:[%s341 + $0x8] sm:$0xff]
          %v1097 = vld [vmem:[#allocation3] sm:$0xff]
          %v1098 = vld [vmem:[#allocation3 + $0x8] sm:$0xff]
          %v1099 = vld [vmem:[%s6] sm:$0x1]
          %v1101 = vperm.slane %v1099, 0
          %v1103 = vadd.f32 %v1097, %v1101
          %v1104 = vadd.f32 %v1098, %v1101
          %v1105 = vadd.f32 %v1095, %v1103
          %v1106 = vadd.f32 %v1096, %v1104
          %1107 = vst [vmem:[%s359] sm:$0xff] %v1105
          %1108 = vst [vmem:[%s359 + $0x8] sm:$0xff] %v1106
        $region60: #{_lambda_.6} parent=47 // pred_fallthru
          _
        %s1109 = smul.u32 2, %s23
        %p1110 = scmp.lt.s32.totalorder %s1109, 3
        %s1111 = scalar_select %p1110, %s1109, 3
        %s1112 = smul.addr %s1111, 8
        %s1113 = scalar_lea.vmem %s7, %s1112
        // Predicated region
        $region61: #{_lambda_.6} parent=47 // pred_check
          %p1114 = pneg %p216
        $region62: #{_lambda_.6} parent=47 // pred_check_branch
          %1116 = sbr.rel (%p1114) target = $region64
        $region63: #{_lambda_.6} parent=47 // pred_region
          %s1117 = smul.u32 2, %s23
        $region64: #{_lambda_.6} parent=47 // pred_fallthru
          _
      $region48: #{_lambda_.6} parent=5 // pred_fallthru
        _
      %p1118 = scmp.le.s32.totalorder 2, %s14
      // Predicated region
      $region65: #{_lambda_.6} parent=5 // pred_check
        %p1119 = pneg %p1118
      $region66: #{_lambda_.6} parent=5 // pred_check_branch
        %1121 = sbr.rel (%p1119) target = $region68
      $region67: #{_lambda_.6} parent=5 // pred_region
        %s1122 = ssub.s32 %s14, 2
        // Predicated region
        $region69: #{_lambda_.6} parent=67 // pred_check
          %p1123 = pneg %p222
        $region70: #{_lambda_.6} parent=67 // pred_check_branch
          %1125 = sbr.rel (%p1123) target = $region72
        $region71: #{_lambda_.6} parent=67 // pred_region
          %s1126 = smul.u32 2, %s25
          %p1127 = scmp.lt.s32.totalorder %s1126, 3
          %s1128 = scalar_select %p1127, %s1126, 3
          %s1129 = smul.addr %s1128, 8
          %s1130 = scalar_lea.vmem %s7, %s1129
        $region72: #{_lambda_.6} parent=67 // pred_fallthru
          _
      $region68: #{_lambda_.6} parent=5 // pred_fallthru
        _
    $region6: #{_lambda_.6} parent=1 // loop_footer
      %s18 = sadd.s32 1, %s14
    $region7: #{_lambda_.6} parent=1 // loop_footer_branch
      %13 = sbr.rel target = $region3
    $region8: #{_lambda_.6} parent=1 // loop_exit
      _
    %1131 = vsyncpa [#allocation5], 1
    %s1132 = scalar_lea.sflag [#allocation5], 1
    %1133 = vsyncpa %s1132, 1

// kernel: _lambda_.7
$region0: #{_lambda_.7}
  #allocation0 [shape = 'u32[]', space=smem, size = 0x4, offset = 0x4, fixed_abs, tag = 'smem constant byte address 0x4 - core index']
  #allocation1 [shape = 'u32[72,128]{1,0:T(1,128)}', space=vmem, size = 0x9000, scoped, tag = 'internal scratch']
  #allocation2 [shape = 'bf16[16,128]{1,0:T(8,128)(2,1)}', space=vmem, size = 0x1000, scoped, tag = 'scratch operand']
  %s0 = inlined_call_operand.vmem [shape: f32[2,16,128], index: 0, kind: input, shape index: {}]
  %s1 = inlined_call_operand.vmem [shape: f32[1,128], index: 1, kind: input, shape index: {}]
  %s2 = inlined_call_operand.vmem [shape: f32[1,128], index: 2, kind: input, shape index: {}]
  %s3 = inlined_call_operand.hbm [shape: bf16[128,384], index: 3, kind: input, shape index: {}]
  %s4 = inlined_call_operand.vmem [shape: f32[1,384], index: 4, kind: input, shape index: {}]
  %s5 = inlined_call_operand.hbm [shape: bf16[128,128], index: 5, kind: input, shape index: {}]
  %s6 = inlined_call_operand.vmem [shape: f32[1,128], index: 6, kind: input, shape index: {}]
  %s7 = inlined_call_operand.vmem [shape: f32[2,16,128], index: 7, kind: output, shape index: {}]
  %s8 = sld [smem:[#allocation0]]
  $region69: #{_lambda_.7} parent=0
    _
  %s10 = ssub.s32 1, %s8
  %s11 = scalar_select 0, %s10, %s8
  $region1: #{_lambda_.7} parent=0
    #allocation3 [shape = 'u8[98304]{0}', space=vmem, size = 0x18000, scoped, tag = 'input window, operand 3, single buffered']
    #allocation4 [shape = 's32[2]{0}', space=sflag, size = 0x8, scoped, tag = 'scoped memory for _lambda_.7']
    #allocation5 [shape = 'u8[32768]{0}', space=vmem, size = 0x8000, scoped, tag = 'input window, operand 5, single buffered']
    #allocation6 [shape = 's32[1]{0}', space=sflag, size = 0x4, scoped, tag = 'scoped memory for _lambda_.7']
    %12 = vsyncpa [#allocation4], 0
    %13 = vsyncpa [#allocation6], 0
    loop: start=0, step=1, limit=4
    $region2: #{_lambda_.7} parent=1 // loop_pre_header
      _
    $region3: #{_lambda_.7} parent=1 // loop_header
      %s15 = sphi 0, %s19
      %p16 = scmp.ge.s32.totalorder %s15, 4
      %s25 = sphi 0, %s27
      %s28 = sphi 0, %s25
      %s29 = sphi 0, %s28
      %s45 = sphi 0, %s29
      %s49 = sphi 0, %s49
      %s51 = sphi 0, %s49
      %s52 = sphi 0, %s51
      %s66 = sphi 0, %s52
      %s70 = sphi 0, %s70
      %s72 = sphi 0, %s70
      %s73 = sphi 0, %s72
      %s87 = sphi 0, %s73
      %s91 = sphi 0, %s91
      %s93 = sphi 0, %s91
      %s94 = sphi 0, %s93
      %s108 = sphi 0, %s94
      %s112 = sphi 0, %s112
      %s114 = sphi 0, %s112
      %s115 = sphi 0, %s114
      %s129 = sphi 0, %s115
      %s133 = sphi 0, %s133
      %s135 = sphi 0, %s133
      %s136 = sphi 0, %s135
      %s150 = sphi 0, %s136
      %s154 = sphi 0, %s154
      %s156 = sphi 0, %s154
      %s157 = sphi 0, %s156
      %s171 = sphi 0, %s157
      %s177 = sphi 0, %s179
      %s180 = sphi 0, %s177
      %s181 = sphi 0, %s180
      %s197 = sphi 0, %s181
    $region4: #{_lambda_.7} parent=1 // loop_header_branch
      %18 = sbr.rel (%p16) target = $region8
    $region5: #{_lambda_.7} parent=1 // loop_body
      %s20 = ssub.s32 %s15, 1
      %s21 = ssub.s32 %s15, 2
      %s22 = sadd.s32 %s15, 1
      %s23 = ssub.s32 %s15, %s22
      %p24 = scmp.eq.s32.totalorder %s23, 0
      %s26 = sadd.s32 %s25, 1
      %s27 = scalar_select %p24, %s25, %s26
      %p30 = pneg %p24
      %p31 = scmp.eq.s32.totalorder %s15, 1
      %p32 = por %p30, %p31
      %p33 = scmp.ne.s32.totalorder %s25, %s28
      %p34 = scmp.eq.s32.totalorder %s15, 0
      %p35 = por %p33, %p34
      %p36 = scmp.ne.s32.totalorder %s25, %s28
      %p37 = scmp.eq.s32.totalorder %s20, 1
      %p38 = por %p36, %p37
      %p39 = scmp.ne.s32.totalorder %s28, %s29
      %p40 = scmp.eq.s32.totalorder %s20, 0
      %p41 = por %p39, %p40
      %p42 = scmp.ne.s32.totalorder %s28, %s29
      %p43 = scmp.eq.s32.totalorder %s21, 1
      %p44 = por %p42, %p43
      %p46 = scmp.ne.s32.totalorder %s29, %s45
      %p47 = scmp.eq.s32.totalorder %s21, 0
      %p48 = por %p46, %p47
      %s50 = sadd.s32 %s49, 1
      %p53 = scmp.eq.s32.totalorder %s15, 1
      %p54 = scmp.ne.s32.totalorder %s49, %s51
      %p55 = scmp.eq.s32.totalorder %s15, 0
      %p56 = por %p54, %p55
      %p57 = scmp.ne.s32.totalorder %s49, %s51
      %p58 = scmp.eq.s32.totalorder %s20, 1
      %p59 = por %p57, %p58
      %p60 = scmp.ne.s32.totalorder %s51, %s52
      %p61 = scmp.eq.s32.totalorder %s20, 0
      %p62 = por %p60, %p61
      %p63 = scmp.ne.s32.totalorder %s51, %s52
      %p64 = scmp.eq.s32.totalorder %s21, 1
      %p65 = por %p63, %p64
      %p67 = scmp.ne.s32.totalorder %s52, %s66
      %p68 = scmp.eq.s32.totalorder %s21, 0
      %p69 = por %p67, %p68
      %s71 = sadd.s32 %s70, 1
      %p74 = scmp.eq.s32.totalorder %s15, 1
      %p75 = scmp.ne.s32.totalorder %s70, %s72
      %p76 = scmp.eq.s32.totalorder %s15, 0
      %p77 = por %p75, %p76
      %p78 = scmp.ne.s32.totalorder %s70, %s72
      %p79 = scmp.eq.s32.totalorder %s20, 1
      %p80 = por %p78, %p79
      %p81 = scmp.ne.s32.totalorder %s72, %s73
      %p82 = scmp.eq.s32.totalorder %s20, 0
      %p83 = por %p81, %p82
      %p84 = scmp.ne.s32.totalorder %s72, %s73
      %p85 = scmp.eq.s32.totalorder %s21, 1
      %p86 = por %p84, %p85
      %p88 = scmp.ne.s32.totalorder %s73, %s87
      %p89 = scmp.eq.s32.totalorder %s21, 0
      %p90 = por %p88, %p89
      %s92 = sadd.s32 %s91, 1
      %p95 = scmp.eq.s32.totalorder %s15, 1
      %p96 = scmp.ne.s32.totalorder %s91, %s93
      %p97 = scmp.eq.s32.totalorder %s15, 0
      %p98 = por %p96, %p97
      %p99 = scmp.ne.s32.totalorder %s91, %s93
      %p100 = scmp.eq.s32.totalorder %s20, 1
      %p101 = por %p99, %p100
      %p102 = scmp.ne.s32.totalorder %s93, %s94
      %p103 = scmp.eq.s32.totalorder %s20, 0
      %p104 = por %p102, %p103
      %p105 = scmp.ne.s32.totalorder %s93, %s94
      %p106 = scmp.eq.s32.totalorder %s21, 1
      %p107 = por %p105, %p106
      %p109 = scmp.ne.s32.totalorder %s94, %s108
      %p110 = scmp.eq.s32.totalorder %s21, 0
      %p111 = por %p109, %p110
      %s113 = sadd.s32 %s112, 1
      %p116 = scmp.eq.s32.totalorder %s15, 1
      %p117 = scmp.ne.s32.totalorder %s112, %s114
      %p118 = scmp.eq.s32.totalorder %s15, 0
      %p119 = por %p117, %p118
      %p120 = scmp.ne.s32.totalorder %s112, %s114
      %p121 = scmp.eq.s32.totalorder %s20, 1
      %p122 = por %p120, %p121
      %p123 = scmp.ne.s32.totalorder %s114, %s115
      %p124 = scmp.eq.s32.totalorder %s20, 0
      %p125 = por %p123, %p124
      %p126 = scmp.ne.s32.totalorder %s114, %s115
      %p127 = scmp.eq.s32.totalorder %s21, 1
      %p128 = por %p126, %p127
      %p130 = scmp.ne.s32.totalorder %s115, %s129
      %p131 = scmp.eq.s32.totalorder %s21, 0
      %p132 = por %p130, %p131
      %s134 = sadd.s32 %s133, 1
      %p137 = scmp.eq.s32.totalorder %s15, 1
      %p138 = scmp.ne.s32.totalorder %s133, %s135
      %p139 = scmp.eq.s32.totalorder %s15, 0
      %p140 = por %p138, %p139
      %p141 = scmp.ne.s32.totalorder %s133, %s135
      %p142 = scmp.eq.s32.totalorder %s20, 1
      %p143 = por %p141, %p142
      %p144 = scmp.ne.s32.totalorder %s135, %s136
      %p145 = scmp.eq.s32.totalorder %s20, 0
      %p146 = por %p144, %p145
      %p147 = scmp.ne.s32.totalorder %s135, %s136
      %p148 = scmp.eq.s32.totalorder %s21, 1
      %p149 = por %p147, %p148
      %p151 = scmp.ne.s32.totalorder %s136, %s150
      %p152 = scmp.eq.s32.totalorder %s21, 0
      %p153 = por %p151, %p152
      %s155 = sadd.s32 %s154, 1
      %p158 = scmp.eq.s32.totalorder %s15, 1
      %p159 = scmp.ne.s32.totalorder %s154, %s156
      %p160 = scmp.eq.s32.totalorder %s15, 0
      %p161 = por %p159, %p160
      %p162 = scmp.ne.s32.totalorder %s154, %s156
      %p163 = scmp.eq.s32.totalorder %s20, 1
      %p164 = por %p162, %p163
      %p165 = scmp.ne.s32.totalorder %s156, %s157
      %p166 = scmp.eq.s32.totalorder %s20, 0
      %p167 = por %p165, %p166
      %p168 = scmp.ne.s32.totalorder %s156, %s157
      %p169 = scmp.eq.s32.totalorder %s21, 1
      %p170 = por %p168, %p169
      %p172 = scmp.ne.s32.totalorder %s157, %s171
      %p173 = scmp.eq.s32.totalorder %s21, 0
      %p174 = por %p172, %p173
      %s175 = ssub.s32 %s15, %s22
      %p176 = scmp.eq.s32.totalorder %s175, 0
      %s178 = sadd.s32 %s177, 1
      %s179 = scalar_select %p176, %s177, %s178
      %p182 = pneg %p176
      %p183 = scmp.eq.s32.totalorder %s15, 1
      %p184 = por %p182, %p183
      %p185 = scmp.ne.s32.totalorder %s177, %s180
      %p186 = scmp.eq.s32.totalorder %s15, 0
      %p187 = por %p185, %p186
      %p188 = scmp.ne.s32.totalorder %s177, %s180
      %p189 = scmp.eq.s32.totalorder %s20, 1
      %p190 = por %p188, %p189
      %p191 = scmp.ne.s32.totalorder %s180, %s181
      %p192 = scmp.eq.s32.totalorder %s20, 0
      %p193 = por %p191, %p192
      %p194 = scmp.ne.s32.totalorder %s180, %s181
      %p195 = scmp.eq.s32.totalorder %s21, 1
      %p196 = por %p194, %p195
      %p198 = scmp.ne.s32.totalorder %s181, %s197
      %p199 = scmp.eq.s32.totalorder %s21, 0
      %p200 = por %p198, %p199
      %p201 = scmp.le.s32.totalorder 1, %s15
      %p202 = scmp.lt.s32.totalorder %s15, 3
      %p203 = pnand %p201, %p202
      %p204 = pneg %p203
      // Predicated region
      $region9: #{_lambda_.7} parent=5 // pred_check
        _
      $region10: #{_lambda_.7} parent=5 // pred_check_branch
        %206 = sbr.rel (%p203) target = $region12
      $region11: #{_lambda_.7} parent=5 // pred_region
        %s207 = ssub.s32 %s15, 1
        // Predicated region
        $region13: #{_lambda_.7} parent=11 // pred_check
          %p208 = pneg %p62
        $region14: #{_lambda_.7} parent=11 // pred_check_branch
          %210 = sbr.rel (%p208) target = $region16
        $region15: #{_lambda_.7} parent=11 // pred_region
          _
        $region16: #{_lambda_.7} parent=11 // pred_fallthru
          _
        // Predicated region
        $region17: #{_lambda_.7} parent=11 // pred_check
          %p211 = pneg %p83
        $region18: #{_lambda_.7} parent=11 // pred_check_branch
          %213 = sbr.rel (%p211) target = $region20
        $region19: #{_lambda_.7} parent=11 // pred_region
          _
        $region20: #{_lambda_.7} parent=11 // pred_fallthru
          _
        // Predicated region
        $region21: #{_lambda_.7} parent=11 // pred_check
          %p214 = pneg %p104
        $region22: #{_lambda_.7} parent=11 // pred_check_branch
          %216 = sbr.rel (%p214) target = $region24
        $region23: #{_lambda_.7} parent=11 // pred_region
          %218 = vsyncadd [#allocation4], 0
          %s219 = sshll.u32 %s3, 4
          %s220 = int_to_ptr.hbm [resolvable:$true] %s219
          %s221 = sshll.u32 [#allocation3], 4
          %s222 = int_to_ptr.vmem [resolvable:$true] %s221
          %227 = dma.hbm_to_vmem [thread:$0]  %s220, 3072, %s222, [#allocation4], 192, 192, 12
        $region24: #{_lambda_.7} parent=11 // pred_fallthru
          _
        // Predicated region
        $region25: #{_lambda_.7} parent=11 // pred_check
          %p228 = pneg %p125
        $region26: #{_lambda_.7} parent=11 // pred_check_branch
          %230 = sbr.rel (%p228) target = $region28
        $region27: #{_lambda_.7} parent=11 // pred_region
          _
        $region28: #{_lambda_.7} parent=11 // pred_fallthru
          _
        // Predicated region
        $region29: #{_lambda_.7} parent=11 // pred_check
          %p231 = pneg %p146
        $region30: #{_lambda_.7} parent=11 // pred_check_branch
          %233 = sbr.rel (%p231) target = $region32
        $region31: #{_lambda_.7} parent=11 // pred_region
          %235 = vsyncadd [#allocation6], 0
          %s236 = sshll.u32 %s5, 4
          %s237 = int_to_ptr.hbm [resolvable:$true] %s236
          %s238 = sshll.u32 [#allocation5], 4
          %s239 = int_to_ptr.vmem [resolvable:$true] %s238
          %244 = dma.hbm_to_vmem [thread:$0]  %s237, 1024, %s239, [#allocation6], 64, 64, 4
        $region32: #{_lambda_.7} parent=11 // pred_fallthru
          _
        // Predicated region
        $region33: #{_lambda_.7} parent=11 // pred_check
          %p245 = pneg %p167
        $region34: #{_lambda_.7} parent=11 // pred_check_branch
          %247 = sbr.rel (%p245) target = $region36
        $region35: #{_lambda_.7} parent=11 // pred_region
          _
        $region36: #{_lambda_.7} parent=11 // pred_fallthru
          _
      $region12: #{_lambda_.7} parent=5 // pred_fallthru
        _
      %p248 = scmp.lt.s32.totalorder %s15, 2
      // Predicated region
      $region37: #{_lambda_.7} parent=5 // pred_check
        %p249 = pneg %p248
      $region38: #{_lambda_.7} parent=5 // pred_check_branch
        %251 = sbr.rel (%p249) target = $region40
      $region39: #{_lambda_.7} parent=5 // pred_region
        // Predicated region
        $region41: #{_lambda_.7} parent=39 // pred_check
          %p252 = pneg %p35
        $region42: #{_lambda_.7} parent=39 // pred_check_branch
          %254 = sbr.rel (%p252) target = $region44
        $region43: #{_lambda_.7} parent=39 // pred_region
          %p255 = scmp.lt.s32.totalorder %s15, 1
          %s256 = scalar_select %p255, %s15, 1
          %s257 = smul.addr %s256, 2
          %s258 = smul.addr %s257, 8
          %s259 = scalar_lea.vmem %s0, %s258
        $region44: #{_lambda_.7} parent=39 // pred_fallthru
          _
      $region40: #{_lambda_.7} parent=5 // pred_fallthru
        _
      %p260 = scmp.le.s32.totalorder 1, %s15
      %p261 = scmp.lt.s32.totalorder %s15, 3
      %p262 = pnand %p260, %p261
      %p263 = pneg %p262
      // Predicated region
      $region45: #{_lambda_.7} parent=5 // pred_check
        _
      $region46: #{_lambda_.7} parent=5 // pred_check_branch
        %265 = sbr.rel (%p262) target = $region48
      $region47: #{_lambda_.7} parent=5 // pred_region
        %s266 = ssub.s32 %s15, 1
        // Predicated region
        $region49: #{_lambda_.7} parent=47 // pred_check
          %p267 = pneg %p104
        $region50: #{_lambda_.7} parent=47 // pred_check_branch
          %269 = sbr.rel (%p267) target = $region52
        $region51: #{_lambda_.7} parent=47 // pred_region
          %271 = dma.done [#allocation4], 3072
        $region52: #{_lambda_.7} parent=47 // pred_fallthru
          _
        // Predicated region
        $region53: #{_lambda_.7} parent=47 // pred_check
          %p272 = pneg %p146
        $region54: #{_lambda_.7} parent=47 // pred_check_branch
          %274 = sbr.rel (%p272) target = $region56
        $region55: #{_lambda_.7} parent=47 // pred_region
          %276 = dma.done [#allocation6], 1024
        $region56: #{_lambda_.7} parent=47 // pred_fallthru
          _
        %p277 = scmp.lt.s32.totalorder %s20, 1
        %s278 = scalar_select %p277, %s20, 1
        %s279 = smul.addr %s278, 2
        %s280 = smul.addr %s279, 8
        %s281 = scalar_lea.vmem %s0, %s280
        %p282 = pneg %p41
        %p283 = pneg %p38
        %p284 = pneg %p62
        %p285 = pneg %p59
        %p286 = pneg %p83
        %p287 = pneg %p80
        %p288 = pneg %p104
        %p289 = pneg %p101
        %p290 = pneg %p125
        %p291 = pneg %p122
        %p292 = pneg %p146
        %p293 = pneg %p143
        %p294 = pneg %p167
        %p295 = pneg %p164
        %p296 = pneg %p193
        %p297 = pneg %p190
        %p298 = scmp.lt.s32.totalorder %s20, 1
        %s299 = scalar_select %p298, %s20, 1
        %s300 = smul.addr %s299, 2
        %s301 = smul.addr %s300, 8
        %s302 = scalar_lea.vmem %s7, %s301
        %p303 = scmp.lt.s32.totalorder %s20, 1
        %s304 = scalar_select %p303, %s20, 1
        %s305 = smul.addr %s304, 2
        %s306 = smul.addr %s305, 8
        %s307 = scalar_lea.vmem %s0, %s306
        %p308 = scmp.lt.s32.totalorder %s20, 1
        %s309 = scalar_select %p308, %s20, 1
        %s310 = smul.addr %s309, 2
        %s311 = smul.addr %s310, 8
        %s312 = scalar_lea.vmem %s7, %s311
        %v314 = vld [vmem:[%s307] sm:$0xff]
        %v315 = vld [vmem:[%s307 + $0x8] sm:$0xff]
        %v316 = vld [vmem:[%s1] sm:$0x1]
        %v317 = vld [vmem:[%s2] sm:$0x1]
        %318 = vadd.xlane.f32.xlu0 %v314
        %v319 = vpop.xlane.xlu0 %318
        %320 = vadd.xlane.f32.xlu0 %v315
        %v321 = vpop.xlane.xlu0 %320
        %v322 = vrcp.pop 128.0
        %v323 = vmul.f32 128.0, %v322
        %v324 = vsub.f32 1.0, %v323
        %v325 = vmul.f32 %v322, %v324
        %v326 = vadd.f32 %v322, %v325
        %vm327 = vweird.f32 %v322
        %v328 = vsel %vm327, %v322, %v326
        %v329 = vmul.f32 %v319, %v328
        %v330 = vmul.f32 %v321, %v328
        %v331 = vsub.f32 %v314, %v329
        %v332 = vsub.f32 %v315, %v330
        %v333 = vmul.f32 %v331, %v331
        %v334 = vmul.f32 %v332, %v332
        %335 = vadd.xlane.f32.xlu0 %v333
        %v336 = vpop.xlane.xlu0 %335
        %337 = vadd.xlane.f32.xlu0 %v334
        %v338 = vpop.xlane.xlu0 %337
        %v339 = vmul.f32 %v336, %v328
        %v340 = vmul.f32 %v338, %v328
        %v341 = vadd.f32 %v339, 1e-05
        %v342 = vadd.f32 %v340, 1e-05
        %v343 = vrsqrt.pop %v341
        %v344 = vmul.f32 %v343, %v341
        %v345 = vmul.f32 %v344, %v343
        %v346 = vmul.f32 0.5, %v345
        %v347 = vsub.f32 1.5, %v346
        %v348 = vmul.f32 %v343, %v347
        %vm349 = vweird.f32 %v341
        %vm350 = vweird.f32 %v343
        %vm351 = vmor %vm349, %vm350
        %v352 = vsel %vm351, %v343, %v348
        %v353 = vrsqrt.pop %v342
        %v354 = vmul.f32 %v353, %v342
        %v355 = vmul.f32 %v354, %v353
        %v356 = vmul.f32 0.5, %v355
        %v357 = vsub.f32 1.5, %v356
        %v358 = vmul.f32 %v353, %v357
        %vm359 = vweird.f32 %v342
        %vm360 = vweird.f32 %v353
        %vm361 = vmor %vm359, %vm360
        %v362 = vsel %vm361, %v353, %v358
        %v363 = vmul.f32 %v331, %v352
        %v364 = vmul.f32 %v332, %v362
        %v366 = vperm.slane %v316, 0
        %v368 = vmul.f32 %v363, %v366
        %v369 = vmul.f32 %v364, %v366
        %v371 = vperm.slane %v317, 0
        %v373 = vadd.f32 %v368, %v371
        %v374 = vadd.f32 %v369, %v371
        %v375 = vpack.c.bf16 %v374, %v373
        %v376 = vld [vmem:[#allocation3] sm:$0xff]
        %v377 = vld [vmem:[#allocation3 + $0x8] sm:$0xf]
        %v378 = vld [vmem:[#allocation3 + $0xc] sm:$0xff]
        %v379 = vld [vmem:[#allocation3 + $0x14] sm:$0xf]
        %v380 = vld [vmem:[#allocation3 + $0x18] sm:$0xff]
        %v381 = vld [vmem:[#allocation3 + $0x20] sm:$0xf]
        %v382 = vld [vmem:[#allocation3 + $0x24] sm:$0xff]
        %v383 = vld [vmem:[#allocation3 + $0x2c] sm:$0xf]
        %v384 = vld [vmem:[#allocation3 + $0x30] sm:$0xff]
        %v385 = vld [vmem:[#allocation3 + $0x38] sm:$0xf]
        %v386 = vld [vmem:[#allocation3 + $0x3c] sm:$0xff]
        %v387 = vld [vmem:[#allocation3 + $0x44] sm:$0xf]
        %v388 = vld [vmem:[#allocation3 + $0x48] sm:$0xff]
        %v389 = vld [vmem:[#allocation3 + $0x50] sm:$0xf]
        %v390 = vld [vmem:[#allocation3 + $0x54] sm:$0xff]
        %v391 = vld [vmem:[#allocation3 + $0x5c] sm:$0xf]
        %v392 = vld [vmem:[#allocation3 + $0x60] sm:$0xff]
        %v393 = vld [vmem:[#allocation3 + $0x68] sm:$0xf]
        %v394 = vld [vmem:[#allocation3 + $0x6c] sm:$0xff]
        %v395 = vld [vmem:[#allocation3 + $0x74] sm:$0xf]
        %v396 = vld [vmem:[#allocation3 + $0x78] sm:$0xff]
        %v397 = vld [vmem:[#allocation3 + $0x80] sm:$0xf]
        %v398 = vld [vmem:[#allocation3 + $0x84] sm:$0xff]
        %v399 = vld [vmem:[#allocation3 + $0x8c] sm:$0xf]
        %v400 = vld [vmem:[#allocation3 + $0x90] sm:$0xff]
        %v401 = vld [vmem:[#allocation3 + $0x98] sm:$0xf]
        %v402 = vld [vmem:[#allocation3 + $0x9c] sm:$0xff]
        %v403 = vld [vmem:[#allocation3 + $0xa4] sm:$0xf]
        %v404 = vld [vmem:[#allocation3 + $0xa8] sm:$0xff]
        %v405 = vld [vmem:[#allocation3 + $0xb0] sm:$0xf]
        %v406 = vld [vmem:[#allocation3 + $0xb4] sm:$0xff]
        %v407 = vld [vmem:[#allocation3 + $0xbc] sm:$0xf]
        %v408 = vld [vmem:[%s4] sm:$0x7]
        %v410 = vperm.slane %v408, 0
        %v411 = vperm.slane %v408, 1
        %v412 = vperm.slane %v408, 2
        %v448 = vunpack.c.l.b16 %v376
        %v449 = vunpack.c.h.b16 %v376
        %v450 = vunpack.c.l.b16 %v377
        %v451 = vunpack.c.l.b16 %v378
        %v452 = vunpack.c.h.b16 %v378
        %v453 = vunpack.c.l.b16 %v379
        %v454 = vunpack.c.l.b16 %v380
        %v455 = vunpack.c.h.b16 %v380
        %v456 = vunpack.c.l.b16 %v381
        %v457 = vunpack.c.l.b16 %v382
        %v458 = vunpack.c.h.b16 %v382
        %v459 = vunpack.c.l.b16 %v383
        %v460 = vunpack.c.l.b16 %v384
        %v461 = vunpack.c.h.b16 %v384
        %v462 = vunpack.c.l.b16 %v385
        %v463 = vunpack.c.l.b16 %v386
        %v464 = vunpack.c.h.b16 %v386
        %v465 = vunpack.c.l.b16 %v387
        %v466 = vunpack.c.l.b16 %v388
        %v467 = vunpack.c.h.b16 %v388
        %v468 = vunpack.c.l.b16 %v389
        %v469 = vunpack.c.l.b16 %v390
        %v470 = vunpack.c.h.b16 %v390
        %v471 = vunpack.c.l.b16 %v391
        %v472 = vunpack.c.l.b16 %v392
        %v473 = vunpack.c.h.b16 %v392
        %v474 = vunpack.c.l.b16 %v393
        %v475 = vunpack.c.l.b16 %v394
        %v476 = vunpack.c.h.b16 %v394
        %v477 = vunpack.c.l.b16 %v395
        %v478 = vunpack.c.l.b16 %v396
        %v479 = vunpack.c.h.b16 %v396
        %v480 = vunpack.c.l.b16 %v397
        %v481 = vunpack.c.l.b16 %v398
        %v482 = vunpack.c.h.b16 %v398
        %v483 = vunpack.c.l.b16 %v399
        %v484 = vunpack.c.l.b16 %v400
        %v485 = vunpack.c.h.b16 %v400
        %v486 = vunpack.c.l.b16 %v401
        %v487 = vunpack.c.l.b16 %v402
        %v488 = vunpack.c.h.b16 %v402
        %v489 = vunpack.c.l.b16 %v403
        %v490 = vunpack.c.l.b16 %v404
        %v491 = vunpack.c.h.b16 %v404
        %v492 = vunpack.c.l.b16 %v405
        %v493 = vunpack.c.l.b16 %v406
        %v494 = vunpack.c.h.b16 %v406
        %v495 = vunpack.c.l.b16 %v407
        %v496 = vpack.c.b16 %v451, %v448
        %v497 = vpack.c.b16 %v452, %v449
        %v498 = vpack.c.b16 %v453, %v450
        %v499 = vpack.c.b16 %v457, %v454
        %v500 = vpack.c.b16 %v458, %v455
        %v501 = vpack.c.b16 %v459, %v456
        %v502 = vpack.c.b16 %v463, %v460
        %v503 = vpack.c.b16 %v464, %v461
        %v504 = vpack.c.b16 %v465, %v462
        %v505 = vpack.c.b16 %v469, %v466
        %v506 = vpack.c.b16 %v470, %v467
        %v507 = vpack.c.b16 %v471, %v468
        %v508 = vpack.c.b16 %v475, %v472
        %v509 = vpack.c.b16 %v476, %v473
        %v510 = vpack.c.b16 %v477, %v474
        %v511 = vpack.c.b16 %v481, %v478
        %v512 = vpack.c.b16 %v482, %v479
        %v513 = vpack.c.b16 %v483, %v480
        %v514 = vpack.c.b16 %v487, %v484
        %v515 = vpack.c.b16 %v488, %v485
        %v516 = vpack.c.b16 %v489, %v486
        %v517 = vpack.c.b16 %v493, %v490
        %v518 = vpack.c.b16 %v494, %v491
        %v519 = vpack.c.b16 %v495, %v492
        %544 = vmatpush.bf16.msra.mxu0 %v517
        %545 = vmatpush.bf16.msra.mxu0 %v514
        %546 = vmatpush.bf16.msra.mxu0 %v511
        %547 = vmatpush.bf16.msra.mxu0 %v508
        %548 = vmatpush.bf16.msra.mxu0 %v505
        %549 = vmatpush.bf16.msra.mxu0 %v502
        %550 = vmatpush.bf16.msra.mxu0 %v499
        %551 = vmatpush.bf16.msra.mxu0 %v496
        %552 = vmatmul.bf16.gmra.mxu0 %v375
        %v553 = vpop.f32.mrf.mxu0
        %v554 = vadd.f32 %v410, %v553
        %v555 = vpop.f32.mrf.mxu0
        %v556 = vadd.f32 %v410, %v555
        %557 = vdwg.mxu0
        %558 = vmatpush.bf16.msra.mxu0 %v518
        %559 = vmatpush.bf16.msra.mxu0 %v515
        %560 = vmatpush.bf16.msra.mxu0 %v512
        %561 = vmatpush.bf16.msra.mxu0 %v509
        %562 = vmatpush.bf16.msra.mxu0 %v506
        %563 = vmatpush.bf16.msra.mxu0 %v503
        %564 = vmatpush.bf16.msra.mxu0 %v500
        %565 = vmatpush.bf16.msra.mxu0 %v497
        %566 = vmatmul.bf16.gmra.mxu0 %v375
        %v567 = vpop.f32.mrf.mxu0
        %v568 = vadd.f32 %v411, %v567
        %v569 = vpop.f32.mrf.mxu0
        %v570 = vadd.f32 %v411, %v569
        %571 = vdwg.mxu0
        %572 = vmatpush.bf16.msra.mxu0 %v519
        %573 = vmatpush.bf16.msra.mxu0 %v516
        %574 = vmatpush.bf16.msra.mxu0 %v513
        %575 = vmatpush.bf16.msra.mxu0 %v510
        %576 = vmatpush.bf16.msra.mxu0 %v507
        %577 = vmatpush.bf16.msra.mxu0 %v504
        %578 = vmatpush.bf16.msra.mxu0 %v501
        %579 = vmatpush.bf16.msra.mxu0 %v498
        %580 = vmatmul.bf16.gmra.mxu0 %v375
        %v581 = vpop.f32.mrf.mxu0
        %v582 = vadd.f32 %v412, %v581
        %v583 = vpop.f32.mrf.mxu0
        %v584 = vadd.f32 %v412, %v583
        %585 = vdwg.mxu0
        %v586 = vpack.c.bf16 %v568, %v554
        %v587 = vpack.c.bf16 %v582, %v582
        %v588 = vpack.c.bf16 %v570, %v556
        %v589 = vpack.c.bf16 %v584, %v584
        %v590 = vlaneseq
        %v591 = vshrl.u32 %v590, 7
        %v592 = vadd.s32 %v591, 8
        %v593 = vlaneseq
        %v594 = vand.u32 %v593, 127
        %vm595 = vcmp.le.s32.totalorder %v594, %v591
        %vm596 = vcmp.le.s32.totalorder %v594, %v592
        %v597 = vsel %vm595, 0.0, -1e+30
        %v598 = vsel %vm596, 0.0, -1e+30
        %v601 = vunpack.c.l.b16 %v586
        %v602 = vunpack.c.l.b16 %v588
        %v603 = vpack.c.b16 %v602, %v601
        %v604 = vunpack.c.h.b16 %v586
        %v605 = vunpack.c.h.b16 %v588
        %v606 = vpack.c.b16 %v605, %v604
        %vm607 = vcmask 261120
        %v609 = vsel %vm607, %v603, 0
        %v612 = vsel %vm607, %v606, 0
        %614 = vmatpush.bf16.xpose.msra.mxu0 0
        %615 = vmatpush.bf16.xpose.msra.mxu0 0
        %616 = vmatpush.bf16.xpose.msra.mxu0 0
        %617 = vmatpush.bf16.xpose.msra.mxu0 0
        %618 = vmatpush.bf16.xpose.msra.mxu0 0
        %619 = vmatpush.bf16.xpose.msra.mxu0 0
        %620 = vmatpush.bf16.xpose.msra.mxu0 0
        %621 = vmatpush.bf16.xpose.msra.mxu0 %v612
        %622 = vmatmul.bf16.gmra.mxu0 %v609
        %v623 = vpop.f32.mrf.mxu0
        %v624 = vadd.f32 0.0, %v623
        %v625 = vpop.f32.mrf.mxu0
        %v626 = vadd.f32 0.0, %v625
        %627 = vdwg.mxu0
        %v628 = vmul.f32 %v624, 0.17677669
        %v629 = vmul.f32 %v626, 0.17677669
        %v630 = vadd.f32 %v628, %v597
        %v631 = vadd.f32 %v629, %v598
        %vm632 = vcmask 130048
        %v633 = vsel %vm632, %v630, -inf
        %634 = vmax.xlane.f32.xlu0 %v633
        %v635 = vpop.xlane.xlu0 %634
        %v636 = vsel %vm632, %v631, -inf
        %637 = vmax.xlane.f32.xlu0 %v636
        %v638 = vpop.xlane.xlu0 %637
        %v639 = vsub.f32 %v630, %v635
        %v640 = vsub.f32 %v631, %v638
        %v641 = vmul.f32 %v639, 1.442695
        %v642 = vpow.pop %v641
        %v643 = vmul.f32 %v640, 1.442695
        %v644 = vpow.pop %v643
        %v645 = vsel %vm632, %v642, 0.0
        %646 = vadd.xlane.f32.xlu0 %v645
        %v647 = vpop.xlane.xlu0 %646
        %v648 = vsel %vm632, %v644, 0.0
        %649 = vadd.xlane.f32.xlu0 %v648
        %v650 = vpop.xlane.xlu0 %649
        %v651 = vpack.c.bf16 %v644, %v642
        %v654 = vunpack.c.l.b16 %v587
        %v655 = vunpack.c.l.b16 %v589
        %v656 = vpack.c.b16 %v655, %v654
        %v659 = vsel %vm632, %v651, 0
        %661 = vmatpush.bf16.msra.mxu0 0
        %662 = vmatpush.bf16.msra.mxu0 0
        %663 = vmatpush.bf16.msra.mxu0 0
        %664 = vmatpush.bf16.msra.mxu0 0
        %665 = vmatpush.bf16.msra.mxu0 0
        %666 = vmatpush.bf16.msra.mxu0 0
        %667 = vmatpush.bf16.msra.mxu0 0
        %668 = vmatpush.bf16.msra.mxu0 %v656
        %669 = vmatmul.bf16.gmra.mxu0 %v659
        %v670 = vpop.f32.mrf.mxu0
        %v671 = vadd.f32 0.0, %v670
        %v672 = vpop.f32.mrf.mxu0
        %v673 = vadd.f32 0.0, %v672
        %674 = vdwg.mxu0
        %v675 = vrcp.pop %v647
        %v676 = vrcp.pop %v650
        %v677 = vmul.f32 %v671, %v675
        %v678 = vmul.f32 %v673, %v676
        %v679 = vpack.c.bf16 %v677, %v677
        %v680 = vpack.c.bf16 %v678, %v678
        %vm681 = vcmask 257024
        %682 = vst.msk [vmem:[#allocation2] sm:$0xf] %vm681, %v679
        %683 = vst.msk [vmem:[#allocation2 + $0x4] sm:$0xf] %vm681, %v680
        %684 = vrot.lane.b32.xlu0 %v603, 96
        %v685 = vpop.permute.xlu0 %684
        %686 = vrot.lane.b32.xlu0 %v606, 96
        %v687 = vpop.permute.xlu0 %686
        %v689 = vsel %vm607, %v685, 0
        %v692 = vsel %vm607, %v687, 0
        %694 = vmatpush.bf16.xpose.msra.mxu0 0
        %695 = vmatpush.bf16.xpose.msra.mxu0 0
        %696 = vmatpush.bf16.xpose.msra.mxu0 0
        %697 = vmatpush.bf16.xpose.msra.mxu0 0
        %698 = vmatpush.bf16.xpose.msra.mxu0 0
        %699 = vmatpush.bf16.xpose.msra.mxu0 0
        %700 = vmatpush.bf16.xpose.msra.mxu0 0
        %701 = vmatpush.bf16.xpose.msra.mxu0 %v692
        %702 = vmatmul.bf16.gmra.mxu0 %v689
        %v703 = vpop.f32.mrf.mxu0
        %v704 = vadd.f32 0.0, %v703
        %v705 = vpop.f32.mrf.mxu0
        %v706 = vadd.f32 0.0, %v705
        %707 = vdwg.mxu0
        %v708 = vmul.f32 %v704, 0.17677669
        %v709 = vmul.f32 %v706, 0.17677669
        %v710 = vadd.f32 %v708, %v597
        %v711 = vadd.f32 %v709, %v598
        %v712 = vsel %vm632, %v710, -inf
        %713 = vmax.xlane.f32.xlu0 %v712
        %v714 = vpop.xlane.xlu0 %713
        %v715 = vsel %vm632, %v711, -inf
        %716 = vmax.xlane.f32.xlu0 %v715
        %v717 = vpop.xlane.xlu0 %716
        %v718 = vsub.f32 %v710, %v714
        %v719 = vsub.f32 %v711, %v717
        %v720 = vmul.f32 %v718, 1.442695
        %v721 = vpow.pop %v720
        %v722 = vmul.f32 %v719, 1.442695
        %v723 = vpow.pop %v722
        %v724 = vsel %vm632, %v721, 0.0
        %725 = vadd.xlane.f32.xlu0 %v724
        %v726 = vpop.xlane.xlu0 %725
        %v727 = vsel %vm632, %v723, 0.0
        %728 = vadd.xlane.f32.xlu0 %v727
        %v729 = vpop.xlane.xlu0 %728
        %v730 = vpack.c.bf16 %v723, %v721
        %731 = vrot.lane.b32.xlu0 %v656, 96
        %v732 = vpop.permute.xlu0 %731
        %v735 = vsel %vm632, %v730, 0
        %737 = vmatpush.bf16.msra.mxu0 0
        %738 = vmatpush.bf16.msra.mxu0 0
        %739 = vmatpush.bf16.msra.mxu0 0
        %740 = vmatpush.bf16.msra.mxu0 0
        %741 = vmatpush.bf16.msra.mxu0 0
        %742 = vmatpush.bf16.msra.mxu0 0
        %743 = vmatpush.bf16.msra.mxu0 0
        %744 = vmatpush.bf16.msra.mxu0 %v732
        %745 = vmatmul.bf16.gmra.mxu0 %v735
        %v746 = vpop.f32.mrf.mxu0
        %v747 = vadd.f32 0.0, %v746
        %v748 = vpop.f32.mrf.mxu0
        %v749 = vadd.f32 0.0, %v748
        %750 = vdwg.mxu0
        %v751 = vrcp.pop %v726
        %v752 = vrcp.pop %v729
        %v753 = vmul.f32 %v747, %v751
        %v754 = vmul.f32 %v749, %v752
        %v755 = vpack.c.bf16 %v753, %v753
        %v756 = vpack.c.bf16 %v754, %v754
        %759 = vrot.lane.b32.xlu0 %v755, 32
        %v760 = vpop.permute.xlu0 %759
        %761 = vrot.lane.b32.xlu0 %v756, 32
        %v762 = vpop.permute.xlu0 %761
        %vm765 = vcmask 519424
        %766 = vst.msk [vmem:[#allocation2] sm:$0xf] %vm765, %v760
        %767 = vst.msk [vmem:[#allocation2 + $0x4] sm:$0xf] %vm765, %v762
        %768 = vrot.lane.b32.xlu0 %v603, 64
        %v769 = vpop.permute.xlu0 %768
        %770 = vrot.lane.b32.xlu0 %v606, 64
        %v771 = vpop.permute.xlu0 %770
        %v773 = vsel %vm607, %v769, 0
        %v776 = vsel %vm607, %v771, 0
        %778 = vmatpush.bf16.xpose.msra.mxu0 0
        %779 = vmatpush.bf16.xpose.msra.mxu0 0
        %780 = vmatpush.bf16.xpose.msra.mxu0 0
        %781 = vmatpush.bf16.xpose.msra.mxu0 0
        %782 = vmatpush.bf16.xpose.msra.mxu0 0
        %783 = vmatpush.bf16.xpose.msra.mxu0 0
        %784 = vmatpush.bf16.xpose.msra.mxu0 0
        %785 = vmatpush.bf16.xpose.msra.mxu0 %v776
        %786 = vmatmul.bf16.gmra.mxu0 %v773
        %v787 = vpop.f32.mrf.mxu0
        %v788 = vadd.f32 0.0, %v787
        %v789 = vpop.f32.mrf.mxu0
        %v790 = vadd.f32 0.0, %v789
        %791 = vdwg.mxu0
        %v792 = vmul.f32 %v788, 0.17677669
        %v793 = vmul.f32 %v790, 0.17677669
        %v794 = vadd.f32 %v792, %v597
        %v795 = vadd.f32 %v793, %v598
        %v796 = vsel %vm632, %v794, -inf
        %797 = vmax.xlane.f32.xlu0 %v796
        %v798 = vpop.xlane.xlu0 %797
        %v799 = vsel %vm632, %v795, -inf
        %800 = vmax.xlane.f32.xlu0 %v799
        %v801 = vpop.xlane.xlu0 %800
        %v802 = vsub.f32 %v794, %v798
        %v803 = vsub.f32 %v795, %v801
        %v804 = vmul.f32 %v802, 1.442695
        %v805 = vpow.pop %v804
        %v806 = vmul.f32 %v803, 1.442695
        %v807 = vpow.pop %v806
        %v808 = vsel %vm632, %v805, 0.0
        %809 = vadd.xlane.f32.xlu0 %v808
        %v810 = vpop.xlane.xlu0 %809
        %v811 = vsel %vm632, %v807, 0.0
        %812 = vadd.xlane.f32.xlu0 %v811
        %v813 = vpop.xlane.xlu0 %812
        %v814 = vpack.c.bf16 %v807, %v805
        %815 = vrot.lane.b32.xlu0 %v656, 64
        %v816 = vpop.permute.xlu0 %815
        %v819 = vsel %vm632, %v814, 0
        %821 = vmatpush.bf16.msra.mxu0 0
        %822 = vmatpush.bf16.msra.mxu0 0
        %823 = vmatpush.bf16.msra.mxu0 0
        %824 = vmatpush.bf16.msra.mxu0 0
        %825 = vmatpush.bf16.msra.mxu0 0
        %826 = vmatpush.bf16.msra.mxu0 0
        %827 = vmatpush.bf16.msra.mxu0 0
        %828 = vmatpush.bf16.msra.mxu0 %v816
        %829 = vmatmul.bf16.gmra.mxu0 %v819
        %v830 = vpop.f32.mrf.mxu0
        %v831 = vadd.f32 0.0, %v830
        %v832 = vpop.f32.mrf.mxu0
        %v833 = vadd.f32 0.0, %v832
        %834 = vdwg.mxu0
        %v835 = vrcp.pop %v810
        %v836 = vrcp.pop %v813
        %v837 = vmul.f32 %v831, %v835
        %v838 = vmul.f32 %v833, %v836
        %v839 = vpack.c.bf16 %v837, %v837
        %v840 = vpack.c.bf16 %v838, %v838
        %843 = vrot.lane.b32.xlu0 %v839, 64
        %v844 = vpop.permute.xlu0 %843
        %845 = vrot.lane.b32.xlu0 %v840, 64
        %v846 = vpop.permute.xlu0 %845
        %vm849 = vcmask 781824
        %850 = vst.msk [vmem:[#allocation2] sm:$0xf] %vm849, %v844
        %851 = vst.msk [vmem:[#allocation2 + $0x4] sm:$0xf] %vm849, %v846
        %852 = vrot.lane.b32.xlu0 %v603, 32
        %v853 = vpop.permute.xlu0 %852
        %854 = vrot.lane.b32.xlu0 %v606, 32
        %v855 = vpop.permute.xlu0 %854
        %v857 = vsel %vm607, %v853, 0
        %v860 = vsel %vm607, %v855, 0
        %862 = vmatpush.bf16.xpose.msra.mxu0 0
        %863 = vmatpush.bf16.xpose.msra.mxu0 0
        %864 = vmatpush.bf16.xpose.msra.mxu0 0
        %865 = vmatpush.bf16.xpose.msra.mxu0 0
        %866 = vmatpush.bf16.xpose.msra.mxu0 0
        %867 = vmatpush.bf16.xpose.msra.mxu0 0
        %868 = vmatpush.bf16.xpose.msra.mxu0 0
        %869 = vmatpush.bf16.xpose.msra.mxu0 %v860
        %870 = vmatmul.bf16.gmra.mxu0 %v857
        %v871 = vpop.f32.mrf.mxu0
        %v872 = vadd.f32 0.0, %v871
        %v873 = vpop.f32.mrf.mxu0
        %v874 = vadd.f32 0.0, %v873
        %875 = vdwg.mxu0
        %v876 = vmul.f32 %v872, 0.17677669
        %v877 = vmul.f32 %v874, 0.17677669
        %v878 = vadd.f32 %v876, %v597
        %v879 = vadd.f32 %v877, %v598
        %v880 = vsel %vm632, %v878, -inf
        %881 = vmax.xlane.f32.xlu0 %v880
        %v882 = vpop.xlane.xlu0 %881
        %v883 = vsel %vm632, %v879, -inf
        %884 = vmax.xlane.f32.xlu0 %v883
        %v885 = vpop.xlane.xlu0 %884
        %v886 = vsub.f32 %v878, %v882
        %v887 = vsub.f32 %v879, %v885
        %v888 = vmul.f32 %v886, 1.442695
        %v889 = vpow.pop %v888
        %v890 = vmul.f32 %v887, 1.442695
        %v891 = vpow.pop %v890
        %v892 = vsel %vm632, %v889, 0.0
        %893 = vadd.xlane.f32.xlu0 %v892
        %v894 = vpop.xlane.xlu0 %893
        %v895 = vsel %vm632, %v891, 0.0
        %896 = vadd.xlane.f32.xlu0 %v895
        %v897 = vpop.xlane.xlu0 %896
        %v898 = vpack.c.bf16 %v891, %v889
        %899 = vrot.lane.b32.xlu0 %v656, 32
        %v900 = vpop.permute.xlu0 %899
        %v903 = vsel %vm632, %v898, 0
        %905 = vmatpush.bf16.msra.mxu0 0
        %906 = vmatpush.bf16.msra.mxu0 0
        %907 = vmatpush.bf16.msra.mxu0 0
        %908 = vmatpush.bf16.msra.mxu0 0
        %909 = vmatpush.bf16.msra.mxu0 0
        %910 = vmatpush.bf16.msra.mxu0 0
        %911 = vmatpush.bf16.msra.mxu0 0
        %912 = vmatpush.bf16.msra.mxu0 %v900
        %913 = vmatmul.bf16.gmra.mxu0 %v903
        %v914 = vpop.f32.mrf.mxu0
        %v915 = vadd.f32 0.0, %v914
        %v916 = vpop.f32.mrf.mxu0
        %v917 = vadd.f32 0.0, %v916
        %918 = vdwg.mxu0
        %v919 = vrcp.pop %v894
        %v920 = vrcp.pop %v897
        %v921 = vmul.f32 %v915, %v919
        %v922 = vmul.f32 %v917, %v920
        %v923 = vpack.c.bf16 %v921, %v921
        %v924 = vpack.c.bf16 %v922, %v922
        %927 = vrot.lane.b32.xlu0 %v923, 96
        %v928 = vpop.permute.xlu0 %927
        %929 = vrot.lane.b32.xlu0 %v924, 96
        %v930 = vpop.permute.xlu0 %929
        %vm933 = vcmask 1044224
        %934 = vst.msk [vmem:[#allocation2] sm:$0xf] %vm933, %v928
        %935 = vst.msk [vmem:[#allocation2 + $0x4] sm:$0xf] %vm933, %v930
        %v936 = vld [vmem:[#allocation2] sm:$0xf]
        %v937 = vld [vmem:[#allocation2 + $0x4] sm:$0xf]
        %v938 = vld [vmem:[#allocation5] sm:$0xf]
        %v939 = vld [vmem:[#allocation5 + $0x4] sm:$0xf]
        %v940 = vld [vmem:[#allocation5 + $0x8] sm:$0xf]
        %v941 = vld [vmem:[#allocation5 + $0xc] sm:$0xf]
        %v942 = vld [vmem:[#allocation5 + $0x10] sm:$0xf]
        %v943 = vld [vmem:[#allocation5 + $0x14] sm:$0xf]
        %v944 = vld [vmem:[#allocation5 + $0x18] sm:$0xf]
        %v945 = vld [vmem:[#allocation5 + $0x1c] sm:$0xf]
        %v946 = vld [vmem:[#allocation5 + $0x20] sm:$0xf]
        %v947 = vld [vmem:[#allocation5 + $0x24] sm:$0xf]
        %v948 = vld [vmem:[#allocation5 + $0x28] sm:$0xf]
        %v949 = vld [vmem:[#allocation5 + $0x2c] sm:$0xf]
        %v950 = vld [vmem:[#allocation5 + $0x30] sm:$0xf]
        %v951 = vld [vmem:[#allocation5 + $0x34] sm:$0xf]
        %v952 = vld [vmem:[#allocation5 + $0x38] sm:$0xf]
        %v953 = vld [vmem:[#allocation5 + $0x3c] sm:$0xf]
        %v954 = vld [vmem:[%s6] sm:$0x1]
        %v956 = vperm.slane %v954, 0
        %v960 = vunpack.c.l.b16 %v936
        %v961 = vunpack.c.l.b16 %v937
        %v962 = vpack.c.b16 %v961, %v960
        %v980 = vunpack.c.l.b16 %v938
        %v981 = vunpack.c.l.b16 %v939
        %v982 = vunpack.c.l.b16 %v940
        %v983 = vunpack.c.l.b16 %v941
        %v984 = vunpack.c.l.b16 %v942
        %v985 = vunpack.c.l.b16 %v943
        %v986 = vunpack.c.l.b16 %v944
        %v987 = vunpack.c.l.b16 %v945
        %v988 = vunpack.c.l.b16 %v946
        %v989 = vunpack.c.l.b16 %v947
        %v990 = vunpack.c.l.b16 %v948
        %v991 = vunpack.c.l.b16 %v949
        %v992 = vunpack.c.l.b16 %v950
        %v993 = vunpack.c.l.b16 %v951
        %v994 = vunpack.c.l.b16 %v952
        %v995 = vunpack.c.l.b16 %v953
        %v996 = vpack.c.b16 %v981, %v980
        %v997 = vpack.c.b16 %v983, %v982
        %v998 = vpack.c.b16 %v985, %v984
        %v999 = vpack.c.b16 %v987, %v986
        %v1000 = vpack.c.b16 %v989, %v988
        %v1001 = vpack.c.b16 %v991, %v990
        %v1002 = vpack.c.b16 %v993, %v992
        %v1003 = vpack.c.b16 %v995, %v994
        %1012 = vmatpush.bf16.msra.mxu0 %v1003
        %1013 = vmatpush.bf16.msra.mxu0 %v1002
        %1014 = vmatpush.bf16.msra.mxu0 %v1001
        %1015 = vmatpush.bf16.msra.mxu0 %v1000
        %1016 = vmatpush.bf16.msra.mxu0 %v999
        %1017 = vmatpush.bf16.msra.mxu0 %v998
        %1018 = vmatpush.bf16.msra.mxu0 %v997
        %1019 = vmatpush.bf16.msra.mxu0 %v996
        %1020 = vmatmul.bf16.gmra.mxu0 %v962
        %v1021 = vpop.f32.mrf.mxu0
        %v1022 = vadd.f32 %v956, %v1021
        %v1023 = vpop.f32.mrf.mxu0
        %v1024 = vadd.f32 %v956, %v1023
        %1025 = vdwg.mxu0
        %v1026 = vadd.f32 %v314, %v1022
        %v1027 = vadd.f32 %v315, %v1024
        %1028 = vst [vmem:[%s312] sm:$0xff] %v1026
        %1029 = vst [vmem:[%s312 + $0x8] sm:$0xff] %v1027
        %p1030 = scmp.lt.s32.totalorder %s20, 1
        %s1031 = scalar_select %p1030, %s20, 1
        %s1032 = smul.addr %s1031, 2
        %s1033 = smul.addr %s1032, 8
        %s1034 = scalar_lea.vmem %s7, %s1033
        // Predicated region
        $region57: #{_lambda_.7} parent=47 // pred_check
          %p1035 = pneg %p190
        $region58: #{_lambda_.7} parent=47 // pred_check_branch
          %1037 = sbr.rel (%p1035) target = $region60
        $region59: #{_lambda_.7} parent=47 // pred_region
          _
        $region60: #{_lambda_.7} parent=47 // pred_fallthru
          _
      $region48: #{_lambda_.7} parent=5 // pred_fallthru
        _
      %p1038 = scmp.le.s32.totalorder 2, %s15
      // Predicated region
      $region61: #{_lambda_.7} parent=5 // pred_check
        %p1039 = pneg %p1038
      $region62: #{_lambda_.7} parent=5 // pred_check_branch
        %1041 = sbr.rel (%p1039) target = $region64
      $region63: #{_lambda_.7} parent=5 // pred_region
        %s1042 = ssub.s32 %s15, 2
        // Predicated region
        $region65: #{_lambda_.7} parent=63 // pred_check
          %p1043 = pneg %p196
        $region66: #{_lambda_.7} parent=63 // pred_check_branch
          %1045 = sbr.rel (%p1043) target = $region68
        $region67: #{_lambda_.7} parent=63 // pred_region
          %p1046 = scmp.lt.s32.totalorder %s21, 1
          %s1047 = scalar_select %p1046, %s21, 1
          %s1048 = smul.addr %s1047, 2
          %s1049 = smul.addr %s1048, 8
          %s1050 = scalar_lea.vmem %s7, %s1049
        $region68: #{_lambda_.7} parent=63 // pred_fallthru
          _
      $region64: #{_lambda_.7} parent=5 // pred_fallthru
        _
    $region6: #{_lambda_.7} parent=1 // loop_footer
      %s19 = sadd.s32 1, %s15
    $region7: #{_lambda_.7} parent=1 // loop_footer_branch
      %14 = sbr.rel target = $region3
    $region8: #{_lambda_.7} parent=1 // loop_exit
      _
    %1051 = vsyncpa [#allocation4], 1
    %s1052 = scalar_lea.sflag [#allocation4], 1
    %1053 = vsyncpa %s1052, 1
    %1054 = vsyncpa [#allocation6], 1

// kernel: _lambda_.5
$region0: #{_lambda_.5}
  #allocation0 [shape = 'u32[]', space=smem, size = 0x4, offset = 0x4, fixed_abs, tag = 'smem constant byte address 0x4 - core index']
  #allocation1 [shape = 'u32[72,128]{1,0:T(1,128)}', space=vmem, size = 0x9000, scoped, tag = 'internal scratch']
  #allocation2 [shape = 'bf16[16,128]{1,0:T(8,128)(2,1)}', space=vmem, size = 0x1000, scoped, tag = 'scratch operand']
  %s0 = inlined_call_operand.vmem [shape: f32[2,16,128], index: 0, kind: input, shape index: {}]
  %s1 = inlined_call_operand.vmem [shape: f32[1,128], index: 1, kind: input, shape index: {}]
  %s2 = inlined_call_operand.vmem [shape: f32[1,128], index: 2, kind: input, shape index: {}]
  %s3 = inlined_call_operand.hbm [shape: bf16[128,384], index: 3, kind: input, shape index: {}]
  %s4 = inlined_call_operand.vmem [shape: f32[1,384], index: 4, kind: input, shape index: {}]
  %s5 = inlined_call_operand.vmem [shape: bf16[128,128], index: 5, kind: input, shape index: {}]
  %s6 = inlined_call_operand.vmem [shape: f32[1,128], index: 6, kind: input, shape index: {}]
  %s7 = inlined_call_operand.vmem [shape: f32[2,16,128], index: 7, kind: output, shape index: {}]
  %s8 = sld [smem:[#allocation0]]
  $region65: #{_lambda_.5} parent=0
    _
  %s10 = ssub.s32 1, %s8
  %s11 = scalar_select 0, %s10, %s8
  $region1: #{_lambda_.5} parent=0
    #allocation3 [shape = 'u8[98304]{0}', space=vmem, size = 0x18000, scoped, tag = 'input window, operand 3, single buffered']
    #allocation4 [shape = 's32[2]{0}', space=sflag, size = 0x8, scoped, tag = 'scoped memory for _lambda_.5']
    %12 = vsyncpa [#allocation4], 0
    loop: start=0, step=1, limit=4
    $region2: #{_lambda_.5} parent=1 // loop_pre_header
      _
    $region3: #{_lambda_.5} parent=1 // loop_header
      %s14 = sphi 0, %s18
      %p15 = scmp.ge.s32.totalorder %s14, 4
      %s24 = sphi 0, %s26
      %s27 = sphi 0, %s24
      %s28 = sphi 0, %s27
      %s44 = sphi 0, %s28
      %s48 = sphi 0, %s48
      %s50 = sphi 0, %s48
      %s51 = sphi 0, %s50
      %s65 = sphi 0, %s51
      %s69 = sphi 0, %s69
      %s71 = sphi 0, %s69
      %s72 = sphi 0, %s71
      %s86 = sphi 0, %s72
      %s90 = sphi 0, %s90
      %s92 = sphi 0, %s90
      %s93 = sphi 0, %s92
      %s107 = sphi 0, %s93
      %s111 = sphi 0, %s111
      %s113 = sphi 0, %s111
      %s114 = sphi 0, %s113
      %s128 = sphi 0, %s114
      %s132 = sphi 0, %s132
      %s134 = sphi 0, %s132
      %s135 = sphi 0, %s134
      %s149 = sphi 0, %s135
      %s153 = sphi 0, %s153
      %s155 = sphi 0, %s153
      %s156 = sphi 0, %s155
      %s170 = sphi 0, %s156
      %s176 = sphi 0, %s178
      %s179 = sphi 0, %s176
      %s180 = sphi 0, %s179
      %s196 = sphi 0, %s180
    $region4: #{_lambda_.5} parent=1 // loop_header_branch
      %17 = sbr.rel (%p15) target = $region8
    $region5: #{_lambda_.5} parent=1 // loop_body
      %s19 = ssub.s32 %s14, 1
      %s20 = ssub.s32 %s14, 2
      %s21 = sadd.s32 %s14, 1
      %s22 = ssub.s32 %s14, %s21
      %p23 = scmp.eq.s32.totalorder %s22, 0
      %s25 = sadd.s32 %s24, 1
      %s26 = scalar_select %p23, %s24, %s25
      %p29 = pneg %p23
      %p30 = scmp.eq.s32.totalorder %s14, 1
      %p31 = por %p29, %p30
      %p32 = scmp.ne.s32.totalorder %s24, %s27
      %p33 = scmp.eq.s32.totalorder %s14, 0
      %p34 = por %p32, %p33
      %p35 = scmp.ne.s32.totalorder %s24, %s27
      %p36 = scmp.eq.s32.totalorder %s19, 1
      %p37 = por %p35, %p36
      %p38 = scmp.ne.s32.totalorder %s27, %s28
      %p39 = scmp.eq.s32.totalorder %s19, 0
      %p40 = por %p38, %p39
      %p41 = scmp.ne.s32.totalorder %s27, %s28
      %p42 = scmp.eq.s32.totalorder %s20, 1
      %p43 = por %p41, %p42
      %p45 = scmp.ne.s32.totalorder %s28, %s44
      %p46 = scmp.eq.s32.totalorder %s20, 0
      %p47 = por %p45, %p46
      %s49 = sadd.s32 %s48, 1
      %p52 = scmp.eq.s32.totalorder %s14, 1
      %p53 = scmp.ne.s32.totalorder %s48, %s50
      %p54 = scmp.eq.s32.totalorder %s14, 0
      %p55 = por %p53, %p54
      %p56 = scmp.ne.s32.totalorder %s48, %s50
      %p57 = scmp.eq.s32.totalorder %s19, 1
      %p58 = por %p56, %p57
      %p59 = scmp.ne.s32.totalorder %s50, %s51
      %p60 = scmp.eq.s32.totalorder %s19, 0
      %p61 = por %p59, %p60
      %p62 = scmp.ne.s32.totalorder %s50, %s51
      %p63 = scmp.eq.s32.totalorder %s20, 1
      %p64 = por %p62, %p63
      %p66 = scmp.ne.s32.totalorder %s51, %s65
      %p67 = scmp.eq.s32.totalorder %s20, 0
      %p68 = por %p66, %p67
      %s70 = sadd.s32 %s69, 1
      %p73 = scmp.eq.s32.totalorder %s14, 1
      %p74 = scmp.ne.s32.totalorder %s69, %s71
      %p75 = scmp.eq.s32.totalorder %s14, 0
      %p76 = por %p74, %p75
      %p77 = scmp.ne.s32.totalorder %s69, %s71
      %p78 = scmp.eq.s32.totalorder %s19, 1
      %p79 = por %p77, %p78
      %p80 = scmp.ne.s32.totalorder %s71, %s72
      %p81 = scmp.eq.s32.totalorder %s19, 0
      %p82 = por %p80, %p81
      %p83 = scmp.ne.s32.totalorder %s71, %s72
      %p84 = scmp.eq.s32.totalorder %s20, 1
      %p85 = por %p83, %p84
      %p87 = scmp.ne.s32.totalorder %s72, %s86
      %p88 = scmp.eq.s32.totalorder %s20, 0
      %p89 = por %p87, %p88
      %s91 = sadd.s32 %s90, 1
      %p94 = scmp.eq.s32.totalorder %s14, 1
      %p95 = scmp.ne.s32.totalorder %s90, %s92
      %p96 = scmp.eq.s32.totalorder %s14, 0
      %p97 = por %p95, %p96
      %p98 = scmp.ne.s32.totalorder %s90, %s92
      %p99 = scmp.eq.s32.totalorder %s19, 1
      %p100 = por %p98, %p99
      %p101 = scmp.ne.s32.totalorder %s92, %s93
      %p102 = scmp.eq.s32.totalorder %s19, 0
      %p103 = por %p101, %p102
      %p104 = scmp.ne.s32.totalorder %s92, %s93
      %p105 = scmp.eq.s32.totalorder %s20, 1
      %p106 = por %p104, %p105
      %p108 = scmp.ne.s32.totalorder %s93, %s107
      %p109 = scmp.eq.s32.totalorder %s20, 0
      %p110 = por %p108, %p109
      %s112 = sadd.s32 %s111, 1
      %p115 = scmp.eq.s32.totalorder %s14, 1
      %p116 = scmp.ne.s32.totalorder %s111, %s113
      %p117 = scmp.eq.s32.totalorder %s14, 0
      %p118 = por %p116, %p117
      %p119 = scmp.ne.s32.totalorder %s111, %s113
      %p120 = scmp.eq.s32.totalorder %s19, 1
      %p121 = por %p119, %p120
      %p122 = scmp.ne.s32.totalorder %s113, %s114
      %p123 = scmp.eq.s32.totalorder %s19, 0
      %p124 = por %p122, %p123
      %p125 = scmp.ne.s32.totalorder %s113, %s114
      %p126 = scmp.eq.s32.totalorder %s20, 1
      %p127 = por %p125, %p126
      %p129 = scmp.ne.s32.totalorder %s114, %s128
      %p130 = scmp.eq.s32.totalorder %s20, 0
      %p131 = por %p129, %p130
      %s133 = sadd.s32 %s132, 1
      %p136 = scmp.eq.s32.totalorder %s14, 1
      %p137 = scmp.ne.s32.totalorder %s132, %s134
      %p138 = scmp.eq.s32.totalorder %s14, 0
      %p139 = por %p137, %p138
      %p140 = scmp.ne.s32.totalorder %s132, %s134
      %p141 = scmp.eq.s32.totalorder %s19, 1
      %p142 = por %p140, %p141
      %p143 = scmp.ne.s32.totalorder %s134, %s135
      %p144 = scmp.eq.s32.totalorder %s19, 0
      %p145 = por %p143, %p144
      %p146 = scmp.ne.s32.totalorder %s134, %s135
      %p147 = scmp.eq.s32.totalorder %s20, 1
      %p148 = por %p146, %p147
      %p150 = scmp.ne.s32.totalorder %s135, %s149
      %p151 = scmp.eq.s32.totalorder %s20, 0
      %p152 = por %p150, %p151
      %s154 = sadd.s32 %s153, 1
      %p157 = scmp.eq.s32.totalorder %s14, 1
      %p158 = scmp.ne.s32.totalorder %s153, %s155
      %p159 = scmp.eq.s32.totalorder %s14, 0
      %p160 = por %p158, %p159
      %p161 = scmp.ne.s32.totalorder %s153, %s155
      %p162 = scmp.eq.s32.totalorder %s19, 1
      %p163 = por %p161, %p162
      %p164 = scmp.ne.s32.totalorder %s155, %s156
      %p165 = scmp.eq.s32.totalorder %s19, 0
      %p166 = por %p164, %p165
      %p167 = scmp.ne.s32.totalorder %s155, %s156
      %p168 = scmp.eq.s32.totalorder %s20, 1
      %p169 = por %p167, %p168
      %p171 = scmp.ne.s32.totalorder %s156, %s170
      %p172 = scmp.eq.s32.totalorder %s20, 0
      %p173 = por %p171, %p172
      %s174 = ssub.s32 %s14, %s21
      %p175 = scmp.eq.s32.totalorder %s174, 0
      %s177 = sadd.s32 %s176, 1
      %s178 = scalar_select %p175, %s176, %s177
      %p181 = pneg %p175
      %p182 = scmp.eq.s32.totalorder %s14, 1
      %p183 = por %p181, %p182
      %p184 = scmp.ne.s32.totalorder %s176, %s179
      %p185 = scmp.eq.s32.totalorder %s14, 0
      %p186 = por %p184, %p185
      %p187 = scmp.ne.s32.totalorder %s176, %s179
      %p188 = scmp.eq.s32.totalorder %s19, 1
      %p189 = por %p187, %p188
      %p190 = scmp.ne.s32.totalorder %s179, %s180
      %p191 = scmp.eq.s32.totalorder %s19, 0
      %p192 = por %p190, %p191
      %p193 = scmp.ne.s32.totalorder %s179, %s180
      %p194 = scmp.eq.s32.totalorder %s20, 1
      %p195 = por %p193, %p194
      %p197 = scmp.ne.s32.totalorder %s180, %s196
      %p198 = scmp.eq.s32.totalorder %s20, 0
      %p199 = por %p197, %p198
      %p200 = scmp.le.s32.totalorder 1, %s14
      %p201 = scmp.lt.s32.totalorder %s14, 3
      %p202 = pnand %p200, %p201
      %p203 = pneg %p202
      // Predicated region
      $region9: #{_lambda_.5} parent=5 // pred_check
        _
      $region10: #{_lambda_.5} parent=5 // pred_check_branch
        %205 = sbr.rel (%p202) target = $region12
      $region11: #{_lambda_.5} parent=5 // pred_region
        %s206 = ssub.s32 %s14, 1
        // Predicated region
        $region13: #{_lambda_.5} parent=11 // pred_check
          %p207 = pneg %p61
        $region14: #{_lambda_.5} parent=11 // pred_check_branch
          %209 = sbr.rel (%p207) target = $region16
        $region15: #{_lambda_.5} parent=11 // pred_region
          _
        $region16: #{_lambda_.5} parent=11 // pred_fallthru
          _
        // Predicated region
        $region17: #{_lambda_.5} parent=11 // pred_check
          %p210 = pneg %p82
        $region18: #{_lambda_.5} parent=11 // pred_check_branch
          %212 = sbr.rel (%p210) target = $region20
        $region19: #{_lambda_.5} parent=11 // pred_region
          _
        $region20: #{_lambda_.5} parent=11 // pred_fallthru
          _
        // Predicated region
        $region21: #{_lambda_.5} parent=11 // pred_check
          %p213 = pneg %p103
        $region22: #{_lambda_.5} parent=11 // pred_check_branch
          %215 = sbr.rel (%p213) target = $region24
        $region23: #{_lambda_.5} parent=11 // pred_region
          %217 = vsyncadd [#allocation4], 0
          %s218 = sshll.u32 %s3, 4
          %s219 = int_to_ptr.hbm [resolvable:$true] %s218
          %s220 = sshll.u32 [#allocation3], 4
          %s221 = int_to_ptr.vmem [resolvable:$true] %s220
          %226 = dma.hbm_to_vmem [thread:$0]  %s219, 3072, %s221, [#allocation4], 192, 192, 12
        $region24: #{_lambda_.5} parent=11 // pred_fallthru
          _
        // Predicated region
        $region25: #{_lambda_.5} parent=11 // pred_check
          %p227 = pneg %p124
        $region26: #{_lambda_.5} parent=11 // pred_check_branch
          %229 = sbr.rel (%p227) target = $region28
        $region27: #{_lambda_.5} parent=11 // pred_region
          _
        $region28: #{_lambda_.5} parent=11 // pred_fallthru
          _
        // Predicated region
        $region29: #{_lambda_.5} parent=11 // pred_check
          %p230 = pneg %p145
        $region30: #{_lambda_.5} parent=11 // pred_check_branch
          %232 = sbr.rel (%p230) target = $region32
        $region31: #{_lambda_.5} parent=11 // pred_region
          _
        $region32: #{_lambda_.5} parent=11 // pred_fallthru
          _
        // Predicated region
        $region33: #{_lambda_.5} parent=11 // pred_check
          %p233 = pneg %p166
        $region34: #{_lambda_.5} parent=11 // pred_check_branch
          %235 = sbr.rel (%p233) target = $region36
        $region35: #{_lambda_.5} parent=11 // pred_region
          _
        $region36: #{_lambda_.5} parent=11 // pred_fallthru
          _
      $region12: #{_lambda_.5} parent=5 // pred_fallthru
        _
      %p236 = scmp.lt.s32.totalorder %s14, 2
      // Predicated region
      $region37: #{_lambda_.5} parent=5 // pred_check
        %p237 = pneg %p236
      $region38: #{_lambda_.5} parent=5 // pred_check_branch
        %239 = sbr.rel (%p237) target = $region40
      $region39: #{_lambda_.5} parent=5 // pred_region
        // Predicated region
        $region41: #{_lambda_.5} parent=39 // pred_check
          %p240 = pneg %p34
        $region42: #{_lambda_.5} parent=39 // pred_check_branch
          %242 = sbr.rel (%p240) target = $region44
        $region43: #{_lambda_.5} parent=39 // pred_region
          %p243 = scmp.lt.s32.totalorder %s14, 1
          %s244 = scalar_select %p243, %s14, 1
          %s245 = smul.addr %s244, 2
          %s246 = smul.addr %s245, 8
          %s247 = scalar_lea.vmem %s0, %s246
        $region44: #{_lambda_.5} parent=39 // pred_fallthru
          _
      $region40: #{_lambda_.5} parent=5 // pred_fallthru
        _
      %p248 = scmp.le.s32.totalorder 1, %s14
      %p249 = scmp.lt.s32.totalorder %s14, 3
      %p250 = pnand %p248, %p249
      %p251 = pneg %p250
      // Predicated region
      $region45: #{_lambda_.5} parent=5 // pred_check
        _
      $region46: #{_lambda_.5} parent=5 // pred_check_branch
        %253 = sbr.rel (%p250) target = $region48
      $region47: #{_lambda_.5} parent=5 // pred_region
        %s254 = ssub.s32 %s14, 1
        // Predicated region
        $region49: #{_lambda_.5} parent=47 // pred_check
          %p255 = pneg %p103
        $region50: #{_lambda_.5} parent=47 // pred_check_branch
          %257 = sbr.rel (%p255) target = $region52
        $region51: #{_lambda_.5} parent=47 // pred_region
          %259 = dma.done [#allocation4], 3072
        $region52: #{_lambda_.5} parent=47 // pred_fallthru
          _
        %p260 = scmp.lt.s32.totalorder %s19, 1
        %s261 = scalar_select %p260, %s19, 1
        %s262 = smul.addr %s261, 2
        %s263 = smul.addr %s262, 8
        %s264 = scalar_lea.vmem %s0, %s263
        %p265 = pneg %p40
        %p266 = pneg %p37
        %p267 = pneg %p61
        %p268 = pneg %p58
        %p269 = pneg %p82
        %p270 = pneg %p79
        %p271 = pneg %p103
        %p272 = pneg %p100
        %p273 = pneg %p124
        %p274 = pneg %p121
        %p275 = pneg %p145
        %p276 = pneg %p142
        %p277 = pneg %p166
        %p278 = pneg %p163
        %p279 = pneg %p192
        %p280 = pneg %p189
        %p281 = scmp.lt.s32.totalorder %s19, 1
        %s282 = scalar_select %p281, %s19, 1
        %s283 = smul.addr %s282, 2
        %s284 = smul.addr %s283, 8
        %s285 = scalar_lea.vmem %s7, %s284
        %p286 = scmp.lt.s32.totalorder %s19, 1
        %s287 = scalar_select %p286, %s19, 1
        %s288 = smul.addr %s287, 2
        %s289 = smul.addr %s288, 8
        %s290 = scalar_lea.vmem %s0, %s289
        %p291 = scmp.lt.s32.totalorder %s19, 1
        %s292 = scalar_select %p291, %s19, 1
        %s293 = smul.addr %s292, 2
        %s294 = smul.addr %s293, 8
        %s295 = scalar_lea.vmem %s7, %s294
        %v297 = vld [vmem:[%s290] sm:$0xff]
        %v298 = vld [vmem:[%s290 + $0x8] sm:$0xff]
        %v299 = vld [vmem:[%s1] sm:$0x1]
        %v300 = vld [vmem:[%s2] sm:$0x1]
        %301 = vadd.xlane.f32.xlu0 %v297
        %v302 = vpop.xlane.xlu0 %301
        %303 = vadd.xlane.f32.xlu0 %v298
        %v304 = vpop.xlane.xlu0 %303
        %v305 = vrcp.pop 128.0
        %v306 = vmul.f32 128.0, %v305
        %v307 = vsub.f32 1.0, %v306
        %v308 = vmul.f32 %v305, %v307
        %v309 = vadd.f32 %v305, %v308
        %vm310 = vweird.f32 %v305
        %v311 = vsel %vm310, %v305, %v309
        %v312 = vmul.f32 %v302, %v311
        %v313 = vmul.f32 %v304, %v311
        %v314 = vsub.f32 %v297, %v312
        %v315 = vsub.f32 %v298, %v313
        %v316 = vmul.f32 %v314, %v314
        %v317 = vmul.f32 %v315, %v315
        %318 = vadd.xlane.f32.xlu0 %v316
        %v319 = vpop.xlane.xlu0 %318
        %320 = vadd.xlane.f32.xlu0 %v317
        %v321 = vpop.xlane.xlu0 %320
        %v322 = vmul.f32 %v319, %v311
        %v323 = vmul.f32 %v321, %v311
        %v324 = vadd.f32 %v322, 1e-05
        %v325 = vadd.f32 %v323, 1e-05
        %v326 = vrsqrt.pop %v324
        %v327 = vmul.f32 %v326, %v324
        %v328 = vmul.f32 %v327, %v326
        %v329 = vmul.f32 0.5, %v328
        %v330 = vsub.f32 1.5, %v329
        %v331 = vmul.f32 %v326, %v330
        %vm332 = vweird.f32 %v324
        %vm333 = vweird.f32 %v326
        %vm334 = vmor %vm332, %vm333
        %v335 = vsel %vm334, %v326, %v331
        %v336 = vrsqrt.pop %v325
        %v337 = vmul.f32 %v336, %v325
        %v338 = vmul.f32 %v337, %v336
        %v339 = vmul.f32 0.5, %v338
        %v340 = vsub.f32 1.5, %v339
        %v341 = vmul.f32 %v336, %v340
        %vm342 = vweird.f32 %v325
        %vm343 = vweird.f32 %v336
        %vm344 = vmor %vm342, %vm343
        %v345 = vsel %vm344, %v336, %v341
        %v346 = vmul.f32 %v314, %v335
        %v347 = vmul.f32 %v315, %v345
        %v349 = vperm.slane %v299, 0
        %v351 = vmul.f32 %v346, %v349
        %v352 = vmul.f32 %v347, %v349
        %v354 = vperm.slane %v300, 0
        %v356 = vadd.f32 %v351, %v354
        %v357 = vadd.f32 %v352, %v354
        %v358 = vpack.c.bf16 %v357, %v356
        %v359 = vld [vmem:[#allocation3] sm:$0xff]
        %v360 = vld [vmem:[#allocation3 + $0x8] sm:$0xf]
        %v361 = vld [vmem:[#allocation3 + $0xc] sm:$0xff]
        %v362 = vld [vmem:[#allocation3 + $0x14] sm:$0xf]
        %v363 = vld [vmem:[#allocation3 + $0x18] sm:$0xff]
        %v364 = vld [vmem:[#allocation3 + $0x20] sm:$0xf]
        %v365 = vld [vmem:[#allocation3 + $0x24] sm:$0xff]
        %v366 = vld [vmem:[#allocation3 + $0x2c] sm:$0xf]
        %v367 = vld [vmem:[#allocation3 + $0x30] sm:$0xff]
        %v368 = vld [vmem:[#allocation3 + $0x38] sm:$0xf]
        %v369 = vld [vmem:[#allocation3 + $0x3c] sm:$0xff]
        %v370 = vld [vmem:[#allocation3 + $0x44] sm:$0xf]
        %v371 = vld [vmem:[#allocation3 + $0x48] sm:$0xff]
        %v372 = vld [vmem:[#allocation3 + $0x50] sm:$0xf]
        %v373 = vld [vmem:[#allocation3 + $0x54] sm:$0xff]
        %v374 = vld [vmem:[#allocation3 + $0x5c] sm:$0xf]
        %v375 = vld [vmem:[#allocation3 + $0x60] sm:$0xff]
        %v376 = vld [vmem:[#allocation3 + $0x68] sm:$0xf]
        %v377 = vld [vmem:[#allocation3 + $0x6c] sm:$0xff]
        %v378 = vld [vmem:[#allocation3 + $0x74] sm:$0xf]
        %v379 = vld [vmem:[#allocation3 + $0x78] sm:$0xff]
        %v380 = vld [vmem:[#allocation3 + $0x80] sm:$0xf]
        %v381 = vld [vmem:[#allocation3 + $0x84] sm:$0xff]
        %v382 = vld [vmem:[#allocation3 + $0x8c] sm:$0xf]
        %v383 = vld [vmem:[#allocation3 + $0x90] sm:$0xff]
        %v384 = vld [vmem:[#allocation3 + $0x98] sm:$0xf]
        %v385 = vld [vmem:[#allocation3 + $0x9c] sm:$0xff]
        %v386 = vld [vmem:[#allocation3 + $0xa4] sm:$0xf]
        %v387 = vld [vmem:[#allocation3 + $0xa8] sm:$0xff]
        %v388 = vld [vmem:[#allocation3 + $0xb0] sm:$0xf]
        %v389 = vld [vmem:[#allocation3 + $0xb4] sm:$0xff]
        %v390 = vld [vmem:[#allocation3 + $0xbc] sm:$0xf]
        %v391 = vld [vmem:[%s4] sm:$0x7]
        %v393 = vperm.slane %v391, 0
        %v394 = vperm.slane %v391, 1
        %v395 = vperm.slane %v391, 2
        %v431 = vunpack.c.l.b16 %v359
        %v432 = vunpack.c.h.b16 %v359
        %v433 = vunpack.c.l.b16 %v360
        %v434 = vunpack.c.l.b16 %v361
        %v435 = vunpack.c.h.b16 %v361
        %v436 = vunpack.c.l.b16 %v362
        %v437 = vunpack.c.l.b16 %v363
        %v438 = vunpack.c.h.b16 %v363
        %v439 = vunpack.c.l.b16 %v364
        %v440 = vunpack.c.l.b16 %v365
        %v441 = vunpack.c.h.b16 %v365
        %v442 = vunpack.c.l.b16 %v366
        %v443 = vunpack.c.l.b16 %v367
        %v444 = vunpack.c.h.b16 %v367
        %v445 = vunpack.c.l.b16 %v368
        %v446 = vunpack.c.l.b16 %v369
        %v447 = vunpack.c.h.b16 %v369
        %v448 = vunpack.c.l.b16 %v370
        %v449 = vunpack.c.l.b16 %v371
        %v450 = vunpack.c.h.b16 %v371
        %v451 = vunpack.c.l.b16 %v372
        %v452 = vunpack.c.l.b16 %v373
        %v453 = vunpack.c.h.b16 %v373
        %v454 = vunpack.c.l.b16 %v374
        %v455 = vunpack.c.l.b16 %v375
        %v456 = vunpack.c.h.b16 %v375
        %v457 = vunpack.c.l.b16 %v376
        %v458 = vunpack.c.l.b16 %v377
        %v459 = vunpack.c.h.b16 %v377
        %v460 = vunpack.c.l.b16 %v378
        %v461 = vunpack.c.l.b16 %v379
        %v462 = vunpack.c.h.b16 %v379
        %v463 = vunpack.c.l.b16 %v380
        %v464 = vunpack.c.l.b16 %v381
        %v465 = vunpack.c.h.b16 %v381
        %v466 = vunpack.c.l.b16 %v382
        %v467 = vunpack.c.l.b16 %v383
        %v468 = vunpack.c.h.b16 %v383
        %v469 = vunpack.c.l.b16 %v384
        %v470 = vunpack.c.l.b16 %v385
        %v471 = vunpack.c.h.b16 %v385
        %v472 = vunpack.c.l.b16 %v386
        %v473 = vunpack.c.l.b16 %v387
        %v474 = vunpack.c.h.b16 %v387
        %v475 = vunpack.c.l.b16 %v388
        %v476 = vunpack.c.l.b16 %v389
        %v477 = vunpack.c.h.b16 %v389
        %v478 = vunpack.c.l.b16 %v390
        %v479 = vpack.c.b16 %v434, %v431
        %v480 = vpack.c.b16 %v435, %v432
        %v481 = vpack.c.b16 %v436, %v433
        %v482 = vpack.c.b16 %v440, %v437
        %v483 = vpack.c.b16 %v441, %v438
        %v484 = vpack.c.b16 %v442, %v439
        %v485 = vpack.c.b16 %v446, %v443
        %v486 = vpack.c.b16 %v447, %v444
        %v487 = vpack.c.b16 %v448, %v445
        %v488 = vpack.c.b16 %v452, %v449
        %v489 = vpack.c.b16 %v453, %v450
        %v490 = vpack.c.b16 %v454, %v451
        %v491 = vpack.c.b16 %v458, %v455
        %v492 = vpack.c.b16 %v459, %v456
        %v493 = vpack.c.b16 %v460, %v457
        %v494 = vpack.c.b16 %v464, %v461
        %v495 = vpack.c.b16 %v465, %v462
        %v496 = vpack.c.b16 %v466, %v463
        %v497 = vpack.c.b16 %v470, %v467
        %v498 = vpack.c.b16 %v471, %v468
        %v499 = vpack.c.b16 %v472, %v469
        %v500 = vpack.c.b16 %v476, %v473
        %v501 = vpack.c.b16 %v477, %v474
        %v502 = vpack.c.b16 %v478, %v475
        %527 = vmatpush.bf16.msra.mxu0 %v500
        %528 = vmatpush.bf16.msra.mxu0 %v497
        %529 = vmatpush.bf16.msra.mxu0 %v494
        %530 = vmatpush.bf16.msra.mxu0 %v491
        %531 = vmatpush.bf16.msra.mxu0 %v488
        %532 = vmatpush.bf16.msra.mxu0 %v485
        %533 = vmatpush.bf16.msra.mxu0 %v482
        %534 = vmatpush.bf16.msra.mxu0 %v479
        %535 = vmatmul.bf16.gmra.mxu0 %v358
        %v536 = vpop.f32.mrf.mxu0
        %v537 = vadd.f32 %v393, %v536
        %v538 = vpop.f32.mrf.mxu0
        %v539 = vadd.f32 %v393, %v538
        %540 = vdwg.mxu0
        %541 = vmatpush.bf16.msra.mxu0 %v501
        %542 = vmatpush.bf16.msra.mxu0 %v498
        %543 = vmatpush.bf16.msra.mxu0 %v495
        %544 = vmatpush.bf16.msra.mxu0 %v492
        %545 = vmatpush.bf16.msra.mxu0 %v489
        %546 = vmatpush.bf16.msra.mxu0 %v486
        %547 = vmatpush.bf16.msra.mxu0 %v483
        %548 = vmatpush.bf16.msra.mxu0 %v480
        %549 = vmatmul.bf16.gmra.mxu0 %v358
        %v550 = vpop.f32.mrf.mxu0
        %v551 = vadd.f32 %v394, %v550
        %v552 = vpop.f32.mrf.mxu0
        %v553 = vadd.f32 %v394, %v552
        %554 = vdwg.mxu0
        %555 = vmatpush.bf16.msra.mxu0 %v502
        %556 = vmatpush.bf16.msra.mxu0 %v499
        %557 = vmatpush.bf16.msra.mxu0 %v496
        %558 = vmatpush.bf16.msra.mxu0 %v493
        %559 = vmatpush.bf16.msra.mxu0 %v490
        %560 = vmatpush.bf16.msra.mxu0 %v487
        %561 = vmatpush.bf16.msra.mxu0 %v484
        %562 = vmatpush.bf16.msra.mxu0 %v481
        %563 = vmatmul.bf16.gmra.mxu0 %v358
        %v564 = vpop.f32.mrf.mxu0
        %v565 = vadd.f32 %v395, %v564
        %v566 = vpop.f32.mrf.mxu0
        %v567 = vadd.f32 %v395, %v566
        %568 = vdwg.mxu0
        %v569 = vpack.c.bf16 %v551, %v537
        %v570 = vpack.c.bf16 %v565, %v565
        %v571 = vpack.c.bf16 %v553, %v539
        %v572 = vpack.c.bf16 %v567, %v567
        %v573 = vlaneseq
        %v574 = vshrl.u32 %v573, 7
        %v575 = vadd.s32 %v574, 8
        %v576 = vlaneseq
        %v577 = vand.u32 %v576, 127
        %vm578 = vcmp.le.s32.totalorder %v577, %v574
        %vm579 = vcmp.le.s32.totalorder %v577, %v575
        %v580 = vsel %vm578, 0.0, -1e+30
        %v581 = vsel %vm579, 0.0, -1e+30
        %v584 = vunpack.c.l.b16 %v569
        %v585 = vunpack.c.l.b16 %v571
        %v586 = vpack.c.b16 %v585, %v584
        %v587 = vunpack.c.h.b16 %v569
        %v588 = vunpack.c.h.b16 %v571
        %v589 = vpack.c.b16 %v588, %v587
        %vm590 = vcmask 261120
        %v592 = vsel %vm590, %v586, 0
        %v595 = vsel %vm590, %v589, 0
        %597 = vmatpush.bf16.xpose.msra.mxu0 0
        %598 = vmatpush.bf16.xpose.msra.mxu0 0
        %599 = vmatpush.bf16.xpose.msra.mxu0 0
        %600 = vmatpush.bf16.xpose.msra.mxu0 0
        %601 = vmatpush.bf16.xpose.msra.mxu0 0
        %602 = vmatpush.bf16.xpose.msra.mxu0 0
        %603 = vmatpush.bf16.xpose.msra.mxu0 0
        %604 = vmatpush.bf16.xpose.msra.mxu0 %v595
        %605 = vmatmul.bf16.gmra.mxu0 %v592
        %v606 = vpop.f32.mrf.mxu0
        %v607 = vadd.f32 0.0, %v606
        %v608 = vpop.f32.mrf.mxu0
        %v609 = vadd.f32 0.0, %v608
        %610 = vdwg.mxu0
        %v611 = vmul.f32 %v607, 0.17677669
        %v612 = vmul.f32 %v609, 0.17677669
        %v613 = vadd.f32 %v611, %v580
        %v614 = vadd.f32 %v612, %v581
        %vm615 = vcmask 130048
        %v616 = vsel %vm615, %v613, -inf
        %617 = vmax.xlane.f32.xlu0 %v616
        %v618 = vpop.xlane.xlu0 %617
        %v619 = vsel %vm615, %v614, -inf
        %620 = vmax.xlane.f32.xlu0 %v619
        %v621 = vpop.xlane.xlu0 %620
        %v622 = vsub.f32 %v613, %v618
        %v623 = vsub.f32 %v614, %v621
        %v624 = vmul.f32 %v622, 1.442695
        %v625 = vpow.pop %v624
        %v626 = vmul.f32 %v623, 1.442695
        %v627 = vpow.pop %v626
        %v628 = vsel %vm615, %v625, 0.0
        %629 = vadd.xlane.f32.xlu0 %v628
        %v630 = vpop.xlane.xlu0 %629
        %v631 = vsel %vm615, %v627, 0.0
        %632 = vadd.xlane.f32.xlu0 %v631
        %v633 = vpop.xlane.xlu0 %632
        %v634 = vpack.c.bf16 %v627, %v625
        %v637 = vunpack.c.l.b16 %v570
        %v638 = vunpack.c.l.b16 %v572
        %v639 = vpack.c.b16 %v638, %v637
        %v642 = vsel %vm615, %v634, 0
        %644 = vmatpush.bf16.msra.mxu0 0
        %645 = vmatpush.bf16.msra.mxu0 0
        %646 = vmatpush.bf16.msra.mxu0 0
        %647 = vmatpush.bf16.msra.mxu0 0
        %648 = vmatpush.bf16.msra.mxu0 0
        %649 = vmatpush.bf16.msra.mxu0 0
        %650 = vmatpush.bf16.msra.mxu0 0
        %651 = vmatpush.bf16.msra.mxu0 %v639
        %652 = vmatmul.bf16.gmra.mxu0 %v642
        %v653 = vpop.f32.mrf.mxu0
        %v654 = vadd.f32 0.0, %v653
        %v655 = vpop.f32.mrf.mxu0
        %v656 = vadd.f32 0.0, %v655
        %657 = vdwg.mxu0
        %v658 = vrcp.pop %v630
        %v659 = vrcp.pop %v633
        %v660 = vmul.f32 %v654, %v658
        %v661 = vmul.f32 %v656, %v659
        %v662 = vpack.c.bf16 %v660, %v660
        %v663 = vpack.c.bf16 %v661, %v661
        %vm664 = vcmask 257024
        %665 = vst.msk [vmem:[#allocation2] sm:$0xf] %vm664, %v662
        %666 = vst.msk [vmem:[#allocation2 + $0x4] sm:$0xf] %vm664, %v663
        %667 = vrot.lane.b32.xlu0 %v586, 96
        %v668 = vpop.permute.xlu0 %667
        %669 = vrot.lane.b32.xlu0 %v589, 96
        %v670 = vpop.permute.xlu0 %669
        %v672 = vsel %vm590, %v668, 0
        %v675 = vsel %vm590, %v670, 0
        %677 = vmatpush.bf16.xpose.msra.mxu0 0
        %678 = vmatpush.bf16.xpose.msra.mxu0 0
        %679 = vmatpush.bf16.xpose.msra.mxu0 0
        %680 = vmatpush.bf16.xpose.msra.mxu0 0
        %681 = vmatpush.bf16.xpose.msra.mxu0 0
        %682 = vmatpush.bf16.xpose.msra.mxu0 0
        %683 = vmatpush.bf16.xpose.msra.mxu0 0
        %684 = vmatpush.bf16.xpose.msra.mxu0 %v675
        %685 = vmatmul.bf16.gmra.mxu0 %v672
        %v686 = vpop.f32.mrf.mxu0
        %v687 = vadd.f32 0.0, %v686
        %v688 = vpop.f32.mrf.mxu0
        %v689 = vadd.f32 0.0, %v688
        %690 = vdwg.mxu0
        %v691 = vmul.f32 %v687, 0.17677669
        %v692 = vmul.f32 %v689, 0.17677669
        %v693 = vadd.f32 %v691, %v580
        %v694 = vadd.f32 %v692, %v581
        %v695 = vsel %vm615, %v693, -inf
        %696 = vmax.xlane.f32.xlu0 %v695
        %v697 = vpop.xlane.xlu0 %696
        %v698 = vsel %vm615, %v694, -inf
        %699 = vmax.xlane.f32.xlu0 %v698
        %v700 = vpop.xlane.xlu0 %699
        %v701 = vsub.f32 %v693, %v697
        %v702 = vsub.f32 %v694, %v700
        %v703 = vmul.f32 %v701, 1.442695
        %v704 = vpow.pop %v703
        %v705 = vmul.f32 %v702, 1.442695
        %v706 = vpow.pop %v705
        %v707 = vsel %vm615, %v704, 0.0
        %708 = vadd.xlane.f32.xlu0 %v707
        %v709 = vpop.xlane.xlu0 %708
        %v710 = vsel %vm615, %v706, 0.0
        %711 = vadd.xlane.f32.xlu0 %v710
        %v712 = vpop.xlane.xlu0 %711
        %v713 = vpack.c.bf16 %v706, %v704
        %714 = vrot.lane.b32.xlu0 %v639, 96
        %v715 = vpop.permute.xlu0 %714
        %v718 = vsel %vm615, %v713, 0
        %720 = vmatpush.bf16.msra.mxu0 0
        %721 = vmatpush.bf16.msra.mxu0 0
        %722 = vmatpush.bf16.msra.mxu0 0
        %723 = vmatpush.bf16.msra.mxu0 0
        %724 = vmatpush.bf16.msra.mxu0 0
        %725 = vmatpush.bf16.msra.mxu0 0
        %726 = vmatpush.bf16.msra.mxu0 0
        %727 = vmatpush.bf16.msra.mxu0 %v715
        %728 = vmatmul.bf16.gmra.mxu0 %v718
        %v729 = vpop.f32.mrf.mxu0
        %v730 = vadd.f32 0.0, %v729
        %v731 = vpop.f32.mrf.mxu0
        %v732 = vadd.f32 0.0, %v731
        %733 = vdwg.mxu0
        %v734 = vrcp.pop %v709
        %v735 = vrcp.pop %v712
        %v736 = vmul.f32 %v730, %v734
        %v737 = vmul.f32 %v732, %v735
        %v738 = vpack.c.bf16 %v736, %v736
        %v739 = vpack.c.bf16 %v737, %v737
        %742 = vrot.lane.b32.xlu0 %v738, 32
        %v743 = vpop.permute.xlu0 %742
        %744 = vrot.lane.b32.xlu0 %v739, 32
        %v745 = vpop.permute.xlu0 %744
        %vm748 = vcmask 519424
        %749 = vst.msk [vmem:[#allocation2] sm:$0xf] %vm748, %v743
        %750 = vst.msk [vmem:[#allocation2 + $0x4] sm:$0xf] %vm748, %v745
        %751 = vrot.lane.b32.xlu0 %v586, 64
        %v752 = vpop.permute.xlu0 %751
        %753 = vrot.lane.b32.xlu0 %v589, 64
        %v754 = vpop.permute.xlu0 %753
        %v756 = vsel %vm590, %v752, 0
        %v759 = vsel %vm590, %v754, 0
        %761 = vmatpush.bf16.xpose.msra.mxu0 0
        %762 = vmatpush.bf16.xpose.msra.mxu0 0
        %763 = vmatpush.bf16.xpose.msra.mxu0 0
        %764 = vmatpush.bf16.xpose.msra.mxu0 0
        %765 = vmatpush.bf16.xpose.msra.mxu0 0
        %766 = vmatpush.bf16.xpose.msra.mxu0 0
        %767 = vmatpush.bf16.xpose.msra.mxu0 0
        %768 = vmatpush.bf16.xpose.msra.mxu0 %v759
        %769 = vmatmul.bf16.gmra.mxu0 %v756
        %v770 = vpop.f32.mrf.mxu0
        %v771 = vadd.f32 0.0, %v770
        %v772 = vpop.f32.mrf.mxu0
        %v773 = vadd.f32 0.0, %v772
        %774 = vdwg.mxu0
        %v775 = vmul.f32 %v771, 0.17677669
        %v776 = vmul.f32 %v773, 0.17677669
        %v777 = vadd.f32 %v775, %v580
        %v778 = vadd.f32 %v776, %v581
        %v779 = vsel %vm615, %v777, -inf
        %780 = vmax.xlane.f32.xlu0 %v779
        %v781 = vpop.xlane.xlu0 %780
        %v782 = vsel %vm615, %v778, -inf
        %783 = vmax.xlane.f32.xlu0 %v782
        %v784 = vpop.xlane.xlu0 %783
        %v785 = vsub.f32 %v777, %v781
        %v786 = vsub.f32 %v778, %v784
        %v787 = vmul.f32 %v785, 1.442695
        %v788 = vpow.pop %v787
        %v789 = vmul.f32 %v786, 1.442695
        %v790 = vpow.pop %v789
        %v791 = vsel %vm615, %v788, 0.0
        %792 = vadd.xlane.f32.xlu0 %v791
        %v793 = vpop.xlane.xlu0 %792
        %v794 = vsel %vm615, %v790, 0.0
        %795 = vadd.xlane.f32.xlu0 %v794
        %v796 = vpop.xlane.xlu0 %795
        %v797 = vpack.c.bf16 %v790, %v788
        %798 = vrot.lane.b32.xlu0 %v639, 64
        %v799 = vpop.permute.xlu0 %798
        %v802 = vsel %vm615, %v797, 0
        %804 = vmatpush.bf16.msra.mxu0 0
        %805 = vmatpush.bf16.msra.mxu0 0
        %806 = vmatpush.bf16.msra.mxu0 0
        %807 = vmatpush.bf16.msra.mxu0 0
        %808 = vmatpush.bf16.msra.mxu0 0
        %809 = vmatpush.bf16.msra.mxu0 0
        %810 = vmatpush.bf16.msra.mxu0 0
        %811 = vmatpush.bf16.msra.mxu0 %v799
        %812 = vmatmul.bf16.gmra.mxu0 %v802
        %v813 = vpop.f32.mrf.mxu0
        %v814 = vadd.f32 0.0, %v813
        %v815 = vpop.f32.mrf.mxu0
        %v816 = vadd.f32 0.0, %v815
        %817 = vdwg.mxu0
        %v818 = vrcp.pop %v793
        %v819 = vrcp.pop %v796
        %v820 = vmul.f32 %v814, %v818
        %v821 = vmul.f32 %v816, %v819
        %v822 = vpack.c.bf16 %v820, %v820
        %v823 = vpack.c.bf16 %v821, %v821
        %826 = vrot.lane.b32.xlu0 %v822, 64
        %v827 = vpop.permute.xlu0 %826
        %828 = vrot.lane.b32.xlu0 %v823, 64
        %v829 = vpop.permute.xlu0 %828
        %vm832 = vcmask 781824
        %833 = vst.msk [vmem:[#allocation2] sm:$0xf] %vm832, %v827
        %834 = vst.msk [vmem:[#allocation2 + $0x4] sm:$0xf] %vm832, %v829
        %835 = vrot.lane.b32.xlu0 %v586, 32
        %v836 = vpop.permute.xlu0 %835
        %837 = vrot.lane.b32.xlu0 %v589, 32
        %v838 = vpop.permute.xlu0 %837
        %v840 = vsel %vm590, %v836, 0
        %v843 = vsel %vm590, %v838, 0
        %845 = vmatpush.bf16.xpose.msra.mxu0 0
        %846 = vmatpush.bf16.xpose.msra.mxu0 0
        %847 = vmatpush.bf16.xpose.msra.mxu0 0
        %848 = vmatpush.bf16.xpose.msra.mxu0 0
        %849 = vmatpush.bf16.xpose.msra.mxu0 0
        %850 = vmatpush.bf16.xpose.msra.mxu0 0
        %851 = vmatpush.bf16.xpose.msra.mxu0 0
        %852 = vmatpush.bf16.xpose.msra.mxu0 %v843
        %853 = vmatmul.bf16.gmra.mxu0 %v840
        %v854 = vpop.f32.mrf.mxu0
        %v855 = vadd.f32 0.0, %v854
        %v856 = vpop.f32.mrf.mxu0
        %v857 = vadd.f32 0.0, %v856
        %858 = vdwg.mxu0
        %v859 = vmul.f32 %v855, 0.17677669
        %v860 = vmul.f32 %v857, 0.17677669
        %v861 = vadd.f32 %v859, %v580
        %v862 = vadd.f32 %v860, %v581
        %v863 = vsel %vm615, %v861, -inf
        %864 = vmax.xlane.f32.xlu0 %v863
        %v865 = vpop.xlane.xlu0 %864
        %v866 = vsel %vm615, %v862, -inf
        %867 = vmax.xlane.f32.xlu0 %v866
        %v868 = vpop.xlane.xlu0 %867
        %v869 = vsub.f32 %v861, %v865
        %v870 = vsub.f32 %v862, %v868
        %v871 = vmul.f32 %v869, 1.442695
        %v872 = vpow.pop %v871
        %v873 = vmul.f32 %v870, 1.442695
        %v874 = vpow.pop %v873
        %v875 = vsel %vm615, %v872, 0.0
        %876 = vadd.xlane.f32.xlu0 %v875
        %v877 = vpop.xlane.xlu0 %876
        %v878 = vsel %vm615, %v874, 0.0
        %879 = vadd.xlane.f32.xlu0 %v878
        %v880 = vpop.xlane.xlu0 %879
        %v881 = vpack.c.bf16 %v874, %v872
        %882 = vrot.lane.b32.xlu0 %v639, 32
        %v883 = vpop.permute.xlu0 %882
        %v886 = vsel %vm615, %v881, 0
        %888 = vmatpush.bf16.msra.mxu0 0
        %889 = vmatpush.bf16.msra.mxu0 0
        %890 = vmatpush.bf16.msra.mxu0 0
        %891 = vmatpush.bf16.msra.mxu0 0
        %892 = vmatpush.bf16.msra.mxu0 0
        %893 = vmatpush.bf16.msra.mxu0 0
        %894 = vmatpush.bf16.msra.mxu0 0
        %895 = vmatpush.bf16.msra.mxu0 %v883
        %896 = vmatmul.bf16.gmra.mxu0 %v886
        %v897 = vpop.f32.mrf.mxu0
        %v898 = vadd.f32 0.0, %v897
        %v899 = vpop.f32.mrf.mxu0
        %v900 = vadd.f32 0.0, %v899
        %901 = vdwg.mxu0
        %v902 = vrcp.pop %v877
        %v903 = vrcp.pop %v880
        %v904 = vmul.f32 %v898, %v902
        %v905 = vmul.f32 %v900, %v903
        %v906 = vpack.c.bf16 %v904, %v904
        %v907 = vpack.c.bf16 %v905, %v905
        %910 = vrot.lane.b32.xlu0 %v906, 96
        %v911 = vpop.permute.xlu0 %910
        %912 = vrot.lane.b32.xlu0 %v907, 96
        %v913 = vpop.permute.xlu0 %912
        %vm916 = vcmask 1044224
        %917 = vst.msk [vmem:[#allocation2] sm:$0xf] %vm916, %v911
        %918 = vst.msk [vmem:[#allocation2 + $0x4] sm:$0xf] %vm916, %v913
        %v919 = vld [vmem:[#allocation2] sm:$0xf]
        %v920 = vld [vmem:[#allocation2 + $0x4] sm:$0xf]
        %v921 = vld [vmem:[%s5] sm:$0xf]
        %v922 = vld [vmem:[%s5 + $0x4] sm:$0xf]
        %v923 = vld [vmem:[%s5 + $0x8] sm:$0xf]
        %v924 = vld [vmem:[%s5 + $0xc] sm:$0xf]
        %v925 = vld [vmem:[%s5 + $0x10] sm:$0xf]
        %v926 = vld [vmem:[%s5 + $0x14] sm:$0xf]
        %v927 = vld [vmem:[%s5 + $0x18] sm:$0xf]
        %v928 = vld [vmem:[%s5 + $0x1c] sm:$0xf]
        %v929 = vld [vmem:[%s5 + $0x20] sm:$0xf]
        %v930 = vld [vmem:[%s5 + $0x24] sm:$0xf]
        %v931 = vld [vmem:[%s5 + $0x28] sm:$0xf]
        %v932 = vld [vmem:[%s5 + $0x2c] sm:$0xf]
        %v933 = vld [vmem:[%s5 + $0x30] sm:$0xf]
        %v934 = vld [vmem:[%s5 + $0x34] sm:$0xf]
        %v935 = vld [vmem:[%s5 + $0x38] sm:$0xf]
        %v936 = vld [vmem:[%s5 + $0x3c] sm:$0xf]
        %v937 = vld [vmem:[%s6] sm:$0x1]
        %v939 = vperm.slane %v937, 0
        %v943 = vunpack.c.l.b16 %v919
        %v944 = vunpack.c.l.b16 %v920
        %v945 = vpack.c.b16 %v944, %v943
        %v963 = vunpack.c.l.b16 %v921
        %v964 = vunpack.c.l.b16 %v922
        %v965 = vunpack.c.l.b16 %v923
        %v966 = vunpack.c.l.b16 %v924
        %v967 = vunpack.c.l.b16 %v925
        %v968 = vunpack.c.l.b16 %v926
        %v969 = vunpack.c.l.b16 %v927
        %v970 = vunpack.c.l.b16 %v928
        %v971 = vunpack.c.l.b16 %v929
        %v972 = vunpack.c.l.b16 %v930
        %v973 = vunpack.c.l.b16 %v931
        %v974 = vunpack.c.l.b16 %v932
        %v975 = vunpack.c.l.b16 %v933
        %v976 = vunpack.c.l.b16 %v934
        %v977 = vunpack.c.l.b16 %v935
        %v978 = vunpack.c.l.b16 %v936
        %v979 = vpack.c.b16 %v964, %v963
        %v980 = vpack.c.b16 %v966, %v965
        %v981 = vpack.c.b16 %v968, %v967
        %v982 = vpack.c.b16 %v970, %v969
        %v983 = vpack.c.b16 %v972, %v971
        %v984 = vpack.c.b16 %v974, %v973
        %v985 = vpack.c.b16 %v976, %v975
        %v986 = vpack.c.b16 %v978, %v977
        %995 = vmatpush.bf16.msra.mxu0 %v986
        %996 = vmatpush.bf16.msra.mxu0 %v985
        %997 = vmatpush.bf16.msra.mxu0 %v984
        %998 = vmatpush.bf16.msra.mxu0 %v983
        %999 = vmatpush.bf16.msra.mxu0 %v982
        %1000 = vmatpush.bf16.msra.mxu0 %v981
        %1001 = vmatpush.bf16.msra.mxu0 %v980
        %1002 = vmatpush.bf16.msra.mxu0 %v979
        %1003 = vmatmul.bf16.gmra.mxu0 %v945
        %v1004 = vpop.f32.mrf.mxu0
        %v1005 = vadd.f32 %v939, %v1004
        %v1006 = vpop.f32.mrf.mxu0
        %v1007 = vadd.f32 %v939, %v1006
        %1008 = vdwg.mxu0
        %v1009 = vadd.f32 %v297, %v1005
        %v1010 = vadd.f32 %v298, %v1007
        %1011 = vst [vmem:[%s295] sm:$0xff] %v1009
        %1012 = vst [vmem:[%s295 + $0x8] sm:$0xff] %v1010
        %p1013 = scmp.lt.s32.totalorder %s19, 1
        %s1014 = scalar_select %p1013, %s19, 1
        %s1015 = smul.addr %s1014, 2
        %s1016 = smul.addr %s1015, 8
        %s1017 = scalar_lea.vmem %s7, %s1016
        // Predicated region
        $region53: #{_lambda_.5} parent=47 // pred_check
          %p1018 = pneg %p189
        $region54: #{_lambda_.5} parent=47 // pred_check_branch
          %1020 = sbr.rel (%p1018) target = $region56
        $region55: #{_lambda_.5} parent=47 // pred_region
          _
        $region56: #{_lambda_.5} parent=47 // pred_fallthru
          _
      $region48: #{_lambda_.5} parent=5 // pred_fallthru
        _
      %p1021 = scmp.le.s32.totalorder 2, %s14
      // Predicated region
      $region57: #{_lambda_.5} parent=5 // pred_check
        %p1022 = pneg %p1021
      $region58: #{_lambda_.5} parent=5 // pred_check_branch
        %1024 = sbr.rel (%p1022) target = $region60
      $region59: #{_lambda_.5} parent=5 // pred_region
        %s1025 = ssub.s32 %s14, 2
        // Predicated region
        $region61: #{_lambda_.5} parent=59 // pred_check
          %p1026 = pneg %p195
        $region62: #{_lambda_.5} parent=59 // pred_check_branch
          %1028 = sbr.rel (%p1026) target = $region64
        $region63: #{_lambda_.5} parent=59 // pred_region
          %p1029 = scmp.lt.s32.totalorder %s20, 1
          %s1030 = scalar_select %p1029, %s20, 1
          %s1031 = smul.addr %s1030, 2
          %s1032 = smul.addr %s1031, 8
          %s1033 = scalar_lea.vmem %s7, %s1032
        $region64: #{_lambda_.5} parent=59 // pred_fallthru
          _
      $region60: #{_lambda_.5} parent=5 // pred_fallthru
        _
    $region6: #{_lambda_.5} parent=1 // loop_footer
      %s18 = sadd.s32 1, %s14
    $region7: #{_lambda_.5} parent=1 // loop_footer_branch
      %13 = sbr.rel target = $region3
    $region8: #{_lambda_.5} parent=1 // loop_exit
      _
    %1034 = vsyncpa [#allocation4], 1
    %s1035 = scalar_lea.sflag [#allocation4], 1
    %1036 = vsyncpa %s1035, 1

// kernel: _lambda_.8
$region0: #{_lambda_.8}
  #allocation0 [shape = 'u32[]', space=smem, size = 0x4, offset = 0x4, fixed_abs, tag = 'smem constant byte address 0x4 - core index']
  #allocation1 [shape = 'u32[72,128]{1,0:T(1,128)}', space=vmem, size = 0x9000, scoped, tag = 'internal scratch']
  #allocation2 [shape = 'bf16[16,128]{1,0:T(8,128)(2,1)}', space=vmem, size = 0x1000, scoped, tag = 'scratch operand']
  #allocation3 [shape = 'f32[16,128]{1,0:T(8,128)}', space=vmem, size = 0x2000, scoped, tag = 'scratch operand']
  %s0 = inlined_call_operand.vmem [shape: f32[32,128], index: 0, kind: input, shape index: {}]
  %s1 = inlined_call_operand.vmem [shape: f32[1,128], index: 1, kind: input, shape index: {}]
  %s2 = inlined_call_operand.vmem [shape: f32[1,128], index: 2, kind: input, shape index: {}]
  %s3 = inlined_call_operand.hbm [shape: bf16[128,512], index: 3, kind: input, shape index: {}]
  %s4 = inlined_call_operand.vmem [shape: f32[1,512], index: 4, kind: input, shape index: {}]
  %s5 = inlined_call_operand.hbm [shape: bf16[512,128], index: 5, kind: input, shape index: {}]
  %s6 = inlined_call_operand.vmem [shape: f32[1,128], index: 6, kind: input, shape index: {}]
  %s7 = inlined_call_operand.vmem [shape: f32[32,128], index: 7, kind: output, shape index: {}]
  %s8 = sld [smem:[#allocation0]]
  $region77: #{_lambda_.8} parent=0
    _
  %s10 = ssub.s32 1, %s8
  %s11 = scalar_select 0, %s10, %s8
  $region1: #{_lambda_.8} parent=0
    #allocation4 [shape = 'u8[131072]{0}', space=vmem, size = 0x20000, scoped, tag = 'input window, operand 3, single buffered']
    #allocation5 [shape = 's32[2]{0}', space=sflag, size = 0x8, scoped, tag = 'scoped memory for _lambda_.8']
    #allocation6 [shape = 'u8[131072]{0}', space=vmem, size = 0x20000, scoped, tag = 'input window, operand 5, single buffered']
    #allocation7 [shape = 's32[1]{0}', space=sflag, size = 0x4, scoped, tag = 'scoped memory for _lambda_.8']
    %12 = vsyncpa [#allocation5], 0
    %13 = vsyncpa [#allocation7], 0
    loop: start=0, step=1, limit=4
    $region2: #{_lambda_.8} parent=1 // loop_pre_header
      _
    $region3: #{_lambda_.8} parent=1 // loop_header
      %s15 = sphi 0, %s19
      %p16 = scmp.ge.s32.totalorder %s15, 4
      %s22 = sphi 0, %s34
      %s23 = sphi 0, %s30
      %s24 = sphi 0, %s22
      %s25 = sphi 0, %s23
      %s26 = sphi 0, %s24
      %s27 = sphi 0, %s25
      %s37 = sphi 0, %s39
      %s40 = sphi 0, %s37
      %s41 = sphi 0, %s40
      %s57 = sphi 0, %s41
      %s61 = sphi 0, %s61
      %s63 = sphi 0, %s61
      %s64 = sphi 0, %s63
      %s78 = sphi 0, %s64
      %s82 = sphi 0, %s82
      %s84 = sphi 0, %s82
      %s85 = sphi 0, %s84
      %s99 = sphi 0, %s85
      %s105 = sphi 0, %s107
      %s108 = sphi 0, %s105
      %s109 = sphi 0, %s108
      %s125 = sphi 0, %s109
      %s131 = sphi 0, %s133
      %s134 = sphi 0, %s131
      %s135 = sphi 0, %s134
      %s151 = sphi 0, %s135
      %s157 = sphi 0, %s159
      %s160 = sphi 0, %s157
      %s161 = sphi 0, %s160
      %s177 = sphi 0, %s161
      %s181 = sphi 0, %s181
      %s183 = sphi 0, %s181
      %s184 = sphi 0, %s183
      %s198 = sphi 0, %s184
      %s204 = sphi 0, %s206
      %s207 = sphi 0, %s204
      %s208 = sphi 0, %s207
      %s224 = sphi 0, %s208
    $region4: #{_lambda_.8} parent=1 // loop_header_branch
      %18 = sbr.rel (%p16) target = $region8
    $region5: #{_lambda_.8} parent=1 // loop_body
      %s20 = ssub.s32 %s15, 1
      %s21 = ssub.s32 %s15, 2
      %s28 = sadd.s32 1, %s23
      %p29 = scmp.ge.s32.totalorder %s28, 1
      %s30 = scalar_select %p29, 0, %s28
      %s31 = sadd.s32 1, %s22
      %s32 = scalar_select %p29, %s31, %s22
      %p33 = scmp.ge.s32.totalorder %s32, 2
      %s34 = scalar_select %p33, 0, %s32
      %s35 = ssub.s32 %s22, %s34
      %p36 = scmp.eq.s32.totalorder %s35, 0
      %s38 = sadd.s32 %s37, 1
      %s39 = scalar_select %p36, %s37, %s38
      %p42 = pneg %p36
      %p43 = scmp.eq.s32.totalorder %s15, 1
      %p44 = por %p42, %p43
      %p45 = scmp.ne.s32.totalorder %s37, %s40
      %p46 = scmp.eq.s32.totalorder %s15, 0
      %p47 = por %p45, %p46
      %p48 = scmp.ne.s32.totalorder %s37, %s40
      %p49 = scmp.eq.s32.totalorder %s20, 1
      %p50 = por %p48, %p49
      %p51 = scmp.ne.s32.totalorder %s40, %s41
      %p52 = scmp.eq.s32.totalorder %s20, 0
      %p53 = por %p51, %p52
      %p54 = scmp.ne.s32.totalorder %s40, %s41
      %p55 = scmp.eq.s32.totalorder %s21, 1
      %p56 = por %p54, %p55
      %p58 = scmp.ne.s32.totalorder %s41, %s57
      %p59 = scmp.eq.s32.totalorder %s21, 0
      %p60 = por %p58, %p59
      %s62 = sadd.s32 %s61, 1
      %p65 = scmp.eq.s32.totalorder %s15, 1
      %p66 = scmp.ne.s32.totalorder %s61, %s63
      %p67 = scmp.eq.s32.totalorder %s15, 0
      %p68 = por %p66, %p67
      %p69 = scmp.ne.s32.totalorder %s61, %s63
      %p70 = scmp.eq.s32.totalorder %s20, 1
      %p71 = por %p69, %p70
      %p72 = scmp.ne.s32.totalorder %s63, %s64
      %p73 = scmp.eq.s32.totalorder %s20, 0
      %p74 = por %p72, %p73
      %p75 = scmp.ne.s32.totalorder %s63, %s64
      %p76 = scmp.eq.s32.totalorder %s21, 1
      %p77 = por %p75, %p76
      %p79 = scmp.ne.s32.totalorder %s64, %s78
      %p80 = scmp.eq.s32.totalorder %s21, 0
      %p81 = por %p79, %p80
      %s83 = sadd.s32 %s82, 1
      %p86 = scmp.eq.s32.totalorder %s15, 1
      %p87 = scmp.ne.s32.totalorder %s82, %s84
      %p88 = scmp.eq.s32.totalorder %s15, 0
      %p89 = por %p87, %p88
      %p90 = scmp.ne.s32.totalorder %s82, %s84
      %p91 = scmp.eq.s32.totalorder %s20, 1
      %p92 = por %p90, %p91
      %p93 = scmp.ne.s32.totalorder %s84, %s85
      %p94 = scmp.eq.s32.totalorder %s20, 0
      %p95 = por %p93, %p94
      %p96 = scmp.ne.s32.totalorder %s84, %s85
      %p97 = scmp.eq.s32.totalorder %s21, 1
      %p98 = por %p96, %p97
      %p100 = scmp.ne.s32.totalorder %s85, %s99
      %p101 = scmp.eq.s32.totalorder %s21, 0
      %p102 = por %p100, %p101
      %s103 = ssub.s32 %s23, %s30
      %p104 = scmp.eq.s32.totalorder %s103, 0
      %s106 = sadd.s32 %s105, 1
      %s107 = scalar_select %p104, %s105, %s106
      %p110 = pneg %p104
      %p111 = scmp.eq.s32.totalorder %s15, 1
      %p112 = por %p110, %p111
      %p113 = scmp.ne.s32.totalorder %s105, %s108
      %p114 = scmp.eq.s32.totalorder %s15, 0
      %p115 = por %p113, %p114
      %p116 = scmp.ne.s32.totalorder %s105, %s108
      %p117 = scmp.eq.s32.totalorder %s20, 1
      %p118 = por %p116, %p117
      %p119 = scmp.ne.s32.totalorder %s108, %s109
      %p120 = scmp.eq.s32.totalorder %s20, 0
      %p121 = por %p119, %p120
      %p122 = scmp.ne.s32.totalorder %s108, %s109
      %p123 = scmp.eq.s32.totalorder %s21, 1
      %p124 = por %p122, %p123
      %p126 = scmp.ne.s32.totalorder %s109, %s125
      %p127 = scmp.eq.s32.totalorder %s21, 0
      %p128 = por %p126, %p127
      %s129 = ssub.s32 %s23, %s30
      %p130 = scmp.eq.s32.totalorder %s129, 0
      %s132 = sadd.s32 %s131, 1
      %s133 = scalar_select %p130, %s131, %s132
      %p136 = pneg %p130
      %p137 = scmp.eq.s32.totalorder %s15, 1
      %p138 = por %p136, %p137
      %p139 = scmp.ne.s32.totalorder %s131, %s134
      %p140 = scmp.eq.s32.totalorder %s15, 0
      %p141 = por %p139, %p140
      %p142 = scmp.ne.s32.totalorder %s131, %s134
      %p143 = scmp.eq.s32.totalorder %s20, 1
      %p144 = por %p142, %p143
      %p145 = scmp.ne.s32.totalorder %s134, %s135
      %p146 = scmp.eq.s32.totalorder %s20, 0
      %p147 = por %p145, %p146
      %p148 = scmp.ne.s32.totalorder %s134, %s135
      %p149 = scmp.eq.s32.totalorder %s21, 1
      %p150 = por %p148, %p149
      %p152 = scmp.ne.s32.totalorder %s135, %s151
      %p153 = scmp.eq.s32.totalorder %s21, 0
      %p154 = por %p152, %p153
      %s155 = ssub.s32 %s23, %s30
      %p156 = scmp.eq.s32.totalorder %s155, 0
      %s158 = sadd.s32 %s157, 1
      %s159 = scalar_select %p156, %s157, %s158
      %p162 = pneg %p156
      %p163 = scmp.eq.s32.totalorder %s15, 1
      %p164 = por %p162, %p163
      %p165 = scmp.ne.s32.totalorder %s157, %s160
      %p166 = scmp.eq.s32.totalorder %s15, 0
      %p167 = por %p165, %p166
      %p168 = scmp.ne.s32.totalorder %s157, %s160
      %p169 = scmp.eq.s32.totalorder %s20, 1
      %p170 = por %p168, %p169
      %p171 = scmp.ne.s32.totalorder %s160, %s161
      %p172 = scmp.eq.s32.totalorder %s20, 0
      %p173 = por %p171, %p172
      %p174 = scmp.ne.s32.totalorder %s160, %s161
      %p175 = scmp.eq.s32.totalorder %s21, 1
      %p176 = por %p174, %p175
      %p178 = scmp.ne.s32.totalorder %s161, %s177
      %p179 = scmp.eq.s32.totalorder %s21, 0
      %p180 = por %p178, %p179
      %s182 = sadd.s32 %s181, 1
      %p185 = scmp.eq.s32.totalorder %s15, 1
      %p186 = scmp.ne.s32.totalorder %s181, %s183
      %p187 = scmp.eq.s32.totalorder %s15, 0
      %p188 = por %p186, %p187
      %p189 = scmp.ne.s32.totalorder %s181, %s183
      %p190 = scmp.eq.s32.totalorder %s20, 1
      %p191 = por %p189, %p190
      %p192 = scmp.ne.s32.totalorder %s183, %s184
      %p193 = scmp.eq.s32.totalorder %s20, 0
      %p194 = por %p192, %p193
      %p195 = scmp.ne.s32.totalorder %s183, %s184
      %p196 = scmp.eq.s32.totalorder %s21, 1
      %p197 = por %p195, %p196
      %p199 = scmp.ne.s32.totalorder %s184, %s198
      %p200 = scmp.eq.s32.totalorder %s21, 0
      %p201 = por %p199, %p200
      %s202 = ssub.s32 %s22, %s34
      %p203 = scmp.eq.s32.totalorder %s202, 0
      %s205 = sadd.s32 %s204, 1
      %s206 = scalar_select %p203, %s204, %s205
      %p209 = pneg %p203
      %p210 = scmp.eq.s32.totalorder %s15, 1
      %p211 = por %p209, %p210
      %p212 = scmp.ne.s32.totalorder %s204, %s207
      %p213 = scmp.eq.s32.totalorder %s15, 0
      %p214 = por %p212, %p213
      %p215 = scmp.ne.s32.totalorder %s204, %s207
      %p216 = scmp.eq.s32.totalorder %s20, 1
      %p217 = por %p215, %p216
      %p218 = scmp.ne.s32.totalorder %s207, %s208
      %p219 = scmp.eq.s32.totalorder %s20, 0
      %p220 = por %p218, %p219
      %p221 = scmp.ne.s32.totalorder %s207, %s208
      %p222 = scmp.eq.s32.totalorder %s21, 1
      %p223 = por %p221, %p222
      %p225 = scmp.ne.s32.totalorder %s208, %s224
      %p226 = scmp.eq.s32.totalorder %s21, 0
      %p227 = por %p225, %p226
      %p228 = scmp.le.s32.totalorder 1, %s15
      %p229 = scmp.lt.s32.totalorder %s15, 3
      %p230 = pnand %p228, %p229
      %p231 = pneg %p230
      // Predicated region
      $region9: #{_lambda_.8} parent=5 // pred_check
        _
      $region10: #{_lambda_.8} parent=5 // pred_check_branch
        %233 = sbr.rel (%p230) target = $region12
      $region11: #{_lambda_.8} parent=5 // pred_region
        %s234 = ssub.s32 %s15, 1
        // Predicated region
        $region13: #{_lambda_.8} parent=11 // pred_check
          %p235 = pneg %p74
        $region14: #{_lambda_.8} parent=11 // pred_check_branch
          %237 = sbr.rel (%p235) target = $region16
        $region15: #{_lambda_.8} parent=11 // pred_region
          _
        $region16: #{_lambda_.8} parent=11 // pred_fallthru
          _
        // Predicated region
        $region17: #{_lambda_.8} parent=11 // pred_check
          %p238 = pneg %p95
        $region18: #{_lambda_.8} parent=11 // pred_check_branch
          %240 = sbr.rel (%p238) target = $region20
        $region19: #{_lambda_.8} parent=11 // pred_region
          _
        $region20: #{_lambda_.8} parent=11 // pred_fallthru
          _
        // Predicated region
        $region21: #{_lambda_.8} parent=11 // pred_check
          %p241 = pneg %p121
        $region22: #{_lambda_.8} parent=11 // pred_check_branch
          %243 = sbr.rel (%p241) target = $region24
        $region23: #{_lambda_.8} parent=11 // pred_region
          %s244 = smul.u32 4, %s25
          %246 = vsyncadd [#allocation5], 0
          %s247 = smul.addr %s244, 4
          %s248 = scalar_lea.hbm %s3, %s247
          %s249 = sshll.u32 %s248, 4
          %s250 = int_to_ptr.hbm [resolvable:$true] %s249
          %s251 = sshll.u32 [#allocation4], 4
          %s252 = int_to_ptr.vmem [resolvable:$true] %s251
          %257 = dma.hbm_to_vmem [thread:$0]  %s250, 4096, %s252, [#allocation5], 256, 256, 16
        $region24: #{_lambda_.8} parent=11 // pred_fallthru
          _
        // Predicated region
        $region25: #{_lambda_.8} parent=11 // pred_check
          %p258 = pneg %p147
        $region26: #{_lambda_.8} parent=11 // pred_check_branch
          %260 = sbr.rel (%p258) target = $region28
        $region27: #{_lambda_.8} parent=11 // pred_region
          %s261 = smul.u32 4, %s25
          %p262 = scmp.lt.s32.totalorder %s261, 3
          %s263 = scalar_select %p262, %s261, 3
          %s264 = scalar_lea.vmem %s4, %s263
          %s265 = smul.u32 4, %s25
        $region28: #{_lambda_.8} parent=11 // pred_fallthru
          _
        // Predicated region
        $region29: #{_lambda_.8} parent=11 // pred_check
          %p266 = pneg %p173
        $region30: #{_lambda_.8} parent=11 // pred_check_branch
          %268 = sbr.rel (%p266) target = $region32
        $region31: #{_lambda_.8} parent=11 // pred_region
          %s269 = smul.u32 64, %s25
          %271 = vsyncadd [#allocation7], 0
          %s272 = smul.addr %s269, 4
          %s273 = scalar_lea.hbm %s5, %s272
          %s274 = sshll.u32 %s273, 4
          %s275 = int_to_ptr.hbm [resolvable:$true] %s274
          %s276 = sshll.u32 [#allocation6], 4
          %s277 = int_to_ptr.vmem [resolvable:$true] %s276
          %282 = dma.hbm_to_vmem [thread:$0]  %s275, 4096, %s277, [#allocation7], 64, 64, 4
        $region32: #{_lambda_.8} parent=11 // pred_fallthru
          _
        // Predicated region
        $region33: #{_lambda_.8} parent=11 // pred_check
          %p283 = pneg %p194
        $region34: #{_lambda_.8} parent=11 // pred_check_branch
          %285 = sbr.rel (%p283) target = $region36
        $region35: #{_lambda_.8} parent=11 // pred_region
          _
        $region36: #{_lambda_.8} parent=11 // pred_fallthru
          _
      $region12: #{_lambda_.8} parent=5 // pred_fallthru
        _
      %p286 = scmp.lt.s32.totalorder %s15, 2
      // Predicated region
      $region37: #{_lambda_.8} parent=5 // pred_check
        %p287 = pneg %p286
      $region38: #{_lambda_.8} parent=5 // pred_check_branch
        %289 = sbr.rel (%p287) target = $region40
      $region39: #{_lambda_.8} parent=5 // pred_region
        // Predicated region
        $region41: #{_lambda_.8} parent=39 // pred_check
          %p290 = pneg %p47
        $region42: #{_lambda_.8} parent=39 // pred_check_branch
          %292 = sbr.rel (%p290) target = $region44
        $region43: #{_lambda_.8} parent=39 // pred_region
          %s293 = smul.u32 2, %s22
          %p294 = scmp.lt.s32.totalorder %s293, 3
          %s295 = scalar_select %p294, %s293, 3
          %s296 = smul.addr %s295, 8
          %s297 = scalar_lea.vmem %s0, %s296
          %s298 = smul.u32 2, %s22
        $region44: #{_lambda_.8} parent=39 // pred_fallthru
          _
      $region40: #{_lambda_.8} parent=5 // pred_fallthru
        _
      %p299 = scmp.le.s32.totalorder 1, %s15
      %p300 = scmp.lt.s32.totalorder %s15, 3
      %p301 = pnand %p299, %p300
      %p302 = pneg %p301
      // Predicated region
      $region45: #{_lambda_.8} parent=5 // pred_check
        _
      $region46: #{_lambda_.8} parent=5 // pred_check_branch
        %304 = sbr.rel (%p301) target = $region48
      $region47: #{_lambda_.8} parent=5 // pred_region
        %s305 = ssub.s32 %s15, 1
        // Predicated region
        $region49: #{_lambda_.8} parent=47 // pred_check
          %p306 = pneg %p121
        $region50: #{_lambda_.8} parent=47 // pred_check_branch
          %308 = sbr.rel (%p306) target = $region52
        $region51: #{_lambda_.8} parent=47 // pred_region
          %310 = dma.done [#allocation5], 4096
        $region52: #{_lambda_.8} parent=47 // pred_fallthru
          _
        // Predicated region
        $region53: #{_lambda_.8} parent=47 // pred_check
          %p311 = pneg %p173
        $region54: #{_lambda_.8} parent=47 // pred_check_branch
          %313 = sbr.rel (%p311) target = $region56
        $region55: #{_lambda_.8} parent=47 // pred_region
          %315 = dma.done [#allocation7], 4096
        $region56: #{_lambda_.8} parent=47 // pred_fallthru
          _
        %s316 = smul.u32 2, %s24
        %p317 = scmp.lt.s32.totalorder %s316, 3
        %s318 = scalar_select %p317, %s316, 3
        %s319 = smul.addr %s318, 8
        %s320 = scalar_lea.vmem %s0, %s319
        %p321 = pneg %p53
        %p322 = pneg %p50
        %p323 = pneg %p74
        %p324 = pneg %p71
        %p325 = pneg %p95
        %p326 = pneg %p92
        %p327 = pneg %p121
        %p328 = pneg %p118
        %s329 = smul.u32 4, %s25
        %p330 = scmp.lt.s32.totalorder %s329, 3
        %s331 = scalar_select %p330, %s329, 3
        %s332 = scalar_lea.vmem %s4, %s331
        %p333 = pneg %p147
        %p334 = pneg %p144
        %p335 = pneg %p173
        %p336 = pneg %p170
        %p337 = pneg %p194
        %p338 = pneg %p191
        %p339 = pneg %p220
        %p340 = pneg %p217
        %s341 = smul.u32 2, %s24
        %p342 = scmp.lt.s32.totalorder %s341, 3
        %s343 = scalar_select %p342, %s341, 3
        %s344 = smul.addr %s343, 8
        %s345 = scalar_lea.vmem %s7, %s344
        %s346 = smul.u32 2, %s24
        %p347 = scmp.lt.s32.totalorder %s346, 3
        %s348 = scalar_select %p347, %s346, 3
        %s349 = smul.addr %s348, 8
        %s350 = scalar_lea.vmem %s0, %s349
        %s351 = smul.u32 2, %s24
        %s352 = smul.u32 4, %s25
        %s353 = smul.u32 4, %s25
        %p354 = scmp.lt.s32.totalorder %s353, 3
        %s355 = scalar_select %p354, %s353, 3
        %s356 = scalar_lea.vmem %s4, %s355
        %s357 = smul.u32 4, %s25
        %s358 = smul.u32 64, %s25
        %s359 = smul.u32 2, %s24
        %p360 = scmp.lt.s32.totalorder %s359, 3
        %s361 = scalar_select %p360, %s359, 3
        %s362 = smul.addr %s361, 8
        %s363 = scalar_lea.vmem %s7, %s362
        %s364 = smul.u32 2, %s24
        %p365 = scmp.eq.s32.totalorder %s25, 0
        // Predicated region
        $region57: #{_lambda_.8} parent=47 // pred_check
          %p366 = pneg %p365
        $region58: #{_lambda_.8} parent=47 // pred_check_branch
          %368 = sbr.rel (%p366) target = $region60
        $region59: #{_lambda_.8} parent=47 // pred_region
          %v369 = vld [vmem:[%s350] sm:$0xff]
          %v370 = vld [vmem:[%s350 + $0x8] sm:$0xff]
          %v371 = vld [vmem:[%s1] sm:$0x1]
          %v372 = vld [vmem:[%s2] sm:$0x1]
          %373 = vadd.xlane.f32.xlu0 %v369
          %v374 = vpop.xlane.xlu0 %373
          %375 = vadd.xlane.f32.xlu0 %v370
          %v376 = vpop.xlane.xlu0 %375
          %v377 = vrcp.pop 128.0
          %v378 = vmul.f32 128.0, %v377
          %v379 = vsub.f32 1.0, %v378
          %v380 = vmul.f32 %v377, %v379
          %v381 = vadd.f32 %v377, %v380
          %vm382 = vweird.f32 %v377
          %v383 = vsel %vm382, %v377, %v381
          %v384 = vmul.f32 %v374, %v383
          %v385 = vmul.f32 %v376, %v383
          %v386 = vsub.f32 %v369, %v384
          %v387 = vsub.f32 %v370, %v385
          %v388 = vmul.f32 %v386, %v386
          %v389 = vmul.f32 %v387, %v387
          %390 = vadd.xlane.f32.xlu0 %v388
          %v391 = vpop.xlane.xlu0 %390
          %392 = vadd.xlane.f32.xlu0 %v389
          %v393 = vpop.xlane.xlu0 %392
          %v394 = vmul.f32 %v391, %v383
          %v395 = vmul.f32 %v393, %v383
          %v396 = vadd.f32 %v394, 1e-05
          %v397 = vadd.f32 %v395, 1e-05
          %v398 = vrsqrt.pop %v396
          %v399 = vmul.f32 %v398, %v396
          %v400 = vmul.f32 %v399, %v398
          %v401 = vmul.f32 0.5, %v400
          %v402 = vsub.f32 1.5, %v401
          %v403 = vmul.f32 %v398, %v402
          %vm404 = vweird.f32 %v396
          %vm405 = vweird.f32 %v398
          %vm406 = vmor %vm404, %vm405
          %v407 = vsel %vm406, %v398, %v403
          %v408 = vrsqrt.pop %v397
          %v409 = vmul.f32 %v408, %v397
          %v410 = vmul.f32 %v409, %v408
          %v411 = vmul.f32 0.5, %v410
          %v412 = vsub.f32 1.5, %v411
          %v413 = vmul.f32 %v408, %v412
          %vm414 = vweird.f32 %v397
          %vm415 = vweird.f32 %v408
          %vm416 = vmor %vm414, %vm415
          %v417 = vsel %vm416, %v408, %v413
          %v418 = vmul.f32 %v386, %v407
          %v419 = vmul.f32 %v387, %v417
          %v421 = vperm.slane %v371, 0
          %v423 = vmul.f32 %v418, %v421
          %v424 = vmul.f32 %v419, %v421
          %v426 = vperm.slane %v372, 0
          %v428 = vadd.f32 %v423, %v426
          %v429 = vadd.f32 %v424, %v426
          %v430 = vpack.c.bf16 %v428, %v428
          %v431 = vpack.c.bf16 %v429, %v429
          %432 = vst [vmem:[#allocation2] sm:$0xf] %v430
          %433 = vst [vmem:[#allocation2 + $0x4] sm:$0xf] %v431
          %434 = vst [vmem:[#allocation3] sm:$0xff] 0.0
          %435 = vst [vmem:[#allocation3 + $0x8] sm:$0xff] 0.0
        $region60: #{_lambda_.8} parent=47 // pred_fallthru
          _
        %v436 = vld [vmem:[#allocation2] sm:$0xf]
        %v437 = vld [vmem:[#allocation2 + $0x4] sm:$0xf]
        %v438 = vld [vmem:[#allocation4] sm:$0xff]
        %v439 = vld [vmem:[#allocation4 + $0x8] sm:$0xff]
        %v440 = vld [vmem:[#allocation4 + $0x10] sm:$0xff]
        %v441 = vld [vmem:[#allocation4 + $0x18] sm:$0xff]
        %v442 = vld [vmem:[#allocation4 + $0x20] sm:$0xff]
        %v443 = vld [vmem:[#allocation4 + $0x28] sm:$0xff]
        %v444 = vld [vmem:[#allocation4 + $0x30] sm:$0xff]
        %v445 = vld [vmem:[#allocation4 + $0x38] sm:$0xff]
        %v446 = vld [vmem:[#allocation4 + $0x40] sm:$0xff]
        %v447 = vld [vmem:[#allocation4 + $0x48] sm:$0xff]
        %v448 = vld [vmem:[#allocation4 + $0x50] sm:$0xff]
        %v449 = vld [vmem:[#allocation4 + $0x58] sm:$0xff]
        %v450 = vld [vmem:[#allocation4 + $0x60] sm:$0xff]
        %v451 = vld [vmem:[#allocation4 + $0x68] sm:$0xff]
        %v452 = vld [vmem:[#allocation4 + $0x70] sm:$0xff]
        %v453 = vld [vmem:[#allocation4 + $0x78] sm:$0xff]
        %v454 = vld [vmem:[#allocation4 + $0x80] sm:$0xff]
        %v455 = vld [vmem:[#allocation4 + $0x88] sm:$0xff]
        %v456 = vld [vmem:[#allocation4 + $0x90] sm:$0xff]
        %v457 = vld [vmem:[#allocation4 + $0x98] sm:$0xff]
        %v458 = vld [vmem:[#allocation4 + $0xa0] sm:$0xff]
        %v459 = vld [vmem:[#allocation4 + $0xa8] sm:$0xff]
        %v460 = vld [vmem:[#allocation4 + $0xb0] sm:$0xff]
        %v461 = vld [vmem:[#allocation4 + $0xb8] sm:$0xff]
        %v462 = vld [vmem:[#allocation4 + $0xc0] sm:$0xff]
        %v463 = vld [vmem:[#allocation4 + $0xc8] sm:$0xff]
        %v464 = vld [vmem:[#allocation4 + $0xd0] sm:$0xff]
        %v465 = vld [vmem:[#allocation4 + $0xd8] sm:$0xff]
        %v466 = vld [vmem:[#allocation4 + $0xe0] sm:$0xff]
        %v467 = vld [vmem:[#allocation4 + $0xe8] sm:$0xff]
        %v468 = vld [vmem:[#allocation4 + $0xf0] sm:$0xff]
        %v469 = vld [vmem:[#allocation4 + $0xf8] sm:$0xff]
        %v470 = vld [vmem:[%s356] sm:$0xf]
        %v472 = vperm.slane %v470, 0
        %v473 = vperm.slane %v470, 1
        %v474 = vperm.slane %v470, 2
        %v475 = vperm.slane %v470, 3
        %v482 = vunpack.c.l.b16 %v436
        %v483 = vunpack.c.l.b16 %v437
        %v484 = vpack.c.b16 %v483, %v482
        %v518 = vunpack.c.l.b16 %v438
        %v519 = vunpack.c.h.b16 %v438
        %v520 = vunpack.c.l.b16 %v439
        %v521 = vunpack.c.h.b16 %v439
        %v522 = vunpack.c.l.b16 %v440
        %v523 = vunpack.c.h.b16 %v440
        %v524 = vunpack.c.l.b16 %v441
        %v525 = vunpack.c.h.b16 %v441
        %v526 = vunpack.c.l.b16 %v442
        %v527 = vunpack.c.h.b16 %v442
        %v528 = vunpack.c.l.b16 %v443
        %v529 = vunpack.c.h.b16 %v443
        %v530 = vunpack.c.l.b16 %v444
        %v531 = vunpack.c.h.b16 %v444
        %v532 = vunpack.c.l.b16 %v445
        %v533 = vunpack.c.h.b16 %v445
        %v534 = vunpack.c.l.b16 %v446
        %v535 = vunpack.c.h.b16 %v446
        %v536 = vunpack.c.l.b16 %v447
        %v537 = vunpack.c.h.b16 %v447
        %v538 = vunpack.c.l.b16 %v448
        %v539 = vunpack.c.h.b16 %v448
        %v540 = vunpack.c.l.b16 %v449
        %v541 = vunpack.c.h.b16 %v449
        %v542 = vunpack.c.l.b16 %v450
        %v543 = vunpack.c.h.b16 %v450
        %v544 = vunpack.c.l.b16 %v451
        %v545 = vunpack.c.h.b16 %v451
        %v546 = vunpack.c.l.b16 %v452
        %v547 = vunpack.c.h.b16 %v452
        %v548 = vunpack.c.l.b16 %v453
        %v549 = vunpack.c.h.b16 %v453
        %v550 = vunpack.c.l.b16 %v454
        %v551 = vunpack.c.h.b16 %v454
        %v552 = vunpack.c.l.b16 %v455
        %v553 = vunpack.c.h.b16 %v455
        %v554 = vunpack.c.l.b16 %v456
        %v555 = vunpack.c.h.b16 %v456
        %v556 = vunpack.c.l.b16 %v457
        %v557 = vunpack.c.h.b16 %v457
        %v558 = vunpack.c.l.b16 %v458
        %v559 = vunpack.c.h.b16 %v458
        %v560 = vunpack.c.l.b16 %v459
        %v561 = vunpack.c.h.b16 %v459
        %v562 = vunpack.c.l.b16 %v460
        %v563 = vunpack.c.h.b16 %v460
        %v564 = vunpack.c.l.b16 %v461
        %v565 = vunpack.c.h.b16 %v461
        %v566 = vunpack.c.l.b16 %v462
        %v567 = vunpack.c.h.b16 %v462
        %v568 = vunpack.c.l.b16 %v463
        %v569 = vunpack.c.h.b16 %v463
        %v570 = vunpack.c.l.b16 %v464
        %v571 = vunpack.c.h.b16 %v464
        %v572 = vunpack.c.l.b16 %v465
        %v573 = vunpack.c.h.b16 %v465
        %v574 = vunpack.c.l.b16 %v466
        %v575 = vunpack.c.h.b16 %v466
        %v576 = vunpack.c.l.b16 %v467
        %v577 = vunpack.c.h.b16 %v467
        %v578 = vunpack.c.l.b16 %v468
        %v579 = vunpack.c.h.b16 %v468
        %v580 = vunpack.c.l.b16 %v469
        %v581 = vunpack.c.h.b16 %v469
        %v582 = vpack.c.b16 %v522, %v518
        %v583 = vpack.c.b16 %v523, %v519
        %v584 = vpack.c.b16 %v524, %v520
        %v585 = vpack.c.b16 %v525, %v521
        %v586 = vpack.c.b16 %v530, %v526
        %v587 = vpack.c.b16 %v531, %v527
        %v588 = vpack.c.b16 %v532, %v528
        %v589 = vpack.c.b16 %v533, %v529
        %v590 = vpack.c.b16 %v538, %v534
        %v591 = vpack.c.b16 %v539, %v535
        %v592 = vpack.c.b16 %v540, %v536
        %v593 = vpack.c.b16 %v541, %v537
        %v594 = vpack.c.b16 %v546, %v542
        %v595 = vpack.c.b16 %v547, %v543
        %v596 = vpack.c.b16 %v548, %v544
        %v597 = vpack.c.b16 %v549, %v545
        %v598 = vpack.c.b16 %v554, %v550
        %v599 = vpack.c.b16 %v555, %v551
        %v600 = vpack.c.b16 %v556, %v552
        %v601 = vpack.c.b16 %v557, %v553
        %v602 = vpack.c.b16 %v562, %v558
        %v603 = vpack.c.b16 %v563, %v559
        %v604 = vpack.c.b16 %v564, %v560
        %v605 = vpack.c.b16 %v565, %v561
        %v606 = vpack.c.b16 %v570, %v566
        %v607 = vpack.c.b16 %v571, %v567
        %v608 = vpack.c.b16 %v572, %v568
        %v609 = vpack.c.b16 %v573, %v569
        %v610 = vpack.c.b16 %v578, %v574
        %v611 = vpack.c.b16 %v579, %v575
        %v612 = vpack.c.b16 %v580, %v576
        %v613 = vpack.c.b16 %v581, %v577
        %646 = vmatpush.bf16.msra.mxu0 %v610
        %647 = vmatpush.bf16.msra.mxu0 %v606
        %648 = vmatpush.bf16.msra.mxu0 %v602
        %649 = vmatpush.bf16.msra.mxu0 %v598
        %650 = vmatpush.bf16.msra.mxu0 %v594
        %651 = vmatpush.bf16.msra.mxu0 %v590
        %652 = vmatpush.bf16.msra.mxu0 %v586
        %653 = vmatpush.bf16.msra.mxu0 %v582
        %654 = vmatmul.bf16.gmra.mxu0 %v484
        %v655 = vpop.f32.mrf.mxu0
        %v656 = vadd.f32 %v472, %v655
        %v657 = vpop.f32.mrf.mxu0
        %v658 = vadd.f32 %v472, %v657
        %659 = vdwg.mxu0
        %660 = vmatpush.bf16.msra.mxu0 %v611
        %661 = vmatpush.bf16.msra.mxu0 %v607
        %662 = vmatpush.bf16.msra.mxu0 %v603
        %663 = vmatpush.bf16.msra.mxu0 %v599
        %664 = vmatpush.bf16.msra.mxu0 %v595
        %665 = vmatpush.bf16.msra.mxu0 %v591
        %666 = vmatpush.bf16.msra.mxu0 %v587
        %667 = vmatpush.bf16.msra.mxu0 %v583
        %668 = vmatmul.bf16.gmra.mxu0 %v484
        %v669 = vpop.f32.mrf.mxu0
        %v670 = vadd.f32 %v473, %v669
        %v671 = vpop.f32.mrf.mxu0
        %v672 = vadd.f32 %v473, %v671
        %673 = vdwg.mxu0
        %674 = vmatpush.bf16.msra.mxu0 %v612
        %675 = vmatpush.bf16.msra.mxu0 %v608
        %676 = vmatpush.bf16.msra.mxu0 %v604
        %677 = vmatpush.bf16.msra.mxu0 %v600
        %678 = vmatpush.bf16.msra.mxu0 %v596
        %679 = vmatpush.bf16.msra.mxu0 %v592
        %680 = vmatpush.bf16.msra.mxu0 %v588
        %681 = vmatpush.bf16.msra.mxu0 %v584
        %682 = vmatmul.bf16.gmra.mxu0 %v484
        %v683 = vpop.f32.mrf.mxu0
        %v684 = vadd.f32 %v474, %v683
        %v685 = vpop.f32.mrf.mxu0
        %v686 = vadd.f32 %v474, %v685
        %687 = vdwg.mxu0
        %688 = vmatpush.bf16.msra.mxu0 %v613
        %689 = vmatpush.bf16.msra.mxu0 %v609
        %690 = vmatpush.bf16.msra.mxu0 %v605
        %691 = vmatpush.bf16.msra.mxu0 %v601
        %692 = vmatpush.bf16.msra.mxu0 %v597
        %693 = vmatpush.bf16.msra.mxu0 %v593
        %694 = vmatpush.bf16.msra.mxu0 %v589
        %695 = vmatpush.bf16.msra.mxu0 %v585
        %696 = vmatmul.bf16.gmra.mxu0 %v484
        %v697 = vpop.f32.mrf.mxu0
        %v698 = vadd.f32 %v475, %v697
        %v699 = vpop.f32.mrf.mxu0
        %v700 = vadd.f32 %v475, %v699
        %701 = vdwg.mxu0
        %v702 = vmul.f32 %v656, 0.5
        %v703 = vmul.f32 %v670, 0.5
        %v704 = vmul.f32 %v684, 0.5
        %v705 = vmul.f32 %v698, 0.5
        %v706 = vmul.f32 %v658, 0.5
        %v707 = vmul.f32 %v672, 0.5
        %v708 = vmul.f32 %v686, 0.5
        %v709 = vmul.f32 %v700, 0.5
        %v710 = vmul.f32 %v656, 0.044715
        %v711 = vmul.f32 %v670, 0.044715
        %v712 = vmul.f32 %v684, 0.044715
        %v713 = vmul.f32 %v698, 0.044715
        %v714 = vmul.f32 %v658, 0.044715
        %v715 = vmul.f32 %v672, 0.044715
        %v716 = vmul.f32 %v686, 0.044715
        %v717 = vmul.f32 %v700, 0.044715
        %v718 = vmul.f32 %v710, %v656
        %v719 = vmul.f32 %v711, %v670
        %v720 = vmul.f32 %v712, %v684
        %v721 = vmul.f32 %v713, %v698
        %v722 = vmul.f32 %v714, %v658
        %v723 = vmul.f32 %v715, %v672
        %v724 = vmul.f32 %v716, %v686
        %v725 = vmul.f32 %v717, %v700
        %v726 = vmul.f32 %v718, %v656
        %v727 = vmul.f32 %v719, %v670
        %v728 = vmul.f32 %v720, %v684
        %v729 = vmul.f32 %v721, %v698
        %v730 = vmul.f32 %v722, %v658
        %v731 = vmul.f32 %v723, %v672
        %v732 = vmul.f32 %v724, %v686
        %v733 = vmul.f32 %v725, %v700
        %v734 = vadd.f32 %v656, %v726
        %v735 = vadd.f32 %v670, %v727
        %v736 = vadd.f32 %v684, %v728
        %v737 = vadd.f32 %v698, %v729
        %v738 = vadd.f32 %v658, %v730
        %v739 = vadd.f32 %v672, %v731
        %v740 = vadd.f32 %v686, %v732
        %v741 = vadd.f32 %v700, %v733
        %v742 = vmul.f32 %v734, 0.7978846
        %v743 = vmul.f32 %v735, 0.7978846
        %v744 = vmul.f32 %v736, 0.7978846
        %v745 = vmul.f32 %v737, 0.7978846
        %v746 = vmul.f32 %v738, 0.7978846
        %v747 = vmul.f32 %v739, 0.7978846
        %v748 = vmul.f32 %v740, 0.7978846
        %v749 = vmul.f32 %v741, 0.7978846
        %v750 = vtanh.pop %v742
        %v751 = vtanh.pop %v743
        %v752 = vtanh.pop %v744
        %v753 = vtanh.pop %v745
        %v754 = vtanh.pop %v746
        %v755 = vtanh.pop %v747
        %v756 = vtanh.pop %v748
        %v757 = vtanh.pop %v749
        %v758 = vadd.f32 %v750, 1.0
        %v759 = vadd.f32 %v751, 1.0
        %v760 = vadd.f32 %v752, 1.0
        %v761 = vadd.f32 %v753, 1.0
        %v762 = vadd.f32 %v754, 1.0
        %v763 = vadd.f32 %v755, 1.0
        %v764 = vadd.f32 %v756, 1.0
        %v765 = vadd.f32 %v757, 1.0
        %v766 = vmul.f32 %v702, %v758
        %v767 = vmul.f32 %v703, %v759
        %v768 = vmul.f32 %v704, %v760
        %v769 = vmul.f32 %v705, %v761
        %v770 = vmul.f32 %v706, %v762
        %v771 = vmul.f32 %v707, %v763
        %v772 = vmul.f32 %v708, %v764
        %v773 = vmul.f32 %v709, %v765
        %v774 = vpack.c.bf16 %v770, %v766
        %v775 = vpack.c.bf16 %v771, %v767
        %v776 = vpack.c.bf16 %v772, %v768
        %v777 = vpack.c.bf16 %v773, %v769
        %v778 = vld [vmem:[#allocation3] sm:$0xff]
        %v779 = vld [vmem:[#allocation3 + $0x8] sm:$0xff]
        %v780 = vld [vmem:[#allocation6] sm:$0xf]
        %v781 = vld [vmem:[#allocation6 + $0x4] sm:$0xf]
        %v782 = vld [vmem:[#allocation6 + $0x8] sm:$0xf]
        %v783 = vld [vmem:[#allocation6 + $0xc] sm:$0xf]
        %v784 = vld [vmem:[#allocation6 + $0x10] sm:$0xf]
        %v785 = vld [vmem:[#allocation6 + $0x14] sm:$0xf]
        %v786 = vld [vmem:[#allocation6 + $0x18] sm:$0xf]
        %v787 = vld [vmem:[#allocation6 + $0x1c] sm:$0xf]
        %v788 = vld [vmem:[#allocation6 + $0x20] sm:$0xf]
        %v789 = vld [vmem:[#allocation6 + $0x24] sm:$0xf]
        %v790 = vld [vmem:[#allocation6 + $0x28] sm:$0xf]
        %v791 = vld [vmem:[#allocation6 + $0x2c] sm:$0xf]
        %v792 = vld [vmem:[#allocation6 + $0x30] sm:$0xf]
        %v793 = vld [vmem:[#allocation6 + $0x34] sm:$0xf]
        %v794 = vld [vmem:[#allocation6 + $0x38] sm:$0xf]
        %v795 = vld [vmem:[#allocation6 + $0x3c] sm:$0xf]
        %v796 = vld [vmem:[#allocation6 + $0x40] sm:$0xf]
        %v797 = vld [vmem:[#allocation6 + $0x44] sm:$0xf]
        %v798 = vld [vmem:[#allocation6 + $0x48] sm:$0xf]
        %v799 = vld [vmem:[#allocation6 + $0x4c] sm:$0xf]
        %v800 = vld [vmem:[#allocation6 + $0x50] sm:$0xf]
        %v801 = vld [vmem:[#allocation6 + $0x54] sm:$0xf]
        %v802 = vld [vmem:[#allocation6 + $0x58] sm:$0xf]
        %v803 = vld [vmem:[#allocation6 + $0x5c] sm:$0xf]
        %v804 = vld [vmem:[#allocation6 + $0x60] sm:$0xf]
        %v805 = vld [vmem:[#allocation6 + $0x64] sm:$0xf]
        %v806 = vld [vmem:[#allocation6 + $0x68] sm:$0xf]
        %v807 = vld [vmem:[#allocation6 + $0x6c] sm:$0xf]
        %v808 = vld [vmem:[#allocation6 + $0x70] sm:$0xf]
        %v809 = vld [vmem:[#allocation6 + $0x74] sm:$0xf]
        %v810 = vld [vmem:[#allocation6 + $0x78] sm:$0xf]
        %v811 = vld [vmem:[#allocation6 + $0x7c] sm:$0xf]
        %v812 = vld [vmem:[#allocation6 + $0x80] sm:$0xf]
        %v813 = vld [vmem:[#allocation6 + $0x84] sm:$0xf]
        %v814 = vld [vmem:[#allocation6 + $0x88] sm:$0xf]
        %v815 = vld [vmem:[#allocation6 + $0x8c] sm:$0xf]
        %v816 = vld [vmem:[#allocation6 + $0x90] sm:$0xf]
        %v817 = vld [vmem:[#allocation6 + $0x94] sm:$0xf]
        %v818 = vld [vmem:[#allocation6 + $0x98] sm:$0xf]
        %v819 = vld [vmem:[#allocation6 + $0x9c] sm:$0xf]
        %v820 = vld [vmem:[#allocation6 + $0xa0] sm:$0xf]
        %v821 = vld [vmem:[#allocation6 + $0xa4] sm:$0xf]
        %v822 = vld [vmem:[#allocation6 + $0xa8] sm:$0xf]
        %v823 = vld [vmem:[#allocation6 + $0xac] sm:$0xf]
        %v824 = vld [vmem:[#allocation6 + $0xb0] sm:$0xf]
        %v825 = vld [vmem:[#allocation6 + $0xb4] sm:$0xf]
        %v826 = vld [vmem:[#allocation6 + $0xb8] sm:$0xf]
        %v827 = vld [vmem:[#allocation6 + $0xbc] sm:$0xf]
        %v828 = vld [vmem:[#allocation6 + $0xc0] sm:$0xf]
        %v829 = vld [vmem:[#allocation6 + $0xc4] sm:$0xf]
        %v830 = vld [vmem:[#allocation6 + $0xc8] sm:$0xf]
        %v831 = vld [vmem:[#allocation6 + $0xcc] sm:$0xf]
        %v832 = vld [vmem:[#allocation6 + $0xd0] sm:$0xf]
        %v833 = vld [vmem:[#allocation6 + $0xd4] sm:$0xf]
        %v834 = vld [vmem:[#allocation6 + $0xd8] sm:$0xf]
        %v835 = vld [vmem:[#allocation6 + $0xdc] sm:$0xf]
        %v836 = vld [vmem:[#allocation6 + $0xe0] sm:$0xf]
        %v837 = vld [vmem:[#allocation6 + $0xe4] sm:$0xf]
        %v838 = vld [vmem:[#allocation6 + $0xe8] sm:$0xf]
        %v839 = vld [vmem:[#allocation6 + $0xec] sm:$0xf]
        %v840 = vld [vmem:[#allocation6 + $0xf0] sm:$0xf]
        %v841 = vld [vmem:[#allocation6 + $0xf4] sm:$0xf]
        %v842 = vld [vmem:[#allocation6 + $0xf8] sm:$0xf]
        %v843 = vld [vmem:[#allocation6 + $0xfc] sm:$0xf]
        %v908 = vunpack.c.l.b16 %v780
        %v909 = vunpack.c.l.b16 %v781
        %v910 = vunpack.c.l.b16 %v782
        %v911 = vunpack.c.l.b16 %v783
        %v912 = vunpack.c.l.b16 %v784
        %v913 = vunpack.c.l.b16 %v785
        %v914 = vunpack.c.l.b16 %v786
        %v915 = vunpack.c.l.b16 %v787
        %v916 = vunpack.c.l.b16 %v788
        %v917 = vunpack.c.l.b16 %v789
        %v918 = vunpack.c.l.b16 %v790
        %v919 = vunpack.c.l.b16 %v791
        %v920 = vunpack.c.l.b16 %v792
        %v921 = vunpack.c.l.b16 %v793
        %v922 = vunpack.c.l.b16 %v794
        %v923 = vunpack.c.l.b16 %v795
        %v924 = vunpack.c.l.b16 %v796
        %v925 = vunpack.c.l.b16 %v797
        %v926 = vunpack.c.l.b16 %v798
        %v927 = vunpack.c.l.b16 %v799
        %v928 = vunpack.c.l.b16 %v800
        %v929 = vunpack.c.l.b16 %v801
        %v930 = vunpack.c.l.b16 %v802
        %v931 = vunpack.c.l.b16 %v803
        %v932 = vunpack.c.l.b16 %v804
        %v933 = vunpack.c.l.b16 %v805
        %v934 = vunpack.c.l.b16 %v806
        %v935 = vunpack.c.l.b16 %v807
        %v936 = vunpack.c.l.b16 %v808
        %v937 = vunpack.c.l.b16 %v809
        %v938 = vunpack.c.l.b16 %v810
        %v939 = vunpack.c.l.b16 %v811
        %v940 = vunpack.c.l.b16 %v812
        %v941 = vunpack.c.l.b16 %v813
        %v942 = vunpack.c.l.b16 %v814
        %v943 = vunpack.c.l.b16 %v815
        %v944 = vunpack.c.l.b16 %v816
        %v945 = vunpack.c.l.b16 %v817
        %v946 = vunpack.c.l.b16 %v818
        %v947 = vunpack.c.l.b16 %v819
        %v948 = vunpack.c.l.b16 %v820
        %v949 = vunpack.c.l.b16 %v821
        %v950 = vunpack.c.l.b16 %v822
        %v951 = vunpack.c.l.b16 %v823
        %v952 = vunpack.c.l.b16 %v824
        %v953 = vunpack.c.l.b16 %v825
        %v954 = vunpack.c.l.b16 %v826
        %v955 = vunpack.c.l.b16 %v827
        %v956 = vunpack.c.l.b16 %v828
        %v957 = vunpack.c.l.b16 %v829
        %v958 = vunpack.c.l.b16 %v830
        %v959 = vunpack.c.l.b16 %v831
        %v960 = vunpack.c.l.b16 %v832
        %v961 = vunpack.c.l.b16 %v833
        %v962 = vunpack.c.l.b16 %v834
        %v963 = vunpack.c.l.b16 %v835
        %v964 = vunpack.c.l.b16 %v836
        %v965 = vunpack.c.l.b16 %v837
        %v966 = vunpack.c.l.b16 %v838
        %v967 = vunpack.c.l.b16 %v839
        %v968 = vunpack.c.l.b16 %v840
        %v969 = vunpack.c.l.b16 %v841
        %v970 = vunpack.c.l.b16 %v842
        %v971 = vunpack.c.l.b16 %v843
        %v972 = vpack.c.b16 %v909, %v908
        %v973 = vpack.c.b16 %v911, %v910
        %v974 = vpack.c.b16 %v913, %v912
        %v975 = vpack.c.b16 %v915, %v914
        %v976 = vpack.c.b16 %v917, %v916
        %v977 = vpack.c.b16 %v919, %v918
        %v978 = vpack.c.b16 %v921, %v920
        %v979 = vpack.c.b16 %v923, %v922
        %v980 = vpack.c.b16 %v925, %v924
        %v981 = vpack.c.b16 %v927, %v926
        %v982 = vpack.c.b16 %v929, %v928
        %v983 = vpack.c.b16 %v931, %v930
        %v984 = vpack.c.b16 %v933, %v932
        %v985 = vpack.c.b16 %v935, %v934
        %v986 = vpack.c.b16 %v937, %v936
        %v987 = vpack.c.b16 %v939, %v938
        %v988 = vpack.c.b16 %v941, %v940
        %v989 = vpack.c.b16 %v943, %v942
        %v990 = vpack.c.b16 %v945, %v944
        %v991 = vpack.c.b16 %v947, %v946
        %v992 = vpack.c.b16 %v949, %v948
        %v993 = vpack.c.b16 %v951, %v950
        %v994 = vpack.c.b16 %v953, %v952
        %v995 = vpack.c.b16 %v955, %v954
        %v996 = vpack.c.b16 %v957, %v956
        %v997 = vpack.c.b16 %v959, %v958
        %v998 = vpack.c.b16 %v961, %v960
        %v999 = vpack.c.b16 %v963, %v962
        %v1000 = vpack.c.b16 %v965, %v964
        %v1001 = vpack.c.b16 %v967, %v966
        %v1002 = vpack.c.b16 %v969, %v968
        %v1003 = vpack.c.b16 %v971, %v970
        %1036 = vmatpush.bf16.msra.mxu0 %v979
        %1037 = vmatpush.bf16.msra.mxu0 %v978
        %1038 = vmatpush.bf16.msra.mxu0 %v977
        %1039 = vmatpush.bf16.msra.mxu0 %v976
        %1040 = vmatpush.bf16.msra.mxu0 %v975
        %1041 = vmatpush.bf16.msra.mxu0 %v974
        %1042 = vmatpush.bf16.msra.mxu0 %v973
        %1043 = vmatpush.bf16.msra.mxu0 %v972
        %1044 = vmatmul.bf16.gmra.mxu0 %v774
        %v1045 = vpop.f32.mrf.mxu0
        %v1046 = vadd.f32 0.0, %v1045
        %v1047 = vpop.f32.mrf.mxu0
        %v1048 = vadd.f32 0.0, %v1047
        %1049 = vdwg.mxu0
        %1050 = vmatpush.bf16.msra.mxu0 %v987
        %1051 = vmatpush.bf16.msra.mxu0 %v986
        %1052 = vmatpush.bf16.msra.mxu0 %v985
        %1053 = vmatpush.bf16.msra.mxu0 %v984
        %1054 = vmatpush.bf16.msra.mxu0 %v983
        %1055 = vmatpush.bf16.msra.mxu0 %v982
        %1056 = vmatpush.bf16.msra.mxu0 %v981
        %1057 = vmatpush.bf16.msra.mxu0 %v980
        %1058 = vmatmul.bf16.gmra.mxu0 %v775
        %v1059 = vpop.f32.mrf.mxu0
        %v1060 = vadd.f32 %v1046, %v1059
        %v1061 = vpop.f32.mrf.mxu0
        %v1062 = vadd.f32 %v1048, %v1061
        %1063 = vdwg.mxu0
        %1064 = vmatpush.bf16.msra.mxu0 %v995
        %1065 = vmatpush.bf16.msra.mxu0 %v994
        %1066 = vmatpush.bf16.msra.mxu0 %v993
        %1067 = vmatpush.bf16.msra.mxu0 %v992
        %1068 = vmatpush.bf16.msra.mxu0 %v991
        %1069 = vmatpush.bf16.msra.mxu0 %v990
        %1070 = vmatpush.bf16.msra.mxu0 %v989
        %1071 = vmatpush.bf16.msra.mxu0 %v988
        %1072 = vmatmul.bf16.gmra.mxu0 %v776
        %v1073 = vpop.f32.mrf.mxu0
        %v1074 = vadd.f32 %v1060, %v1073
        %v1075 = vpop.f32.mrf.mxu0
        %v1076 = vadd.f32 %v1062, %v1075
        %1077 = vdwg.mxu0
        %1078 = vmatpush.bf16.msra.mxu0 %v1003
        %1079 = vmatpush.bf16.msra.mxu0 %v1002
        %1080 = vmatpush.bf16.msra.mxu0 %v1001
        %1081 = vmatpush.bf16.msra.mxu0 %v1000
        %1082 = vmatpush.bf16.msra.mxu0 %v999
        %1083 = vmatpush.bf16.msra.mxu0 %v998
        %1084 = vmatpush.bf16.msra.mxu0 %v997
        %1085 = vmatpush.bf16.msra.mxu0 %v996
        %1086 = vmatmul.bf16.gmra.mxu0 %v777
        %v1087 = vpop.f32.mrf.mxu0
        %v1088 = vadd.f32 %v1074, %v1087
        %v1089 = vpop.f32.mrf.mxu0
        %v1090 = vadd.f32 %v1076, %v1089
        %1091 = vdwg.mxu0
        %v1092 = vadd.f32 %v778, %v1088
        %v1093 = vadd.f32 %v779, %v1090
        %1094 = vst [vmem:[#allocation3] sm:$0xff] %v1092
        %1095 = vst [vmem:[#allocation3 + $0x8] sm:$0xff] %v1093
        // Predicated region
        $region61: #{_lambda_.8} parent=47 // pred_check
          %p1096 = pneg %p365
        $region62: #{_lambda_.8} parent=47 // pred_check_branch
          %1098 = sbr.rel (%p1096) target = $region64
        $region63: #{_lambda_.8} parent=47 // pred_region
          %v1099 = vld [vmem:[%s350] sm:$0xff]
          %v1100 = vld [vmem:[%s350 + $0x8] sm:$0xff]
          %v1101 = vld [vmem:[#allocation3] sm:$0xff]
          %v1102 = vld [vmem:[#allocation3 + $0x8] sm:$0xff]
          %v1103 = vld [vmem:[%s6] sm:$0x1]
          %v1105 = vperm.slane %v1103, 0
          %v1107 = vadd.f32 %v1101, %v1105
          %v1108 = vadd.f32 %v1102, %v1105
          %v1109 = vadd.f32 %v1099, %v1107
          %v1110 = vadd.f32 %v1100, %v1108
          %1111 = vst [vmem:[%s363] sm:$0xff] %v1109
          %1112 = vst [vmem:[%s363 + $0x8] sm:$0xff] %v1110
        $region64: #{_lambda_.8} parent=47 // pred_fallthru
          _
        %s1113 = smul.u32 2, %s24
        %p1114 = scmp.lt.s32.totalorder %s1113, 3
        %s1115 = scalar_select %p1114, %s1113, 3
        %s1116 = smul.addr %s1115, 8
        %s1117 = scalar_lea.vmem %s7, %s1116
        // Predicated region
        $region65: #{_lambda_.8} parent=47 // pred_check
          %p1118 = pneg %p217
        $region66: #{_lambda_.8} parent=47 // pred_check_branch
          %1120 = sbr.rel (%p1118) target = $region68
        $region67: #{_lambda_.8} parent=47 // pred_region
          %s1121 = smul.u32 2, %s24
        $region68: #{_lambda_.8} parent=47 // pred_fallthru
          _
      $region48: #{_lambda_.8} parent=5 // pred_fallthru
        _
      %p1122 = scmp.le.s32.totalorder 2, %s15
      // Predicated region
      $region69: #{_lambda_.8} parent=5 // pred_check
        %p1123 = pneg %p1122
      $region70: #{_lambda_.8} parent=5 // pred_check_branch
        %1125 = sbr.rel (%p1123) target = $region72
      $region71: #{_lambda_.8} parent=5 // pred_region
        %s1126 = ssub.s32 %s15, 2
        // Predicated region
        $region73: #{_lambda_.8} parent=71 // pred_check
          %p1127 = pneg %p223
        $region74: #{_lambda_.8} parent=71 // pred_check_branch
          %1129 = sbr.rel (%p1127) target = $region76
        $region75: #{_lambda_.8} parent=71 // pred_region
          %s1130 = smul.u32 2, %s26
          %p1131 = scmp.lt.s32.totalorder %s1130, 3
          %s1132 = scalar_select %p1131, %s1130, 3
          %s1133 = smul.addr %s1132, 8
          %s1134 = scalar_lea.vmem %s7, %s1133
        $region76: #{_lambda_.8} parent=71 // pred_fallthru
          _
      $region72: #{_lambda_.8} parent=5 // pred_fallthru
        _
    $region6: #{_lambda_.8} parent=1 // loop_footer
      %s19 = sadd.s32 1, %s15
    $region7: #{_lambda_.8} parent=1 // loop_footer_branch
      %14 = sbr.rel target = $region3
    $region8: #{_lambda_.8} parent=1 // loop_exit
      _
    %1135 = vsyncpa [#allocation5], 1
    %s1136 = scalar_lea.sflag [#allocation5], 1
    %1137 = vsyncpa %s1136, 1
    %1138 = vsyncpa [#allocation7], 1

// kernel: _lambda_.9
$region0: #{_lambda_.9}
  #allocation0 [shape = 'u32[]', space=smem, size = 0x4, offset = 0x4, fixed_abs, tag = 'smem constant byte address 0x4 - core index']
  #allocation1 [shape = 'u32[72,128]{1,0:T(1,128)}', space=vmem, size = 0x9000, scoped, tag = 'internal scratch']
  #allocation2 [shape = 'bf16[16,128]{1,0:T(8,128)(2,1)}', space=vmem, size = 0x1000, scoped, tag = 'scratch operand']
  %s0 = inlined_call_operand.vmem [shape: f32[32,128], index: 0, kind: input, shape index: {}]
  %s1 = inlined_call_operand.vmem [shape: f32[1,128], index: 1, kind: input, shape index: {}]
  %s2 = inlined_call_operand.vmem [shape: f32[1,128], index: 2, kind: input, shape index: {}]
  %s3 = inlined_call_operand.hbm [shape: bf16[128,256], index: 3, kind: input, shape index: {}]
  %s4 = inlined_call_operand.hbm [shape: f32[32,256], index: 4, kind: output, shape index: {}]
  %s5 = sld [smem:[#allocation0]]
  $region57: #{_lambda_.9} parent=0
    _
  %s7 = ssub.s32 1, %s5
  %s8 = scalar_select 0, %s7, %s5
  $region1: #{_lambda_.9} parent=0
    #allocation3 [shape = 'u8[65536]{0}', space=vmem, size = 0x10000, scoped, tag = 'input window, operand 3, single buffered']
    #allocation4 [shape = 's32[2]{0}', space=sflag, size = 0x8, scoped, tag = 'scoped memory for _lambda_.9']
    #allocation5 [shape = 's32[2]{0}', space=sflag, size = 0x8, scoped, tag = 'scoped memory for _lambda_.9']
    #allocation6 [shape = 'u8[32768]{0}', space=vmem, size = 0x8000, scoped, tag = 'output window, operand 0']
    %9 = vsyncpa [#allocation4], 0
    %10 = vsyncpa [#allocation5], 0
    %s11 = scalar_lea.sflag [#allocation5], 1
    %12 = vsyncpa %s11, 0
    loop: start=0, step=1, limit=4
    $region2: #{_lambda_.9} parent=1 // loop_pre_header
      _
    $region3: #{_lambda_.9} parent=1 // loop_header
      %s14 = sphi 0, %s18
      %p15 = scmp.ge.s32.totalorder %s14, 4
      %s21 = sphi 0, %s33
      %s22 = sphi 0, %s29
      %s23 = sphi 0, %s21
      %s24 = sphi 0, %s22
      %s25 = sphi 0, %s23
      %s26 = sphi 0, %s24
      %s36 = sphi 0, %s38
      %s39 = sphi 0, %s36
      %s40 = sphi 0, %s39
      %s56 = sphi 0, %s40
      %s60 = sphi 0, %s60
      %s62 = sphi 0, %s60
      %s63 = sphi 0, %s62
      %s77 = sphi 0, %s63
      %s81 = sphi 0, %s81
      %s83 = sphi 0, %s81
      %s84 = sphi 0, %s83
      %s98 = sphi 0, %s84
      %s104 = sphi 0, %s106
      %s107 = sphi 0, %s104
      %s108 = sphi 0, %s107
      %s124 = sphi 0, %s108
      %s132 = sphi 0, %s134
      %s135 = sphi 0, %s132
      %s136 = sphi 0, %s135
      %s152 = sphi 0, %s136
    $region4: #{_lambda_.9} parent=1 // loop_header_branch
      %17 = sbr.rel (%p15) target = $region8
    $region5: #{_lambda_.9} parent=1 // loop_body
      %s19 = ssub.s32 %s14, 1
      %s20 = ssub.s32 %s14, 2
      %s27 = sadd.s32 1, %s22
      %p28 = scmp.ge.s32.totalorder %s27, 1
      %s29 = scalar_select %p28, 0, %s27
      %s30 = sadd.s32 1, %s21
      %s31 = scalar_select %p28, %s30, %s21
      %p32 = scmp.ge.s32.totalorder %s31, 2
      %s33 = scalar_select %p32, 0, %s31
      %s34 = ssub.s32 %s21, %s33
      %p35 = scmp.eq.s32.totalorder %s34, 0
      %s37 = sadd.s32 %s36, 1
      %s38 = scalar_select %p35, %s36, %s37
      %p41 = pneg %p35
      %p42 = scmp.eq.s32.totalorder %s14, 1
      %p43 = por %p41, %p42
      %p44 = scmp.ne.s32.totalorder %s36, %s39
      %p45 = scmp.eq.s32.totalorder %s14, 0
      %p46 = por %p44, %p45
      %p47 = scmp.ne.s32.totalorder %s36, %s39
      %p48 = scmp.eq.s32.totalorder %s19, 1
      %p49 = por %p47, %p48
      %p50 = scmp.ne.s32.totalorder %s39, %s40
      %p51 = scmp.eq.s32.totalorder %s19, 0
      %p52 = por %p50, %p51
      %p53 = scmp.ne.s32.totalorder %s39, %s40
      %p54 = scmp.eq.s32.totalorder %s20, 1
      %p55 = por %p53, %p54
      %p57 = scmp.ne.s32.totalorder %s40, %s56
      %p58 = scmp.eq.s32.totalorder %s20, 0
      %p59 = por %p57, %p58
      %s61 = sadd.s32 %s60, 1
      %p64 = scmp.eq.s32.totalorder %s14, 1
      %p65 = scmp.ne.s32.totalorder %s60, %s62
      %p66 = scmp.eq.s32.totalorder %s14, 0
      %p67 = por %p65, %p66
      %p68 = scmp.ne.s32.totalorder %s60, %s62
      %p69 = scmp.eq.s32.totalorder %s19, 1
      %p70 = por %p68, %p69
      %p71 = scmp.ne.s32.totalorder %s62, %s63
      %p72 = scmp.eq.s32.totalorder %s19, 0
      %p73 = por %p71, %p72
      %p74 = scmp.ne.s32.totalorder %s62, %s63
      %p75 = scmp.eq.s32.totalorder %s20, 1
      %p76 = por %p74, %p75
      %p78 = scmp.ne.s32.totalorder %s63, %s77
      %p79 = scmp.eq.s32.totalorder %s20, 0
      %p80 = por %p78, %p79
      %s82 = sadd.s32 %s81, 1
      %p85 = scmp.eq.s32.totalorder %s14, 1
      %p86 = scmp.ne.s32.totalorder %s81, %s83
      %p87 = scmp.eq.s32.totalorder %s14, 0
      %p88 = por %p86, %p87
      %p89 = scmp.ne.s32.totalorder %s81, %s83
      %p90 = scmp.eq.s32.totalorder %s19, 1
      %p91 = por %p89, %p90
      %p92 = scmp.ne.s32.totalorder %s83, %s84
      %p93 = scmp.eq.s32.totalorder %s19, 0
      %p94 = por %p92, %p93
      %p95 = scmp.ne.s32.totalorder %s83, %s84
      %p96 = scmp.eq.s32.totalorder %s20, 1
      %p97 = por %p95, %p96
      %p99 = scmp.ne.s32.totalorder %s84, %s98
      %p100 = scmp.eq.s32.totalorder %s20, 0
      %p101 = por %p99, %p100
      %s102 = ssub.s32 %s22, %s29
      %p103 = scmp.eq.s32.totalorder %s102, 0
      %s105 = sadd.s32 %s104, 1
      %s106 = scalar_select %p103, %s104, %s105
      %p109 = pneg %p103
      %p110 = scmp.eq.s32.totalorder %s14, 1
      %p111 = por %p109, %p110
      %p112 = scmp.ne.s32.totalorder %s104, %s107
      %p113 = scmp.eq.s32.totalorder %s14, 0
      %p114 = por %p112, %p113
      %p115 = scmp.ne.s32.totalorder %s104, %s107
      %p116 = scmp.eq.s32.totalorder %s19, 1
      %p117 = por %p115, %p116
      %p118 = scmp.ne.s32.totalorder %s107, %s108
      %p119 = scmp.eq.s32.totalorder %s19, 0
      %p120 = por %p118, %p119
      %p121 = scmp.ne.s32.totalorder %s107, %s108
      %p122 = scmp.eq.s32.totalorder %s20, 1
      %p123 = por %p121, %p122
      %p125 = scmp.ne.s32.totalorder %s108, %s124
      %p126 = scmp.eq.s32.totalorder %s20, 0
      %p127 = por %p125, %p126
      %s128 = ssub.s32 %s21, %s33
      %s129 = ssub.s32 %s22, %s29
      %s130 = sor.u32 %s128, %s129
      %p131 = scmp.eq.s32.totalorder %s130, 0
      %s133 = sadd.s32 %s132, 1
      %s134 = scalar_select %p131, %s132, %s133
      %p137 = pneg %p131
      %p138 = scmp.eq.s32.totalorder %s14, 1
      %p139 = por %p137, %p138
      %p140 = scmp.ne.s32.totalorder %s132, %s135
      %p141 = scmp.eq.s32.totalorder %s14, 0
      %p142 = por %p140, %p141
      %p143 = scmp.ne.s32.totalorder %s132, %s135
      %p144 = scmp.eq.s32.totalorder %s19, 1
      %p145 = por %p143, %p144
      %p146 = scmp.ne.s32.totalorder %s135, %s136
      %p147 = scmp.eq.s32.totalorder %s19, 0
      %p148 = por %p146, %p147
      %p149 = scmp.ne.s32.totalorder %s135, %s136
      %p150 = scmp.eq.s32.totalorder %s20, 1
      %p151 = por %p149, %p150
      %p153 = scmp.ne.s32.totalorder %s136, %s152
      %p154 = scmp.eq.s32.totalorder %s20, 0
      %p155 = por %p153, %p154
      %p156 = scmp.le.s32.totalorder 1, %s14
      %p157 = scmp.lt.s32.totalorder %s14, 3
      %p158 = pnand %p156, %p157
      %p159 = pneg %p158
      // Predicated region
      $region9: #{_lambda_.9} parent=5 // pred_check
        _
      $region10: #{_lambda_.9} parent=5 // pred_check_branch
        %161 = sbr.rel (%p158) target = $region12
      $region11: #{_lambda_.9} parent=5 // pred_region
        %s162 = ssub.s32 %s14, 1
        // Predicated region
        $region13: #{_lambda_.9} parent=11 // pred_check
          %p163 = pneg %p73
        $region14: #{_lambda_.9} parent=11 // pred_check_branch
          %165 = sbr.rel (%p163) target = $region16
        $region15: #{_lambda_.9} parent=11 // pred_region
          _
        $region16: #{_lambda_.9} parent=11 // pred_fallthru
          _
        // Predicated region
        $region17: #{_lambda_.9} parent=11 // pred_check
          %p166 = pneg %p94
        $region18: #{_lambda_.9} parent=11 // pred_check_branch
          %168 = sbr.rel (%p166) target = $region20
        $region19: #{_lambda_.9} parent=11 // pred_region
          _
        $region20: #{_lambda_.9} parent=11 // pred_fallthru
          _
        // Predicated region
        $region21: #{_lambda_.9} parent=11 // pred_check
          %p169 = pneg %p120
        $region22: #{_lambda_.9} parent=11 // pred_check_branch
          %171 = sbr.rel (%p169) target = $region24
        $region23: #{_lambda_.9} parent=11 // pred_region
          %s172 = smul.u32 2, %s24
          %174 = vsyncadd [#allocation4], 0
          %s175 = smul.addr %s172, 4
          %s176 = scalar_lea.hbm %s3, %s175
          %s177 = sshll.u32 %s176, 4
          %s178 = int_to_ptr.hbm [resolvable:$true] %s177
          %s179 = sshll.u32 [#allocation3], 4
          %s180 = int_to_ptr.vmem [resolvable:$true] %s179
          %185 = dma.hbm_to_vmem [thread:$0]  %s178, 2048, %s180, [#allocation4], 128, 128, 8
        $region24: #{_lambda_.9} parent=11 // pred_fallthru
          _
      $region12: #{_lambda_.9} parent=5 // pred_fallthru
        _
      %p186 = scmp.lt.s32.totalorder %s14, 2
      // Predicated region
      $region25: #{_lambda_.9} parent=5 // pred_check
        %p187 = pneg %p186
      $region26: #{_lambda_.9} parent=5 // pred_check_branch
        %189 = sbr.rel (%p187) target = $region28
      $region27: #{_lambda_.9} parent=5 // pred_region
        // Predicated region
        $region29: #{_lambda_.9} parent=27 // pred_check
          %p190 = pneg %p46
        $region30: #{_lambda_.9} parent=27 // pred_check_branch
          %192 = sbr.rel (%p190) target = $region32
        $region31: #{_lambda_.9} parent=27 // pred_region
          %s193 = smul.u32 2, %s21
          %p194 = scmp.lt.s32.totalorder %s193, 3
          %s195 = scalar_select %p194, %s193, 3
          %s196 = smul.addr %s195, 8
          %s197 = scalar_lea.vmem %s0, %s196
          %s198 = smul.u32 2, %s21
        $region32: #{_lambda_.9} parent=27 // pred_fallthru
          _
      $region28: #{_lambda_.9} parent=5 // pred_fallthru
        _
      %p199 = scmp.le.s32.totalorder 1, %s14
      %p200 = scmp.lt.s32.totalorder %s14, 3
      %p201 = pnand %p199, %p200
      %p202 = pneg %p201
      // Predicated region
      $region33: #{_lambda_.9} parent=5 // pred_check
        _
      $region34: #{_lambda_.9} parent=5 // pred_check_branch
        %204 = sbr.rel (%p201) target = $region36
      $region35: #{_lambda_.9} parent=5 // pred_region
        %s205 = ssub.s32 %s14, 1
        // Predicated region
        $region37: #{_lambda_.9} parent=35 // pred_check
          %p206 = pneg %p120
        $region38: #{_lambda_.9} parent=35 // pred_check_branch
          %208 = sbr.rel (%p206) target = $region40
        $region39: #{_lambda_.9} parent=35 // pred_region
          %210 = dma.done [#allocation4], 2048
        $region40: #{_lambda_.9} parent=35 // pred_fallthru
          _
        %s211 = smul.u32 2, %s23
        %p212 = scmp.lt.s32.totalorder %s211, 3
        %s213 = scalar_select %p212, %s211, 3
        %s214 = smul.addr %s213, 8
        %s215 = scalar_lea.vmem %s0, %s214
        %p216 = pneg %p52
        %p217 = pneg %p49
        %p218 = pneg %p73
        %p219 = pneg %p70
        %p220 = pneg %p94
        %p221 = pneg %p91
        %p222 = pneg %p120
        %p223 = pneg %p117
        %p224 = pneg %p148
        %p225 = pneg %p145
        %s226 = sand.u32 %s135, 1
        %s227 = scalar_lea.sflag [#allocation5], %s226
        %s228 = sand.u32 %s135, 1
        %s229 = smul.addr %s228, 32
        %s230 = scalar_lea.vmem [#allocation6], %s229
        %s231 = smul.u32 2, %s23
        %p232 = scmp.lt.s32.totalorder %s231, 3
        %s233 = scalar_select %p232, %s231, 3
        %s234 = smul.addr %s233, 8
        %s235 = scalar_lea.vmem %s0, %s234
        %s236 = smul.u32 2, %s23
        %s237 = smul.u32 2, %s24
        %s238 = smul.u32 2, %s23
        %s239 = smul.u32 2, %s24
        %p240 = scmp.eq.s32.totalorder %s24, 0
        // Predicated region
        $region41: #{_lambda_.9} parent=35 // pred_check
          %p241 = pneg %p240
        $region42: #{_lambda_.9} parent=35 // pred_check_branch
          %243 = sbr.rel (%p241) target = $region44
        $region43: #{_lambda_.9} parent=35 // pred_region
          %v244 = vld [vmem:[%s235] sm:$0xff]
          %v245 = vld [vmem:[%s235 + $0x8] sm:$0xff]
          %v246 = vld [vmem:[%s1] sm:$0x1]
          %v247 = vld [vmem:[%s2] sm:$0x1]
          %248 = vadd.xlane.f32.xlu0 %v244
          %v249 = vpop.xlane.xlu0 %248
          %250 = vadd.xlane.f32.xlu0 %v245
          %v251 = vpop.xlane.xlu0 %250
          %v252 = vrcp.pop 128.0
          %v253 = vmul.f32 128.0, %v252
          %v254 = vsub.f32 1.0, %v253
          %v255 = vmul.f32 %v252, %v254
          %v256 = vadd.f32 %v252, %v255
          %vm257 = vweird.f32 %v252
          %v258 = vsel %vm257, %v252, %v256
          %v259 = vmul.f32 %v249, %v258
          %v260 = vmul.f32 %v251, %v258
          %v261 = vsub.f32 %v244, %v259
          %v262 = vsub.f32 %v245, %v260
          %v263 = vmul.f32 %v261, %v261
          %v264 = vmul.f32 %v262, %v262
          %265 = vadd.xlane.f32.xlu0 %v263
          %v266 = vpop.xlane.xlu0 %265
          %267 = vadd.xlane.f32.xlu0 %v264
          %v268 = vpop.xlane.xlu0 %267
          %v269 = vmul.f32 %v266, %v258
          %v270 = vmul.f32 %v268, %v258
          %v271 = vadd.f32 %v269, 1e-05
          %v272 = vadd.f32 %v270, 1e-05
          %v273 = vrsqrt.pop %v271
          %v274 = vmul.f32 %v273, %v271
          %v275 = vmul.f32 %v274, %v273
          %v276 = vmul.f32 0.5, %v275
          %v277 = vsub.f32 1.5, %v276
          %v278 = vmul.f32 %v273, %v277
          %vm279 = vweird.f32 %v271
          %vm280 = vweird.f32 %v273
          %vm281 = vmor %vm279, %vm280
          %v282 = vsel %vm281, %v273, %v278
          %v283 = vrsqrt.pop %v272
          %v284 = vmul.f32 %v283, %v272
          %v285 = vmul.f32 %v284, %v283
          %v286 = vmul.f32 0.5, %v285
          %v287 = vsub.f32 1.5, %v286
          %v288 = vmul.f32 %v283, %v287
          %vm289 = vweird.f32 %v272
          %vm290 = vweird.f32 %v283
          %vm291 = vmor %vm289, %vm290
          %v292 = vsel %vm291, %v283, %v288
          %v293 = vmul.f32 %v261, %v282
          %v294 = vmul.f32 %v262, %v292
          %v296 = vperm.slane %v246, 0
          %v298 = vmul.f32 %v293, %v296
          %v299 = vmul.f32 %v294, %v296
          %v301 = vperm.slane %v247, 0
          %v303 = vadd.f32 %v298, %v301
          %v304 = vadd.f32 %v299, %v301
          %v305 = vpack.c.bf16 %v303, %v303
          %v306 = vpack.c.bf16 %v304, %v304
          %307 = vst [vmem:[#allocation2] sm:$0xf] %v305
          %308 = vst [vmem:[#allocation2 + $0x4] sm:$0xf] %v306
        $region44: #{_lambda_.9} parent=35 // pred_fallthru
          _
        %v309 = vld [vmem:[#allocation2] sm:$0xf]
        %v310 = vld [vmem:[#allocation2 + $0x4] sm:$0xf]
        %v311 = vld [vmem:[#allocation3] sm:$0xff]
        %v312 = vld [vmem:[#allocation3 + $0x8] sm:$0xff]
        %v313 = vld [vmem:[#allocation3 + $0x10] sm:$0xff]
        %v314 = vld [vmem:[#allocation3 + $0x18] sm:$0xff]
        %v315 = vld [vmem:[#allocation3 + $0x20] sm:$0xff]
        %v316 = vld [vmem:[#allocation3 + $0x28] sm:$0xff]
        %v317 = vld [vmem:[#allocation3 + $0x30] sm:$0xff]
        %v318 = vld [vmem:[#allocation3 + $0x38] sm:$0xff]
        %v319 = vld [vmem:[#allocation3 + $0x40] sm:$0xff]
        %v320 = vld [vmem:[#allocation3 + $0x48] sm:$0xff]
        %v321 = vld [vmem:[#allocation3 + $0x50] sm:$0xff]
        %v322 = vld [vmem:[#allocation3 + $0x58] sm:$0xff]
        %v323 = vld [vmem:[#allocation3 + $0x60] sm:$0xff]
        %v324 = vld [vmem:[#allocation3 + $0x68] sm:$0xff]
        %v325 = vld [vmem:[#allocation3 + $0x70] sm:$0xff]
        %v326 = vld [vmem:[#allocation3 + $0x78] sm:$0xff]
        %v329 = vunpack.c.l.b16 %v309
        %v330 = vunpack.c.l.b16 %v310
        %v331 = vpack.c.b16 %v330, %v329
        %v349 = vunpack.c.l.b16 %v311
        %v350 = vunpack.c.h.b16 %v311
        %v351 = vunpack.c.l.b16 %v312
        %v352 = vunpack.c.h.b16 %v312
        %v353 = vunpack.c.l.b16 %v313
        %v354 = vunpack.c.h.b16 %v313
        %v355 = vunpack.c.l.b16 %v314
        %v356 = vunpack.c.h.b16 %v314
        %v357 = vunpack.c.l.b16 %v315
        %v358 = vunpack.c.h.b16 %v315
        %v359 = vunpack.c.l.b16 %v316
        %v360 = vunpack.c.h.b16 %v316
        %v361 = vunpack.c.l.b16 %v317
        %v362 = vunpack.c.h.b16 %v317
        %v363 = vunpack.c.l.b16 %v318
        %v364 = vunpack.c.h.b16 %v318
        %v365 = vunpack.c.l.b16 %v319
        %v366 = vunpack.c.h.b16 %v319
        %v367 = vunpack.c.l.b16 %v320
        %v368 = vunpack.c.h.b16 %v320
        %v369 = vunpack.c.l.b16 %v321
        %v370 = vunpack.c.h.b16 %v321
        %v371 = vunpack.c.l.b16 %v322
        %v372 = vunpack.c.h.b16 %v322
        %v373 = vunpack.c.l.b16 %v323
        %v374 = vunpack.c.h.b16 %v323
        %v375 = vunpack.c.l.b16 %v324
        %v376 = vunpack.c.h.b16 %v324
        %v377 = vunpack.c.l.b16 %v325
        %v378 = vunpack.c.h.b16 %v325
        %v379 = vunpack.c.l.b16 %v326
        %v380 = vunpack.c.h.b16 %v326
        %v381 = vpack.c.b16 %v351, %v349
        %v382 = vpack.c.b16 %v352, %v350
        %v383 = vpack.c.b16 %v355, %v353
        %v384 = vpack.c.b16 %v356, %v354
        %v385 = vpack.c.b16 %v359, %v357
        %v386 = vpack.c.b16 %v360, %v358
        %v387 = vpack.c.b16 %v363, %v361
        %v388 = vpack.c.b16 %v364, %v362
        %v389 = vpack.c.b16 %v367, %v365
        %v390 = vpack.c.b16 %v368, %v366
        %v391 = vpack.c.b16 %v371, %v369
        %v392 = vpack.c.b16 %v372, %v370
        %v393 = vpack.c.b16 %v375, %v373
        %v394 = vpack.c.b16 %v376, %v374
        %v395 = vpack.c.b16 %v379, %v377
        %v396 = vpack.c.b16 %v380, %v378
        %413 = vmatpush.bf16.msra.mxu0 %v395
        %414 = vmatpush.bf16.msra.mxu0 %v393
        %415 = vmatpush.bf16.msra.mxu0 %v391
        %416 = vmatpush.bf16.msra.mxu0 %v389
        %417 = vmatpush.bf16.msra.mxu0 %v387
        %418 = vmatpush.bf16.msra.mxu0 %v385
        %419 = vmatpush.bf16.msra.mxu0 %v383
        %420 = vmatpush.bf16.msra.mxu0 %v381
        %421 = vmatmul.bf16.gmra.mxu0 %v331
        %v422 = vpop.f32.mrf.mxu0
        %v423 = vadd.f32 0.0, %v422
        %v424 = vpop.f32.mrf.mxu0
        %v425 = vadd.f32 0.0, %v424
        %426 = vdwg.mxu0
        %427 = vmatpush.bf16.msra.mxu0 %v396
        %428 = vmatpush.bf16.msra.mxu0 %v394
        %429 = vmatpush.bf16.msra.mxu0 %v392
        %430 = vmatpush.bf16.msra.mxu0 %v390
        %431 = vmatpush.bf16.msra.mxu0 %v388
        %432 = vmatpush.bf16.msra.mxu0 %v386
        %433 = vmatpush.bf16.msra.mxu0 %v384
        %434 = vmatpush.bf16.msra.mxu0 %v382
        %435 = vmatmul.bf16.gmra.mxu0 %v331
        %v436 = vpop.f32.mrf.mxu0
        %v437 = vadd.f32 0.0, %v436
        %v438 = vpop.f32.mrf.mxu0
        %v439 = vadd.f32 0.0, %v438
        %440 = vdwg.mxu0
        %441 = vst [vmem:[%s230] sm:$0xff] %v423
        %442 = vst [vmem:[%s230 + $0x8] sm:$0xff] %v437
        %443 = vst [vmem:[%s230 + $0x10] sm:$0xff] %v425
        %444 = vst [vmem:[%s230 + $0x18] sm:$0xff] %v439
        %s445 = sand.u32 %s135, 1
        %s446 = scalar_lea.sflag [#allocation5], %s445
        %s447 = sand.u32 %s135, 1
        %s448 = smul.addr %s447, 32
        %s449 = scalar_lea.vmem [#allocation6], %s448
        // Predicated region
        $region45: #{_lambda_.9} parent=35 // pred_check
          %p450 = pneg %p145
        $region46: #{_lambda_.9} parent=35 // pred_check_branch
          %452 = sbr.rel (%p450) target = $region48
        $region47: #{_lambda_.9} parent=35 // pred_region
          %s453 = smul.u32 2, %s23
          %s454 = smul.u32 2, %s24
          %456 = vsyncadd %s446, 0
          %s457 = smul.addr %s453, 2
          %s458 = sadd.s32 %s454, %s457
          %s459 = smul.addr %s458, 8
          %s460 = scalar_lea.hbm %s4, %s459
          %s461 = sshll.u32 %s449, 4
          %s462 = int_to_ptr.vmem [resolvable:$true] %s461
          %s463 = sshll.u32 %s460, 4
          %s464 = int_to_ptr.hbm [resolvable:$true] %s463
          %469 = dma.vmem_to_hbm [thread:$0]  %s462, 512, %s464, %s446, 256, 256, 16
        $region48: #{_lambda_.9} parent=35 // pred_fallthru
          _
      $region36: #{_lambda_.9} parent=5 // pred_fallthru
        _
      %p470 = scmp.le.s32.totalorder 2, %s14
      // Predicated region
      $region49: #{_lambda_.9} parent=5 // pred_check
        %p471 = pneg %p470
      $region50: #{_lambda_.9} parent=5 // pred_check_branch
        %473 = sbr.rel (%p471) target = $region52
      $region51: #{_lambda_.9} parent=5 // pred_region
        %s474 = ssub.s32 %s14, 2
        // Predicated region
        $region53: #{_lambda_.9} parent=51 // pred_check
          %p475 = pneg %p151
        $region54: #{_lambda_.9} parent=51 // pred_check_branch
          %477 = sbr.rel (%p475) target = $region56
        $region55: #{_lambda_.9} parent=51 // pred_region
          %s478 = sand.u32 %s136, 1
          %s479 = scalar_lea.sflag [#allocation5], %s478
          %s480 = sand.u32 %s136, 1
          %s481 = smul.addr %s480, 32
          %s482 = scalar_lea.vmem [#allocation6], %s481
          %484 = dma.done %s479, 512
        $region56: #{_lambda_.9} parent=51 // pred_fallthru
          _
      $region52: #{_lambda_.9} parent=5 // pred_fallthru
        _
    $region6: #{_lambda_.9} parent=1 // loop_footer
      %s18 = sadd.s32 1, %s14
    $region7: #{_lambda_.9} parent=1 // loop_footer_branch
      %13 = sbr.rel target = $region3
    $region8: #{_lambda_.9} parent=1 // loop_exit
      _
    %485 = vsyncpa [#allocation4], 1
    %s486 = scalar_lea.sflag [#allocation4], 1
    %487 = vsyncpa %s486, 1
    %488 = vsyncpa [#allocation5], 1
    %s489 = scalar_lea.sflag [#allocation5], 1
    %490 = vsyncpa %s489, 1

</llo_original>
